<compile_context>
chip_gen: v5e
topology: v5e:2x2
jax: 0.10.0
libtpu: 0.0.40
codegen_flags: <defaults>
</compile_context>

<pallas_src>
import jax
import jax.numpy as jnp
from jax import lax
from jax.experimental import pallas as pl
from jax.experimental.pallas import tpu as pltpu


_VMEM = pl.BlockSpec(memory_space=pltpu.MemorySpace.VMEM)


# ----------------------------------------------------------------------------
# BatchNorm1d (training mode: batch statistics, biased variance, eps=1e-5)
# ----------------------------------------------------------------------------
def _bn_train(x, gamma, beta, eps=1e-5):
    mean = jnp.mean(x, axis=0, keepdims=True)
    var = jnp.mean((x - mean) ** 2, axis=0, keepdims=True)
    return (x - mean) * lax.rsqrt(var + eps) * gamma + beta


# ----------------------------------------------------------------------------
# Single fused kernel for the whole forward pass.
# ----------------------------------------------------------------------------
def _make_fused_kernel(heads, dim):
    f32 = jnp.float32

    def kernel(x_req_ref, x_code_ref,
               prw, prb, pcw, pcb,
               as_rlc, ad_rlc, as_crr, ad_crr,
               cnt_rlc_ref, cnt_crr_ref, head_mask_ref,
               bn1_g, bn1_b, pool_ref, bn2_g, bn2_b,
               fc1_w, fc1_b, bn3_g, bn3_b,
               fc2_w, fc2_b, fc3_w, fc3_b, bn4_g, bn4_b,
               oh_req, oh_code, o_ref):
        head_mask = head_mask_ref[...]                       # [H, H*D]

        # ---- HANConv: per-node-type projections (x @ W + b) ------------------
        h_req = jnp.dot(x_req_ref[...], prw[...],
                        preferred_element_type=f32) + prb[...]
        h_code = jnp.dot(x_code_ref[...], pcw[...],
                         preferred_element_type=f32) + pcb[...]

        # ---- node-level (GAT-style) attention for one edge type --------------
        # cnt[i, j] = #edges j(src)->i(dst): dense equivalent of PyG's
        # scatter-softmax over incoming edges followed by scatter-add.
        def edge_attn(xs, xd, att_src_blk, att_dst_blk, cnt):
            # Two lane-dense whole-head matmuls replace 16 tiny K=4 dots.
            a_s = lax.dot_general(att_src_blk, xs, (((0,), (1,)), ((), ())),
                                  preferred_element_type=f32)          # [H, Ns]
            a_d = jnp.dot(xd, att_dst_blk, preferred_element_type=f32)  # [Nd, H]
            has_edge = cnt > 0.0                    # hoisted out of head loop
            out = jnp.zeros((xd.shape[0], heads * dim), f32)
            for h in range(heads):
                score = a_d[:, h:h + 1] + a_s[h:h + 1, :]               # [Nd, Ns]
                score = jnp.where(score > 0, score, 0.2 * score)        # leaky_relu(0.2)
                masked = jnp.where(has_edge, score, -1e30)
                m = jnp.max(masked, axis=1, keepdims=True)
                # exp argument is finite everywhere; cnt==0 kills masked lanes.
                p = cnt * jnp.exp(jnp.where(has_edge, score - m, 0.0))
                denom = jnp.sum(p, axis=1, keepdims=True)
                attn = jnp.where(denom > 0.0, p / jnp.maximum(denom, 1e-30), 0.0)
                # Lane-dense output matmul (N = H*D), accumulated full-width.
                out = out + jnp.dot(attn, xs * head_mask[h:h + 1, :],
                                    preferred_element_type=f32)
            # HANConv per-edge-type ReLU; semantic attention with a single
            # metapath per dst type is the identity (softmax of one score = 1).
            return jnp.maximum(out, 0.0)

        out_code = edge_attn(h_req, h_code, as_rlc[...], ad_rlc[...],
                             cnt_rlc_ref[...])
        out_req = edge_attn(h_code, h_req, as_crr[...], ad_crr[...],
                            cnt_crr_ref[...])

        # ---- shared BN/ReLU/AvgPool/MLP head (weights resident in VMEM once) -
        def head(x):
            x = jnp.maximum(_bn_train(x, bn1_g[...], bn1_b[...]), 0.0)      # bn1+relu
            x = jnp.dot(x, pool_ref[...], preferred_element_type=f32)       # AvgPool1d(2)
            x = jnp.maximum(_bn_train(x, bn2_g[...], bn2_b[...]), 0.0)      # bn2+relu
            x = jnp.dot(x, fc1_w[...], preferred_element_type=f32) + fc1_b[...]
            x = jnp.maximum(_bn_train(x, bn3_g[...], bn3_b[...]), 0.0)      # bn3+relu
            x = jnp.dot(x, fc2_w[...], preferred_element_type=f32) + fc2_b[...]
            x = jnp.maximum(_bn_train(x, bn3_g[...], bn3_b[...]), 0.0)      # bn3 reused (as in torch)
            x = jnp.dot(x, fc3_w[...], preferred_element_type=f32) + fc3_b[...]
            x = jnp.maximum(_bn_train(x, bn4_g[...], bn4_b[...]), 0.0)      # bn4+relu
            return x

        z_req = head(out_req)       # BN statistics stay per node type
        z_code = head(out_code)

        # ---- classifier: gather-as-matmul, row dot, sigmoid ------------------
        a = jnp.dot(oh_req[...], z_req, preferred_element_type=f32)     # [E, 64]
        b = jnp.dot(oh_code[...], z_code, preferred_element_type=f32)   # [E, 64]
        s = jnp.sum(a * b, axis=-1, keepdims=True)
        o_ref[...] = 1.0 / (1.0 + jnp.exp(-s))

    return kernel


# ----------------------------------------------------------------------------
# Wrapper-side (XLA glue) helpers: all tiny, trace-time work.
# ----------------------------------------------------------------------------
def _block_diag_att(att):
    # att [H, D] -> [H*D, H] block-diagonal so x @ blk == (x.view(-1,H,D)*att).sum(-1)
    heads, dim = att.shape
    eye = jnp.eye(heads, dtype=att.dtype)
    return (att[:, :, None] * eye[:, None, :]).reshape(heads * dim, heads)


def _head_mask(heads, dim):
    # [H, H*D]; row h selects the columns belonging to head h.
    col_h = jnp.arange(heads * dim) // dim
    return (jnp.arange(heads)[:, None] == col_h[None, :]).astype(jnp.float32)


# ----------------------------------------------------------------------------
# Parameters (deterministic synthetic init matching the module's shapes).
# ----------------------------------------------------------------------------
def init_params(key, in_channels, hidden, heads):
    dim = hidden // heads
    ks = jax.random.split(key, 16)

    def w(k, shape, scale=0.1):
        return scale * jax.random.normal(k, shape, jnp.float32)

    params = {
        # HANConv node-type projections
        'proj_req_w': w(ks[0], (in_channels, hidden)),
        'proj_req_b': w(ks[1], (1, hidden)),
        'proj_code_w': w(ks[2], (in_channels, hidden)),
        'proj_code_b': w(ks[3], (1, hidden)),
        # per-edge-type attention vectors [heads, dim]
        'att_src_rlc': w(ks[4], (heads, dim)),   # ('req','link','code')
        'att_dst_rlc': w(ks[5], (heads, dim)),
        'att_src_crr': w(ks[6], (heads, dim)),   # ('code','rev_link','req')
        'att_dst_crr': w(ks[7], (heads, dim)),
        # NOTE: HANConv's semantic-attention params (k_lin, q) are omitted:
        # with exactly one metapath per dst type they cannot affect the output.
        # HAN head
        'bn1_g': jnp.ones((1, hidden), jnp.float32),
        'bn1_b': jnp.zeros((1, hidden), jnp.float32),
        'bn2_g': jnp.ones((1, hidden // 2), jnp.float32),
        'bn2_b': jnp.zeros((1, hidden // 2), jnp.float32),
        'fc1_w': w(ks[8], (hidden // 2, 256)),
        'fc1_b': w(ks[9], (1, 256)),
        'bn3_g': jnp.ones((1, 256), jnp.float32),
        'bn3_b': jnp.zeros((1, 256), jnp.float32),
        'fc2_w': w(ks[10], (256, 256)),
        'fc2_b': w(ks[11], (1, 256)),
        'fc3_w': w(ks[12], (256, 64)),
        'fc3_b': w(ks[13], (1, 64)),
        'bn4_g': jnp.ones((1, 64), jnp.float32),
        'bn4_b': jnp.zeros((1, 64), jnp.float32),
    }
    # AvgPool1d(kernel_size=2) expressed as a fixed pooling matmul
    pool = jnp.zeros((hidden, hidden // 2), jnp.float32)
    idx = jnp.arange(hidden // 2)
    pool = pool.at[2 * idx, idx].set(0.5).at[2 * idx + 1, idx].set(0.5)
    params['pool'] = pool
    return params


# ----------------------------------------------------------------------------
# Full Model.forward — a single fused pallas_call.
# ----------------------------------------------------------------------------
def model_forward(params, x_req, x_code, ei_rlc, ei_crr, edge_label_index,
                  heads):
    hidden = params['proj_req_w'].shape[1]
    dim = hidden // heads
    n_req, n_code = x_req.shape[0], x_code.shape[0]
    n_edge = edge_label_index.shape[1]

    # Dense dst x src edge-count matrices (scatter-add glue; duplicates kept).
    cnt_rlc = jnp.zeros((n_code, n_req), jnp.float32).at[ei_rlc[1], ei_rlc[0]].add(1.0)
    cnt_crr = jnp.zeros((n_req, n_code), jnp.float32).at[ei_crr[1], ei_crr[0]].add(1.0)

    # Gather-as-matmul one-hot selectors for the classifier.
    oh_req = jax.nn.one_hot(edge_label_index[0], n_req, dtype=jnp.float32)
    oh_code = jax.nn.one_hot(edge_label_index[1], n_code, dtype=jnp.float32)

    args = (
        x_req, x_code,
        params['proj_req_w'], params['proj_req_b'],
        params['proj_code_w'], params['proj_code_b'],
        _block_diag_att(params['att_src_rlc']), _block_diag_att(params['att_dst_rlc']),
        _block_diag_att(params['att_src_crr']), _block_diag_att(params['att_dst_crr']),
        cnt_rlc, cnt_crr, _head_mask(heads, dim),
        params['bn1_g'], params['bn1_b'], params['pool'],
        params['bn2_g'], params['bn2_b'],
        params['fc1_w'], params['fc1_b'], params['bn3_g'], params['bn3_b'],
        params['fc2_w'], params['fc2_b'], params['fc3_w'], params['fc3_b'],
        params['bn4_g'], params['bn4_b'],
        oh_req, oh_code,
    )

    pred = pl.pallas_call(
        _make_fused_kernel(heads, dim),
        out_shape=jax.ShapeDtypeStruct((n_edge, 1), jnp.float32),
        in_specs=[_VMEM] * len(args),
        out_specs=_VMEM,
    )(*args)
    return pred[:, 0]


# ----------------------------------------------------------------------------
if __name__ == "__main__":
    key = jax.random.PRNGKey(0)
    in_channels, hidden, heads = 16, 32, 8
    n_req, n_code, e1, e2, e_lab = 8, 12, 20, 16, 6

    k_x1, k_x2, k_e1, k_e2, k_e3, k_e4, k_l1, k_l2, k_p = jax.random.split(key, 9)
    x_req = jax.random.normal(k_x1, (n_req, in_channels), jnp.float32)
    x_code = jax.random.normal(k_x2, (n_code, in_channels), jnp.float32)
    # edge_index ('req','link','code'): row0 = req (src), row1 = code (dst)
    ei_rlc = jnp.stack([jax.random.randint(k_e1, (e1,), 0, n_req),
                        jax.random.randint(k_e2, (e1,), 0, n_code)])
    # edge_index ('code','rev_link','req'): row0 = code (src), row1 = req (dst)
    ei_crr = jnp.stack([jax.random.randint(k_e3, (e2,), 0, n_code),
                        jax.random.randint(k_e4, (e2,), 0, n_req)])
    edge_label_index = jnp.stack([jax.random.randint(k_l1, (e_lab,), 0, n_req),
                                  jax.random.randint(k_l2, (e_lab,), 0, n_code)])

    params = init_params(k_p, in_channels, hidden, heads)

    fwd = jax.jit(model_forward, static_argnames=('heads',))
    pred = fwd(params, x_req, x_code, ei_rlc, ei_crr, edge_label_index,
               heads=heads)
    pred = jax.block_until_ready(pred)
    assert pred.shape == (e_lab,)
    assert bool(jnp.all(jnp.isfinite(pred)))
    assert bool(jnp.all((pred >= 0.0) & (pred <= 1.0)))
    print("KERNEL_OK")
</pallas_src>

<mosaic_0001>
module attributes {stable_mosaic.version = 11 : i64} {
  func.func @kernel(%arg0: memref<8x16xf32, #tpu.memory_space<vmem>>, %arg1: memref<12x16xf32, #tpu.memory_space<vmem>>, %arg2: memref<16x32xf32, #tpu.memory_space<vmem>>, %arg3: memref<1x32xf32, #tpu.memory_space<vmem>>, %arg4: memref<16x32xf32, #tpu.memory_space<vmem>>, %arg5: memref<1x32xf32, #tpu.memory_space<vmem>>, %arg6: memref<32x8xf32, #tpu.memory_space<vmem>>, %arg7: memref<32x8xf32, #tpu.memory_space<vmem>>, %arg8: memref<32x8xf32, #tpu.memory_space<vmem>>, %arg9: memref<32x8xf32, #tpu.memory_space<vmem>>, %arg10: memref<12x8xf32, #tpu.memory_space<vmem>>, %arg11: memref<8x12xf32, #tpu.memory_space<vmem>>, %arg12: memref<8x32xf32, #tpu.memory_space<vmem>>, %arg13: memref<1x32xf32, #tpu.memory_space<vmem>>, %arg14: memref<1x32xf32, #tpu.memory_space<vmem>>, %arg15: memref<32x16xf32, #tpu.memory_space<vmem>>, %arg16: memref<1x16xf32, #tpu.memory_space<vmem>>, %arg17: memref<1x16xf32, #tpu.memory_space<vmem>>, %arg18: memref<16x256xf32, #tpu.memory_space<vmem>>, %arg19: memref<1x256xf32, #tpu.memory_space<vmem>>, %arg20: memref<1x256xf32, #tpu.memory_space<vmem>>, %arg21: memref<1x256xf32, #tpu.memory_space<vmem>>, %arg22: memref<256x256xf32, #tpu.memory_space<vmem>>, %arg23: memref<1x256xf32, #tpu.memory_space<vmem>>, %arg24: memref<256x64xf32, #tpu.memory_space<vmem>>, %arg25: memref<1x64xf32, #tpu.memory_space<vmem>>, %arg26: memref<1x64xf32, #tpu.memory_space<vmem>>, %arg27: memref<1x64xf32, #tpu.memory_space<vmem>>, %arg28: memref<6x8xf32, #tpu.memory_space<vmem>>, %arg29: memref<6x12xf32, #tpu.memory_space<vmem>>, %arg30: memref<6x1xf32, #tpu.memory_space<vmem>>) attributes {dimension_semantics = [], scalar_prefetch = 0 : i64, scratch_operands = 0 : i64, tpu.core_type = #tpu.core_type<tc>} {
    %c0 = arith.constant 0 : index
    %c0_0 = arith.constant 0 : index
    %0 = vector.load %arg12[%c0, %c0_0] : memref<8x32xf32, #tpu.memory_space<vmem>>, vector<8x32xf32>
    %c0_1 = arith.constant 0 : index
    %c0_2 = arith.constant 0 : index
    %1 = vector.load %arg0[%c0_1, %c0_2] : memref<8x16xf32, #tpu.memory_space<vmem>>, vector<8x16xf32>
    %c0_3 = arith.constant 0 : index
    %c0_4 = arith.constant 0 : index
    %2 = vector.load %arg2[%c0_3, %c0_4] : memref<16x32xf32, #tpu.memory_space<vmem>>, vector<16x32xf32>
    %cst = arith.constant dense<0.000000e+00> : vector<8x32xf32>
    %3 = tpu.matmul %1, %2, %cst {dimension_numbers = #tpu.dot_dimension_numbers<[1], [0], [0], [1], [0, 0, 1, 1], [], []>} : vector<8x16xf32>, vector<16x32xf32>, vector<8x32xf32> -> vector<8x32xf32>
    %c0_5 = arith.constant 0 : index
    %c0_6 = arith.constant 0 : index
    %4 = vector.load %arg3[%c0_5, %c0_6] : memref<1x32xf32, #tpu.memory_space<vmem>>, vector<1x32xf32>
    %5 = vector.broadcast %4 : vector<1x32xf32> to vector<8x32xf32>
    %6 = arith.addf %3, %5 : vector<8x32xf32>
    %c0_7 = arith.constant 0 : index
    %c0_8 = arith.constant 0 : index
    %7 = vector.load %arg1[%c0_7, %c0_8] : memref<12x16xf32, #tpu.memory_space<vmem>>, vector<12x16xf32>
    %c0_9 = arith.constant 0 : index
    %c0_10 = arith.constant 0 : index
    %8 = vector.load %arg4[%c0_9, %c0_10] : memref<16x32xf32, #tpu.memory_space<vmem>>, vector<16x32xf32>
    %cst_11 = arith.constant dense<0.000000e+00> : vector<12x32xf32>
    %9 = tpu.matmul %7, %8, %cst_11 {dimension_numbers = #tpu.dot_dimension_numbers<[1], [0], [0], [1], [0, 0, 1, 1], [], []>} : vector<12x16xf32>, vector<16x32xf32>, vector<12x32xf32> -> vector<12x32xf32>
    %c0_12 = arith.constant 0 : index
    %c0_13 = arith.constant 0 : index
    %10 = vector.load %arg5[%c0_12, %c0_13] : memref<1x32xf32, #tpu.memory_space<vmem>>, vector<1x32xf32>
    %11 = vector.broadcast %10 : vector<1x32xf32> to vector<12x32xf32>
    %12 = arith.addf %9, %11 : vector<12x32xf32>
    %c0_14 = arith.constant 0 : index
    %c0_15 = arith.constant 0 : index
    %13 = vector.load %arg6[%c0_14, %c0_15] : memref<32x8xf32, #tpu.memory_space<vmem>>, vector<32x8xf32>
    %c0_16 = arith.constant 0 : index
    %c0_17 = arith.constant 0 : index
    %14 = vector.load %arg7[%c0_16, %c0_17] : memref<32x8xf32, #tpu.memory_space<vmem>>, vector<32x8xf32>
    %c0_18 = arith.constant 0 : index
    %c0_19 = arith.constant 0 : index
    %15 = vector.load %arg10[%c0_18, %c0_19] : memref<12x8xf32, #tpu.memory_space<vmem>>, vector<12x8xf32>
    %cst_20 = arith.constant dense<0.000000e+00> : vector<8x8xf32>
    %16 = tpu.matmul %13, %6, %cst_20 {dimension_numbers = #tpu.dot_dimension_numbers<[0], [1], [1], [0], [0, 1, 1, 0], [], []>} : vector<32x8xf32>, vector<8x32xf32>, vector<8x8xf32> -> vector<8x8xf32>
    %cst_21 = arith.constant dense<0.000000e+00> : vector<12x8xf32>
    %17 = tpu.matmul %12, %14, %cst_21 {dimension_numbers = #tpu.dot_dimension_numbers<[1], [0], [0], [1], [0, 0, 1, 1], [], []>} : vector<12x32xf32>, vector<32x8xf32>, vector<12x8xf32> -> vector<12x8xf32>
    %cst_22 = arith.constant 0.000000e+00 : f32
    %18 = vector.broadcast %cst_22 : f32 to vector<12x8xf32>
    %19 = arith.cmpf ogt, %15, %18 : vector<12x8xf32>
    %cst_23 = arith.constant 0.000000e+00 : f32
    %20 = vector.broadcast %cst_23 : f32 to vector<12x32xf32>
    %21 = vector.extract_strided_slice %17 {offsets = [0, 0], sizes = [12, 1], strides = [1, 1]} : vector<12x8xf32> to vector<12x1xf32>
    %22 = vector.extract_strided_slice %16 {offsets = [0, 0], sizes = [1, 8], strides = [1, 1]} : vector<8x8xf32> to vector<1x8xf32>
    %23 = vector.broadcast %21 : vector<12x1xf32> to vector<12x8xf32>
    %24 = vector.broadcast %22 : vector<1x8xf32> to vector<12x8xf32>
    %25 = arith.addf %23, %24 : vector<12x8xf32>
    %cst_24 = arith.constant 0.000000e+00 : f32
    %26 = vector.broadcast %cst_24 : f32 to vector<12x8xf32>
    %27 = arith.cmpf ogt, %25, %26 : vector<12x8xf32>
    %cst_25 = arith.constant 2.000000e-01 : f32
    %28 = vector.broadcast %cst_25 : f32 to vector<12x8xf32>
    %29 = arith.mulf %28, %25 : vector<12x8xf32>
    %30 = arith.select %27, %25, %29 : vector<12x8xi1>, vector<12x8xf32>
    %cst_26 = arith.constant -1.000000e+30 : f32
    %31 = vector.broadcast %cst_26 : f32 to vector<12x8xf32>
    %32 = arith.select %19, %30, %31 : vector<12x8xi1>, vector<12x8xf32>
    %cst_27 = arith.constant dense<0xFF800000> : vector<12xf32>
    %33 = vector.multi_reduction <maximumf>, %32, %cst_27 [1] : vector<12x8xf32> to vector<12xf32>
    %34 = vector.shape_cast %33 : vector<12xf32> to vector<12x1xf32>
    %35 = vector.broadcast %34 : vector<12x1xf32> to vector<12x8xf32>
    %36 = arith.subf %30, %35 : vector<12x8xf32>
    %cst_28 = arith.constant 0.000000e+00 : f32
    %37 = vector.broadcast %cst_28 : f32 to vector<12x8xf32>
    %38 = arith.select %19, %36, %37 : vector<12x8xi1>, vector<12x8xf32>
    %39 = math.exp %38 : vector<12x8xf32>
    %40 = arith.mulf %15, %39 : vector<12x8xf32>
    %cst_29 = arith.constant dense<0.000000e+00> : vector<12xf32>
    %41 = vector.multi_reduction <add>, %40, %cst_29 [1] : vector<12x8xf32> to vector<12xf32>
    %42 = vector.shape_cast %41 : vector<12xf32> to vector<12x1xf32>
    %cst_30 = arith.constant 0.000000e+00 : f32
    %43 = vector.broadcast %cst_30 : f32 to vector<12x1xf32>
    %44 = arith.cmpf ogt, %42, %43 : vector<12x1xf32>
    %cst_31 = arith.constant 1.000000e-30 : f32
    %45 = vector.broadcast %cst_31 : f32 to vector<12x1xf32>
    %46 = arith.maximumf %42, %45 : vector<12x1xf32>
    %47 = vector.broadcast %46 : vector<12x1xf32> to vector<12x8xf32>
    %48 = arith.divf %40, %47 : vector<12x8xf32>
    %cst_32 = arith.constant 0.000000e+00 : f32
    %49 = vector.shape_cast %44 : vector<12x1xi1> to vector<12x1xi1>
    %50 = vector.broadcast %49 : vector<12x1xi1> to vector<12x8xi1>
    %51 = vector.broadcast %cst_32 : f32 to vector<12x8xf32>
    %52 = arith.select %50, %48, %51 : vector<12x8xi1>, vector<12x8xf32>
    %53 = vector.extract_strided_slice %0 {offsets = [0, 0], sizes = [1, 32], strides = [1, 1]} : vector<8x32xf32> to vector<1x32xf32>
    %54 = vector.broadcast %53 : vector<1x32xf32> to vector<8x32xf32>
    %55 = arith.mulf %6, %54 : vector<8x32xf32>
    %cst_33 = arith.constant dense<0.000000e+00> : vector<12x32xf32>
    %56 = tpu.matmul %52, %55, %cst_33 {dimension_numbers = #tpu.dot_dimension_numbers<[1], [0], [0], [1], [0, 0, 1, 1], [], []>} : vector<12x8xf32>, vector<8x32xf32>, vector<12x32xf32> -> vector<12x32xf32>
    %57 = arith.addf %20, %56 : vector<12x32xf32>
    %58 = vector.extract_strided_slice %17 {offsets = [0, 1], sizes = [12, 1], strides = [1, 1]} : vector<12x8xf32> to vector<12x1xf32>
    %59 = vector.extract_strided_slice %16 {offsets = [1, 0], sizes = [1, 8], strides = [1, 1]} : vector<8x8xf32> to vector<1x8xf32>
    %60 = vector.broadcast %58 : vector<12x1xf32> to vector<12x8xf32>
    %61 = vector.broadcast %59 : vector<1x8xf32> to vector<12x8xf32>
    %62 = arith.addf %60, %61 : vector<12x8xf32>
    %cst_34 = arith.constant 0.000000e+00 : f32
    %63 = vector.broadcast %cst_34 : f32 to vector<12x8xf32>
    %64 = arith.cmpf ogt, %62, %63 : vector<12x8xf32>
    %cst_35 = arith.constant 2.000000e-01 : f32
    %65 = vector.broadcast %cst_35 : f32 to vector<12x8xf32>
    %66 = arith.mulf %65, %62 : vector<12x8xf32>
    %67 = arith.select %64, %62, %66 : vector<12x8xi1>, vector<12x8xf32>
    %cst_36 = arith.constant -1.000000e+30 : f32
    %68 = vector.broadcast %cst_36 : f32 to vector<12x8xf32>
    %69 = arith.select %19, %67, %68 : vector<12x8xi1>, vector<12x8xf32>
    %cst_37 = arith.constant dense<0xFF800000> : vector<12xf32>
    %70 = vector.multi_reduction <maximumf>, %69, %cst_37 [1] : vector<12x8xf32> to vector<12xf32>
    %71 = vector.shape_cast %70 : vector<12xf32> to vector<12x1xf32>
    %72 = vector.broadcast %71 : vector<12x1xf32> to vector<12x8xf32>
    %73 = arith.subf %67, %72 : vector<12x8xf32>
    %cst_38 = arith.constant 0.000000e+00 : f32
    %74 = vector.broadcast %cst_38 : f32 to vector<12x8xf32>
    %75 = arith.select %19, %73, %74 : vector<12x8xi1>, vector<12x8xf32>
    %76 = math.exp %75 : vector<12x8xf32>
    %77 = arith.mulf %15, %76 : vector<12x8xf32>
    %cst_39 = arith.constant dense<0.000000e+00> : vector<12xf32>
    %78 = vector.multi_reduction <add>, %77, %cst_39 [1] : vector<12x8xf32> to vector<12xf32>
    %79 = vector.shape_cast %78 : vector<12xf32> to vector<12x1xf32>
    %cst_40 = arith.constant 0.000000e+00 : f32
    %80 = vector.broadcast %cst_40 : f32 to vector<12x1xf32>
    %81 = arith.cmpf ogt, %79, %80 : vector<12x1xf32>
    %cst_41 = arith.constant 1.000000e-30 : f32
    %82 = vector.broadcast %cst_41 : f32 to vector<12x1xf32>
    %83 = arith.maximumf %79, %82 : vector<12x1xf32>
    %84 = vector.broadcast %83 : vector<12x1xf32> to vector<12x8xf32>
    %85 = arith.divf %77, %84 : vector<12x8xf32>
    %cst_42 = arith.constant 0.000000e+00 : f32
    %86 = vector.shape_cast %81 : vector<12x1xi1> to vector<12x1xi1>
    %87 = vector.broadcast %86 : vector<12x1xi1> to vector<12x8xi1>
    %88 = vector.broadcast %cst_42 : f32 to vector<12x8xf32>
    %89 = arith.select %87, %85, %88 : vector<12x8xi1>, vector<12x8xf32>
    %90 = vector.extract_strided_slice %0 {offsets = [1, 0], sizes = [1, 32], strides = [1, 1]} : vector<8x32xf32> to vector<1x32xf32>
    %91 = vector.broadcast %90 : vector<1x32xf32> to vector<8x32xf32>
    %92 = arith.mulf %6, %91 : vector<8x32xf32>
    %cst_43 = arith.constant dense<0.000000e+00> : vector<12x32xf32>
    %93 = tpu.matmul %89, %92, %cst_43 {dimension_numbers = #tpu.dot_dimension_numbers<[1], [0], [0], [1], [0, 0, 1, 1], [], []>} : vector<12x8xf32>, vector<8x32xf32>, vector<12x32xf32> -> vector<12x32xf32>
    %94 = arith.addf %57, %93 : vector<12x32xf32>
    %95 = vector.extract_strided_slice %17 {offsets = [0, 2], sizes = [12, 1], strides = [1, 1]} : vector<12x8xf32> to vector<12x1xf32>
    %96 = vector.extract_strided_slice %16 {offsets = [2, 0], sizes = [1, 8], strides = [1, 1]} : vector<8x8xf32> to vector<1x8xf32>
    %97 = vector.broadcast %95 : vector<12x1xf32> to vector<12x8xf32>
    %98 = vector.broadcast %96 : vector<1x8xf32> to vector<12x8xf32>
    %99 = arith.addf %97, %98 : vector<12x8xf32>
    %cst_44 = arith.constant 0.000000e+00 : f32
    %100 = vector.broadcast %cst_44 : f32 to vector<12x8xf32>
    %101 = arith.cmpf ogt, %99, %100 : vector<12x8xf32>
    %cst_45 = arith.constant 2.000000e-01 : f32
    %102 = vector.broadcast %cst_45 : f32 to vector<12x8xf32>
    %103 = arith.mulf %102, %99 : vector<12x8xf32>
    %104 = arith.select %101, %99, %103 : vector<12x8xi1>, vector<12x8xf32>
    %cst_46 = arith.constant -1.000000e+30 : f32
    %105 = vector.broadcast %cst_46 : f32 to vector<12x8xf32>
    %106 = arith.select %19, %104, %105 : vector<12x8xi1>, vector<12x8xf32>
    %cst_47 = arith.constant dense<0xFF800000> : vector<12xf32>
    %107 = vector.multi_reduction <maximumf>, %106, %cst_47 [1] : vector<12x8xf32> to vector<12xf32>
    %108 = vector.shape_cast %107 : vector<12xf32> to vector<12x1xf32>
    %109 = vector.broadcast %108 : vector<12x1xf32> to vector<12x8xf32>
    %110 = arith.subf %104, %109 : vector<12x8xf32>
    %cst_48 = arith.constant 0.000000e+00 : f32
    %111 = vector.broadcast %cst_48 : f32 to vector<12x8xf32>
    %112 = arith.select %19, %110, %111 : vector<12x8xi1>, vector<12x8xf32>
    %113 = math.exp %112 : vector<12x8xf32>
    %114 = arith.mulf %15, %113 : vector<12x8xf32>
    %cst_49 = arith.constant dense<0.000000e+00> : vector<12xf32>
    %115 = vector.multi_reduction <add>, %114, %cst_49 [1] : vector<12x8xf32> to vector<12xf32>
    %116 = vector.shape_cast %115 : vector<12xf32> to vector<12x1xf32>
    %cst_50 = arith.constant 0.000000e+00 : f32
    %117 = vector.broadcast %cst_50 : f32 to vector<12x1xf32>
    %118 = arith.cmpf ogt, %116, %117 : vector<12x1xf32>
    %cst_51 = arith.constant 1.000000e-30 : f32
    %119 = vector.broadcast %cst_51 : f32 to vector<12x1xf32>
    %120 = arith.maximumf %116, %119 : vector<12x1xf32>
    %121 = vector.broadcast %120 : vector<12x1xf32> to vector<12x8xf32>
    %122 = arith.divf %114, %121 : vector<12x8xf32>
    %cst_52 = arith.constant 0.000000e+00 : f32
    %123 = vector.shape_cast %118 : vector<12x1xi1> to vector<12x1xi1>
    %124 = vector.broadcast %123 : vector<12x1xi1> to vector<12x8xi1>
    %125 = vector.broadcast %cst_52 : f32 to vector<12x8xf32>
    %126 = arith.select %124, %122, %125 : vector<12x8xi1>, vector<12x8xf32>
    %127 = vector.extract_strided_slice %0 {offsets = [2, 0], sizes = [1, 32], strides = [1, 1]} : vector<8x32xf32> to vector<1x32xf32>
    %128 = vector.broadcast %127 : vector<1x32xf32> to vector<8x32xf32>
    %129 = arith.mulf %6, %128 : vector<8x32xf32>
    %cst_53 = arith.constant dense<0.000000e+00> : vector<12x32xf32>
    %130 = tpu.matmul %126, %129, %cst_53 {dimension_numbers = #tpu.dot_dimension_numbers<[1], [0], [0], [1], [0, 0, 1, 1], [], []>} : vector<12x8xf32>, vector<8x32xf32>, vector<12x32xf32> -> vector<12x32xf32>
    %131 = arith.addf %94, %130 : vector<12x32xf32>
    %132 = vector.extract_strided_slice %17 {offsets = [0, 3], sizes = [12, 1], strides = [1, 1]} : vector<12x8xf32> to vector<12x1xf32>
    %133 = vector.extract_strided_slice %16 {offsets = [3, 0], sizes = [1, 8], strides = [1, 1]} : vector<8x8xf32> to vector<1x8xf32>
    %134 = vector.broadcast %132 : vector<12x1xf32> to vector<12x8xf32>
    %135 = vector.broadcast %133 : vector<1x8xf32> to vector<12x8xf32>
    %136 = arith.addf %134, %135 : vector<12x8xf32>
    %cst_54 = arith.constant 0.000000e+00 : f32
    %137 = vector.broadcast %cst_54 : f32 to vector<12x8xf32>
    %138 = arith.cmpf ogt, %136, %137 : vector<12x8xf32>
    %cst_55 = arith.constant 2.000000e-01 : f32
    %139 = vector.broadcast %cst_55 : f32 to vector<12x8xf32>
    %140 = arith.mulf %139, %136 : vector<12x8xf32>
    %141 = arith.select %138, %136, %140 : vector<12x8xi1>, vector<12x8xf32>
    %cst_56 = arith.constant -1.000000e+30 : f32
    %142 = vector.broadcast %cst_56 : f32 to vector<12x8xf32>
    %143 = arith.select %19, %141, %142 : vector<12x8xi1>, vector<12x8xf32>
    %cst_57 = arith.constant dense<0xFF800000> : vector<12xf32>
    %144 = vector.multi_reduction <maximumf>, %143, %cst_57 [1] : vector<12x8xf32> to vector<12xf32>
    %145 = vector.shape_cast %144 : vector<12xf32> to vector<12x1xf32>
    %146 = vector.broadcast %145 : vector<12x1xf32> to vector<12x8xf32>
    %147 = arith.subf %141, %146 : vector<12x8xf32>
    %cst_58 = arith.constant 0.000000e+00 : f32
    %148 = vector.broadcast %cst_58 : f32 to vector<12x8xf32>
    %149 = arith.select %19, %147, %148 : vector<12x8xi1>, vector<12x8xf32>
    %150 = math.exp %149 : vector<12x8xf32>
    %151 = arith.mulf %15, %150 : vector<12x8xf32>
    %cst_59 = arith.constant dense<0.000000e+00> : vector<12xf32>
    %152 = vector.multi_reduction <add>, %151, %cst_59 [1] : vector<12x8xf32> to vector<12xf32>
    %153 = vector.shape_cast %152 : vector<12xf32> to vector<12x1xf32>
    %cst_60 = arith.constant 0.000000e+00 : f32
    %154 = vector.broadcast %cst_60 : f32 to vector<12x1xf32>
    %155 = arith.cmpf ogt, %153, %154 : vector<12x1xf32>
    %cst_61 = arith.constant 1.000000e-30 : f32
    %156 = vector.broadcast %cst_61 : f32 to vector<12x1xf32>
    %157 = arith.maximumf %153, %156 : vector<12x1xf32>
    %158 = vector.broadcast %157 : vector<12x1xf32> to vector<12x8xf32>
    %159 = arith.divf %151, %158 : vector<12x8xf32>
    %cst_62 = arith.constant 0.000000e+00 : f32
    %160 = vector.shape_cast %155 : vector<12x1xi1> to vector<12x1xi1>
    %161 = vector.broadcast %160 : vector<12x1xi1> to vector<12x8xi1>
    %162 = vector.broadcast %cst_62 : f32 to vector<12x8xf32>
    %163 = arith.select %161, %159, %162 : vector<12x8xi1>, vector<12x8xf32>
    %164 = vector.extract_strided_slice %0 {offsets = [3, 0], sizes = [1, 32], strides = [1, 1]} : vector<8x32xf32> to vector<1x32xf32>
    %165 = vector.broadcast %164 : vector<1x32xf32> to vector<8x32xf32>
    %166 = arith.mulf %6, %165 : vector<8x32xf32>
    %cst_63 = arith.constant dense<0.000000e+00> : vector<12x32xf32>
    %167 = tpu.matmul %163, %166, %cst_63 {dimension_numbers = #tpu.dot_dimension_numbers<[1], [0], [0], [1], [0, 0, 1, 1], [], []>} : vector<12x8xf32>, vector<8x32xf32>, vector<12x32xf32> -> vector<12x32xf32>
    %168 = arith.addf %131, %167 : vector<12x32xf32>
    %169 = vector.extract_strided_slice %17 {offsets = [0, 4], sizes = [12, 1], strides = [1, 1]} : vector<12x8xf32> to vector<12x1xf32>
    %170 = vector.extract_strided_slice %16 {offsets = [4, 0], sizes = [1, 8], strides = [1, 1]} : vector<8x8xf32> to vector<1x8xf32>
    %171 = vector.broadcast %169 : vector<12x1xf32> to vector<12x8xf32>
    %172 = vector.broadcast %170 : vector<1x8xf32> to vector<12x8xf32>
    %173 = arith.addf %171, %172 : vector<12x8xf32>
    %cst_64 = arith.constant 0.000000e+00 : f32
    %174 = vector.broadcast %cst_64 : f32 to vector<12x8xf32>
    %175 = arith.cmpf ogt, %173, %174 : vector<12x8xf32>
    %cst_65 = arith.constant 2.000000e-01 : f32
    %176 = vector.broadcast %cst_65 : f32 to vector<12x8xf32>
    %177 = arith.mulf %176, %173 : vector<12x8xf32>
    %178 = arith.select %175, %173, %177 : vector<12x8xi1>, vector<12x8xf32>
    %cst_66 = arith.constant -1.000000e+30 : f32
    %179 = vector.broadcast %cst_66 : f32 to vector<12x8xf32>
    %180 = arith.select %19, %178, %179 : vector<12x8xi1>, vector<12x8xf32>
    %cst_67 = arith.constant dense<0xFF800000> : vector<12xf32>
    %181 = vector.multi_reduction <maximumf>, %180, %cst_67 [1] : vector<12x8xf32> to vector<12xf32>
    %182 = vector.shape_cast %181 : vector<12xf32> to vector<12x1xf32>
    %183 = vector.broadcast %182 : vector<12x1xf32> to vector<12x8xf32>
    %184 = arith.subf %178, %183 : vector<12x8xf32>
    %cst_68 = arith.constant 0.000000e+00 : f32
    %185 = vector.broadcast %cst_68 : f32 to vector<12x8xf32>
    %186 = arith.select %19, %184, %185 : vector<12x8xi1>, vector<12x8xf32>
    %187 = math.exp %186 : vector<12x8xf32>
    %188 = arith.mulf %15, %187 : vector<12x8xf32>
    %cst_69 = arith.constant dense<0.000000e+00> : vector<12xf32>
    %189 = vector.multi_reduction <add>, %188, %cst_69 [1] : vector<12x8xf32> to vector<12xf32>
    %190 = vector.shape_cast %189 : vector<12xf32> to vector<12x1xf32>
    %cst_70 = arith.constant 0.000000e+00 : f32
    %191 = vector.broadcast %cst_70 : f32 to vector<12x1xf32>
    %192 = arith.cmpf ogt, %190, %191 : vector<12x1xf32>
    %cst_71 = arith.constant 1.000000e-30 : f32
    %193 = vector.broadcast %cst_71 : f32 to vector<12x1xf32>
    %194 = arith.maximumf %190, %193 : vector<12x1xf32>
    %195 = vector.broadcast %194 : vector<12x1xf32> to vector<12x8xf32>
    %196 = arith.divf %188, %195 : vector<12x8xf32>
    %cst_72 = arith.constant 0.000000e+00 : f32
    %197 = vector.shape_cast %192 : vector<12x1xi1> to vector<12x1xi1>
    %198 = vector.broadcast %197 : vector<12x1xi1> to vector<12x8xi1>
    %199 = vector.broadcast %cst_72 : f32 to vector<12x8xf32>
    %200 = arith.select %198, %196, %199 : vector<12x8xi1>, vector<12x8xf32>
    %201 = vector.extract_strided_slice %0 {offsets = [4, 0], sizes = [1, 32], strides = [1, 1]} : vector<8x32xf32> to vector<1x32xf32>
    %202 = vector.broadcast %201 : vector<1x32xf32> to vector<8x32xf32>
    %203 = arith.mulf %6, %202 : vector<8x32xf32>
    %cst_73 = arith.constant dense<0.000000e+00> : vector<12x32xf32>
    %204 = tpu.matmul %200, %203, %cst_73 {dimension_numbers = #tpu.dot_dimension_numbers<[1], [0], [0], [1], [0, 0, 1, 1], [], []>} : vector<12x8xf32>, vector<8x32xf32>, vector<12x32xf32> -> vector<12x32xf32>
    %205 = arith.addf %168, %204 : vector<12x32xf32>
    %206 = vector.extract_strided_slice %17 {offsets = [0, 5], sizes = [12, 1], strides = [1, 1]} : vector<12x8xf32> to vector<12x1xf32>
    %207 = vector.extract_strided_slice %16 {offsets = [5, 0], sizes = [1, 8], strides = [1, 1]} : vector<8x8xf32> to vector<1x8xf32>
    %208 = vector.broadcast %206 : vector<12x1xf32> to vector<12x8xf32>
    %209 = vector.broadcast %207 : vector<1x8xf32> to vector<12x8xf32>
    %210 = arith.addf %208, %209 : vector<12x8xf32>
    %cst_74 = arith.constant 0.000000e+00 : f32
    %211 = vector.broadcast %cst_74 : f32 to vector<12x8xf32>
    %212 = arith.cmpf ogt, %210, %211 : vector<12x8xf32>
    %cst_75 = arith.constant 2.000000e-01 : f32
    %213 = vector.broadcast %cst_75 : f32 to vector<12x8xf32>
    %214 = arith.mulf %213, %210 : vector<12x8xf32>
    %215 = arith.select %212, %210, %214 : vector<12x8xi1>, vector<12x8xf32>
    %cst_76 = arith.constant -1.000000e+30 : f32
    %216 = vector.broadcast %cst_76 : f32 to vector<12x8xf32>
    %217 = arith.select %19, %215, %216 : vector<12x8xi1>, vector<12x8xf32>
    %cst_77 = arith.constant dense<0xFF800000> : vector<12xf32>
    %218 = vector.multi_reduction <maximumf>, %217, %cst_77 [1] : vector<12x8xf32> to vector<12xf32>
    %219 = vector.shape_cast %218 : vector<12xf32> to vector<12x1xf32>
    %220 = vector.broadcast %219 : vector<12x1xf32> to vector<12x8xf32>
    %221 = arith.subf %215, %220 : vector<12x8xf32>
    %cst_78 = arith.constant 0.000000e+00 : f32
    %222 = vector.broadcast %cst_78 : f32 to vector<12x8xf32>
    %223 = arith.select %19, %221, %222 : vector<12x8xi1>, vector<12x8xf32>
    %224 = math.exp %223 : vector<12x8xf32>
    %225 = arith.mulf %15, %224 : vector<12x8xf32>
    %cst_79 = arith.constant dense<0.000000e+00> : vector<12xf32>
    %226 = vector.multi_reduction <add>, %225, %cst_79 [1] : vector<12x8xf32> to vector<12xf32>
    %227 = vector.shape_cast %226 : vector<12xf32> to vector<12x1xf32>
    %cst_80 = arith.constant 0.000000e+00 : f32
    %228 = vector.broadcast %cst_80 : f32 to vector<12x1xf32>
    %229 = arith.cmpf ogt, %227, %228 : vector<12x1xf32>
    %cst_81 = arith.constant 1.000000e-30 : f32
    %230 = vector.broadcast %cst_81 : f32 to vector<12x1xf32>
    %231 = arith.maximumf %227, %230 : vector<12x1xf32>
    %232 = vector.broadcast %231 : vector<12x1xf32> to vector<12x8xf32>
    %233 = arith.divf %225, %232 : vector<12x8xf32>
    %cst_82 = arith.constant 0.000000e+00 : f32
    %234 = vector.shape_cast %229 : vector<12x1xi1> to vector<12x1xi1>
    %235 = vector.broadcast %234 : vector<12x1xi1> to vector<12x8xi1>
    %236 = vector.broadcast %cst_82 : f32 to vector<12x8xf32>
    %237 = arith.select %235, %233, %236 : vector<12x8xi1>, vector<12x8xf32>
    %238 = vector.extract_strided_slice %0 {offsets = [5, 0], sizes = [1, 32], strides = [1, 1]} : vector<8x32xf32> to vector<1x32xf32>
    %239 = vector.broadcast %238 : vector<1x32xf32> to vector<8x32xf32>
    %240 = arith.mulf %6, %239 : vector<8x32xf32>
    %cst_83 = arith.constant dense<0.000000e+00> : vector<12x32xf32>
    %241 = tpu.matmul %237, %240, %cst_83 {dimension_numbers = #tpu.dot_dimension_numbers<[1], [0], [0], [1], [0, 0, 1, 1], [], []>} : vector<12x8xf32>, vector<8x32xf32>, vector<12x32xf32> -> vector<12x32xf32>
    %242 = arith.addf %205, %241 : vector<12x32xf32>
    %243 = vector.extract_strided_slice %17 {offsets = [0, 6], sizes = [12, 1], strides = [1, 1]} : vector<12x8xf32> to vector<12x1xf32>
    %244 = vector.extract_strided_slice %16 {offsets = [6, 0], sizes = [1, 8], strides = [1, 1]} : vector<8x8xf32> to vector<1x8xf32>
    %245 = vector.broadcast %243 : vector<12x1xf32> to vector<12x8xf32>
    %246 = vector.broadcast %244 : vector<1x8xf32> to vector<12x8xf32>
    %247 = arith.addf %245, %246 : vector<12x8xf32>
    %cst_84 = arith.constant 0.000000e+00 : f32
    %248 = vector.broadcast %cst_84 : f32 to vector<12x8xf32>
    %249 = arith.cmpf ogt, %247, %248 : vector<12x8xf32>
    %cst_85 = arith.constant 2.000000e-01 : f32
    %250 = vector.broadcast %cst_85 : f32 to vector<12x8xf32>
    %251 = arith.mulf %250, %247 : vector<12x8xf32>
    %252 = arith.select %249, %247, %251 : vector<12x8xi1>, vector<12x8xf32>
    %cst_86 = arith.constant -1.000000e+30 : f32
    %253 = vector.broadcast %cst_86 : f32 to vector<12x8xf32>
    %254 = arith.select %19, %252, %253 : vector<12x8xi1>, vector<12x8xf32>
    %cst_87 = arith.constant dense<0xFF800000> : vector<12xf32>
    %255 = vector.multi_reduction <maximumf>, %254, %cst_87 [1] : vector<12x8xf32> to vector<12xf32>
    %256 = vector.shape_cast %255 : vector<12xf32> to vector<12x1xf32>
    %257 = vector.broadcast %256 : vector<12x1xf32> to vector<12x8xf32>
    %258 = arith.subf %252, %257 : vector<12x8xf32>
    %cst_88 = arith.constant 0.000000e+00 : f32
    %259 = vector.broadcast %cst_88 : f32 to vector<12x8xf32>
    %260 = arith.select %19, %258, %259 : vector<12x8xi1>, vector<12x8xf32>
    %261 = math.exp %260 : vector<12x8xf32>
    %262 = arith.mulf %15, %261 : vector<12x8xf32>
    %cst_89 = arith.constant dense<0.000000e+00> : vector<12xf32>
    %263 = vector.multi_reduction <add>, %262, %cst_89 [1] : vector<12x8xf32> to vector<12xf32>
    %264 = vector.shape_cast %263 : vector<12xf32> to vector<12x1xf32>
    %cst_90 = arith.constant 0.000000e+00 : f32
    %265 = vector.broadcast %cst_90 : f32 to vector<12x1xf32>
    %266 = arith.cmpf ogt, %264, %265 : vector<12x1xf32>
    %cst_91 = arith.constant 1.000000e-30 : f32
    %267 = vector.broadcast %cst_91 : f32 to vector<12x1xf32>
    %268 = arith.maximumf %264, %267 : vector<12x1xf32>
    %269 = vector.broadcast %268 : vector<12x1xf32> to vector<12x8xf32>
    %270 = arith.divf %262, %269 : vector<12x8xf32>
    %cst_92 = arith.constant 0.000000e+00 : f32
    %271 = vector.shape_cast %266 : vector<12x1xi1> to vector<12x1xi1>
    %272 = vector.broadcast %271 : vector<12x1xi1> to vector<12x8xi1>
    %273 = vector.broadcast %cst_92 : f32 to vector<12x8xf32>
    %274 = arith.select %272, %270, %273 : vector<12x8xi1>, vector<12x8xf32>
    %275 = vector.extract_strided_slice %0 {offsets = [6, 0], sizes = [1, 32], strides = [1, 1]} : vector<8x32xf32> to vector<1x32xf32>
    %276 = vector.broadcast %275 : vector<1x32xf32> to vector<8x32xf32>
    %277 = arith.mulf %6, %276 : vector<8x32xf32>
    %cst_93 = arith.constant dense<0.000000e+00> : vector<12x32xf32>
    %278 = tpu.matmul %274, %277, %cst_93 {dimension_numbers = #tpu.dot_dimension_numbers<[1], [0], [0], [1], [0, 0, 1, 1], [], []>} : vector<12x8xf32>, vector<8x32xf32>, vector<12x32xf32> -> vector<12x32xf32>
    %279 = arith.addf %242, %278 : vector<12x32xf32>
    %280 = vector.extract_strided_slice %17 {offsets = [0, 7], sizes = [12, 1], strides = [1, 1]} : vector<12x8xf32> to vector<12x1xf32>
    %281 = vector.extract_strided_slice %16 {offsets = [7, 0], sizes = [1, 8], strides = [1, 1]} : vector<8x8xf32> to vector<1x8xf32>
    %282 = vector.broadcast %280 : vector<12x1xf32> to vector<12x8xf32>
    %283 = vector.broadcast %281 : vector<1x8xf32> to vector<12x8xf32>
    %284 = arith.addf %282, %283 : vector<12x8xf32>
    %cst_94 = arith.constant 0.000000e+00 : f32
    %285 = vector.broadcast %cst_94 : f32 to vector<12x8xf32>
    %286 = arith.cmpf ogt, %284, %285 : vector<12x8xf32>
    %cst_95 = arith.constant 2.000000e-01 : f32
    %287 = vector.broadcast %cst_95 : f32 to vector<12x8xf32>
    %288 = arith.mulf %287, %284 : vector<12x8xf32>
    %289 = arith.select %286, %284, %288 : vector<12x8xi1>, vector<12x8xf32>
    %cst_96 = arith.constant -1.000000e+30 : f32
    %290 = vector.broadcast %cst_96 : f32 to vector<12x8xf32>
    %291 = arith.select %19, %289, %290 : vector<12x8xi1>, vector<12x8xf32>
    %cst_97 = arith.constant dense<0xFF800000> : vector<12xf32>
    %292 = vector.multi_reduction <maximumf>, %291, %cst_97 [1] : vector<12x8xf32> to vector<12xf32>
    %293 = vector.shape_cast %292 : vector<12xf32> to vector<12x1xf32>
    %294 = vector.broadcast %293 : vector<12x1xf32> to vector<12x8xf32>
    %295 = arith.subf %289, %294 : vector<12x8xf32>
    %cst_98 = arith.constant 0.000000e+00 : f32
    %296 = vector.broadcast %cst_98 : f32 to vector<12x8xf32>
    %297 = arith.select %19, %295, %296 : vector<12x8xi1>, vector<12x8xf32>
    %298 = math.exp %297 : vector<12x8xf32>
    %299 = arith.mulf %15, %298 : vector<12x8xf32>
    %cst_99 = arith.constant dense<0.000000e+00> : vector<12xf32>
    %300 = vector.multi_reduction <add>, %299, %cst_99 [1] : vector<12x8xf32> to vector<12xf32>
    %301 = vector.shape_cast %300 : vector<12xf32> to vector<12x1xf32>
    %cst_100 = arith.constant 0.000000e+00 : f32
    %302 = vector.broadcast %cst_100 : f32 to vector<12x1xf32>
    %303 = arith.cmpf ogt, %301, %302 : vector<12x1xf32>
    %cst_101 = arith.constant 1.000000e-30 : f32
    %304 = vector.broadcast %cst_101 : f32 to vector<12x1xf32>
    %305 = arith.maximumf %301, %304 : vector<12x1xf32>
    %306 = vector.broadcast %305 : vector<12x1xf32> to vector<12x8xf32>
    %307 = arith.divf %299, %306 : vector<12x8xf32>
    %cst_102 = arith.constant 0.000000e+00 : f32
    %308 = vector.shape_cast %303 : vector<12x1xi1> to vector<12x1xi1>
    %309 = vector.broadcast %308 : vector<12x1xi1> to vector<12x8xi1>
    %310 = vector.broadcast %cst_102 : f32 to vector<12x8xf32>
    %311 = arith.select %309, %307, %310 : vector<12x8xi1>, vector<12x8xf32>
    %312 = vector.extract_strided_slice %0 {offsets = [7, 0], sizes = [1, 32], strides = [1, 1]} : vector<8x32xf32> to vector<1x32xf32>
    %313 = vector.broadcast %312 : vector<1x32xf32> to vector<8x32xf32>
    %314 = arith.mulf %6, %313 : vector<8x32xf32>
    %cst_103 = arith.constant dense<0.000000e+00> : vector<12x32xf32>
    %315 = tpu.matmul %311, %314, %cst_103 {dimension_numbers = #tpu.dot_dimension_numbers<[1], [0], [0], [1], [0, 0, 1, 1], [], []>} : vector<12x8xf32>, vector<8x32xf32>, vector<12x32xf32> -> vector<12x32xf32>
    %316 = arith.addf %279, %315 : vector<12x32xf32>
    %cst_104 = arith.constant 0.000000e+00 : f32
    %317 = vector.broadcast %cst_104 : f32 to vector<12x32xf32>
    %318 = arith.maximumf %316, %317 : vector<12x32xf32>
    %c0_105 = arith.constant 0 : index
    %c0_106 = arith.constant 0 : index
    %319 = vector.load %arg8[%c0_105, %c0_106] : memref<32x8xf32, #tpu.memory_space<vmem>>, vector<32x8xf32>
    %c0_107 = arith.constant 0 : index
    %c0_108 = arith.constant 0 : index
    %320 = vector.load %arg9[%c0_107, %c0_108] : memref<32x8xf32, #tpu.memory_space<vmem>>, vector<32x8xf32>
    %c0_109 = arith.constant 0 : index
    %c0_110 = arith.constant 0 : index
    %321 = vector.load %arg11[%c0_109, %c0_110] : memref<8x12xf32, #tpu.memory_space<vmem>>, vector<8x12xf32>
    %cst_111 = arith.constant dense<0.000000e+00> : vector<8x12xf32>
    %322 = tpu.matmul %319, %12, %cst_111 {dimension_numbers = #tpu.dot_dimension_numbers<[0], [1], [1], [0], [0, 1, 1, 0], [], []>} : vector<32x8xf32>, vector<12x32xf32>, vector<8x12xf32> -> vector<8x12xf32>
    %cst_112 = arith.constant dense<0.000000e+00> : vector<8x8xf32>
    %323 = tpu.matmul %6, %320, %cst_112 {dimension_numbers = #tpu.dot_dimension_numbers<[1], [0], [0], [1], [0, 0, 1, 1], [], []>} : vector<8x32xf32>, vector<32x8xf32>, vector<8x8xf32> -> vector<8x8xf32>
    %cst_113 = arith.constant 0.000000e+00 : f32
    %324 = vector.broadcast %cst_113 : f32 to vector<8x12xf32>
    %325 = arith.cmpf ogt, %321, %324 : vector<8x12xf32>
    %cst_114 = arith.constant 0.000000e+00 : f32
    %326 = vector.broadcast %cst_114 : f32 to vector<8x32xf32>
    %327 = vector.extract_strided_slice %323 {offsets = [0, 0], sizes = [8, 1], strides = [1, 1]} : vector<8x8xf32> to vector<8x1xf32>
    %328 = vector.extract_strided_slice %322 {offsets = [0, 0], sizes = [1, 12], strides = [1, 1]} : vector<8x12xf32> to vector<1x12xf32>
    %329 = vector.broadcast %327 : vector<8x1xf32> to vector<8x12xf32>
    %330 = vector.broadcast %328 : vector<1x12xf32> to vector<8x12xf32>
    %331 = arith.addf %329, %330 : vector<8x12xf32>
    %cst_115 = arith.constant 0.000000e+00 : f32
    %332 = vector.broadcast %cst_115 : f32 to vector<8x12xf32>
    %333 = arith.cmpf ogt, %331, %332 : vector<8x12xf32>
    %cst_116 = arith.constant 2.000000e-01 : f32
    %334 = vector.broadcast %cst_116 : f32 to vector<8x12xf32>
    %335 = arith.mulf %334, %331 : vector<8x12xf32>
    %336 = arith.select %333, %331, %335 : vector<8x12xi1>, vector<8x12xf32>
    %cst_117 = arith.constant -1.000000e+30 : f32
    %337 = vector.broadcast %cst_117 : f32 to vector<8x12xf32>
    %338 = arith.select %325, %336, %337 : vector<8x12xi1>, vector<8x12xf32>
    %cst_118 = arith.constant dense<0xFF800000> : vector<8xf32>
    %339 = vector.multi_reduction <maximumf>, %338, %cst_118 [1] : vector<8x12xf32> to vector<8xf32>
    %340 = vector.shape_cast %339 : vector<8xf32> to vector<8x1xf32>
    %341 = vector.broadcast %340 : vector<8x1xf32> to vector<8x12xf32>
    %342 = arith.subf %336, %341 : vector<8x12xf32>
    %cst_119 = arith.constant 0.000000e+00 : f32
    %343 = vector.broadcast %cst_119 : f32 to vector<8x12xf32>
    %344 = arith.select %325, %342, %343 : vector<8x12xi1>, vector<8x12xf32>
    %345 = math.exp %344 : vector<8x12xf32>
    %346 = arith.mulf %321, %345 : vector<8x12xf32>
    %cst_120 = arith.constant dense<0.000000e+00> : vector<8xf32>
    %347 = vector.multi_reduction <add>, %346, %cst_120 [1] : vector<8x12xf32> to vector<8xf32>
    %348 = vector.shape_cast %347 : vector<8xf32> to vector<8x1xf32>
    %cst_121 = arith.constant 0.000000e+00 : f32
    %349 = vector.broadcast %cst_121 : f32 to vector<8x1xf32>
    %350 = arith.cmpf ogt, %348, %349 : vector<8x1xf32>
    %cst_122 = arith.constant 1.000000e-30 : f32
    %351 = vector.broadcast %cst_122 : f32 to vector<8x1xf32>
    %352 = arith.maximumf %348, %351 : vector<8x1xf32>
    %353 = vector.broadcast %352 : vector<8x1xf32> to vector<8x12xf32>
    %354 = arith.divf %346, %353 : vector<8x12xf32>
    %cst_123 = arith.constant 0.000000e+00 : f32
    %355 = vector.shape_cast %350 : vector<8x1xi1> to vector<8x1xi1>
    %356 = vector.broadcast %355 : vector<8x1xi1> to vector<8x12xi1>
    %357 = vector.broadcast %cst_123 : f32 to vector<8x12xf32>
    %358 = arith.select %356, %354, %357 : vector<8x12xi1>, vector<8x12xf32>
    %359 = vector.extract_strided_slice %0 {offsets = [0, 0], sizes = [1, 32], strides = [1, 1]} : vector<8x32xf32> to vector<1x32xf32>
    %360 = vector.broadcast %359 : vector<1x32xf32> to vector<12x32xf32>
    %361 = arith.mulf %12, %360 : vector<12x32xf32>
    %cst_124 = arith.constant dense<0.000000e+00> : vector<8x32xf32>
    %362 = tpu.matmul %358, %361, %cst_124 {dimension_numbers = #tpu.dot_dimension_numbers<[1], [0], [0], [1], [0, 0, 1, 1], [], []>} : vector<8x12xf32>, vector<12x32xf32>, vector<8x32xf32> -> vector<8x32xf32>
    %363 = arith.addf %326, %362 : vector<8x32xf32>
    %364 = vector.extract_strided_slice %323 {offsets = [0, 1], sizes = [8, 1], strides = [1, 1]} : vector<8x8xf32> to vector<8x1xf32>
    %365 = vector.extract_strided_slice %322 {offsets = [1, 0], sizes = [1, 12], strides = [1, 1]} : vector<8x12xf32> to vector<1x12xf32>
    %366 = vector.broadcast %364 : vector<8x1xf32> to vector<8x12xf32>
    %367 = vector.broadcast %365 : vector<1x12xf32> to vector<8x12xf32>
    %368 = arith.addf %366, %367 : vector<8x12xf32>
    %cst_125 = arith.constant 0.000000e+00 : f32
    %369 = vector.broadcast %cst_125 : f32 to vector<8x12xf32>
    %370 = arith.cmpf ogt, %368, %369 : vector<8x12xf32>
    %cst_126 = arith.constant 2.000000e-01 : f32
    %371 = vector.broadcast %cst_126 : f32 to vector<8x12xf32>
    %372 = arith.mulf %371, %368 : vector<8x12xf32>
    %373 = arith.select %370, %368, %372 : vector<8x12xi1>, vector<8x12xf32>
    %cst_127 = arith.constant -1.000000e+30 : f32
    %374 = vector.broadcast %cst_127 : f32 to vector<8x12xf32>
    %375 = arith.select %325, %373, %374 : vector<8x12xi1>, vector<8x12xf32>
    %cst_128 = arith.constant dense<0xFF800000> : vector<8xf32>
    %376 = vector.multi_reduction <maximumf>, %375, %cst_128 [1] : vector<8x12xf32> to vector<8xf32>
    %377 = vector.shape_cast %376 : vector<8xf32> to vector<8x1xf32>
    %378 = vector.broadcast %377 : vector<8x1xf32> to vector<8x12xf32>
    %379 = arith.subf %373, %378 : vector<8x12xf32>
    %cst_129 = arith.constant 0.000000e+00 : f32
    %380 = vector.broadcast %cst_129 : f32 to vector<8x12xf32>
    %381 = arith.select %325, %379, %380 : vector<8x12xi1>, vector<8x12xf32>
    %382 = math.exp %381 : vector<8x12xf32>
    %383 = arith.mulf %321, %382 : vector<8x12xf32>
    %cst_130 = arith.constant dense<0.000000e+00> : vector<8xf32>
    %384 = vector.multi_reduction <add>, %383, %cst_130 [1] : vector<8x12xf32> to vector<8xf32>
    %385 = vector.shape_cast %384 : vector<8xf32> to vector<8x1xf32>
    %cst_131 = arith.constant 0.000000e+00 : f32
    %386 = vector.broadcast %cst_131 : f32 to vector<8x1xf32>
    %387 = arith.cmpf ogt, %385, %386 : vector<8x1xf32>
    %cst_132 = arith.constant 1.000000e-30 : f32
    %388 = vector.broadcast %cst_132 : f32 to vector<8x1xf32>
    %389 = arith.maximumf %385, %388 : vector<8x1xf32>
    %390 = vector.broadcast %389 : vector<8x1xf32> to vector<8x12xf32>
    %391 = arith.divf %383, %390 : vector<8x12xf32>
    %cst_133 = arith.constant 0.000000e+00 : f32
    %392 = vector.shape_cast %387 : vector<8x1xi1> to vector<8x1xi1>
    %393 = vector.broadcast %392 : vector<8x1xi1> to vector<8x12xi1>
    %394 = vector.broadcast %cst_133 : f32 to vector<8x12xf32>
    %395 = arith.select %393, %391, %394 : vector<8x12xi1>, vector<8x12xf32>
    %396 = vector.extract_strided_slice %0 {offsets = [1, 0], sizes = [1, 32], strides = [1, 1]} : vector<8x32xf32> to vector<1x32xf32>
    %397 = vector.broadcast %396 : vector<1x32xf32> to vector<12x32xf32>
    %398 = arith.mulf %12, %397 : vector<12x32xf32>
    %cst_134 = arith.constant dense<0.000000e+00> : vector<8x32xf32>
    %399 = tpu.matmul %395, %398, %cst_134 {dimension_numbers = #tpu.dot_dimension_numbers<[1], [0], [0], [1], [0, 0, 1, 1], [], []>} : vector<8x12xf32>, vector<12x32xf32>, vector<8x32xf32> -> vector<8x32xf32>
    %400 = arith.addf %363, %399 : vector<8x32xf32>
    %401 = vector.extract_strided_slice %323 {offsets = [0, 2], sizes = [8, 1], strides = [1, 1]} : vector<8x8xf32> to vector<8x1xf32>
    %402 = vector.extract_strided_slice %322 {offsets = [2, 0], sizes = [1, 12], strides = [1, 1]} : vector<8x12xf32> to vector<1x12xf32>
    %403 = vector.broadcast %401 : vector<8x1xf32> to vector<8x12xf32>
    %404 = vector.broadcast %402 : vector<1x12xf32> to vector<8x12xf32>
    %405 = arith.addf %403, %404 : vector<8x12xf32>
    %cst_135 = arith.constant 0.000000e+00 : f32
    %406 = vector.broadcast %cst_135 : f32 to vector<8x12xf32>
    %407 = arith.cmpf ogt, %405, %406 : vector<8x12xf32>
    %cst_136 = arith.constant 2.000000e-01 : f32
    %408 = vector.broadcast %cst_136 : f32 to vector<8x12xf32>
    %409 = arith.mulf %408, %405 : vector<8x12xf32>
    %410 = arith.select %407, %405, %409 : vector<8x12xi1>, vector<8x12xf32>
    %cst_137 = arith.constant -1.000000e+30 : f32
    %411 = vector.broadcast %cst_137 : f32 to vector<8x12xf32>
    %412 = arith.select %325, %410, %411 : vector<8x12xi1>, vector<8x12xf32>
    %cst_138 = arith.constant dense<0xFF800000> : vector<8xf32>
    %413 = vector.multi_reduction <maximumf>, %412, %cst_138 [1] : vector<8x12xf32> to vector<8xf32>
    %414 = vector.shape_cast %413 : vector<8xf32> to vector<8x1xf32>
    %415 = vector.broadcast %414 : vector<8x1xf32> to vector<8x12xf32>
    %416 = arith.subf %410, %415 : vector<8x12xf32>
    %cst_139 = arith.constant 0.000000e+00 : f32
    %417 = vector.broadcast %cst_139 : f32 to vector<8x12xf32>
    %418 = arith.select %325, %416, %417 : vector<8x12xi1>, vector<8x12xf32>
    %419 = math.exp %418 : vector<8x12xf32>
    %420 = arith.mulf %321, %419 : vector<8x12xf32>
    %cst_140 = arith.constant dense<0.000000e+00> : vector<8xf32>
    %421 = vector.multi_reduction <add>, %420, %cst_140 [1] : vector<8x12xf32> to vector<8xf32>
    %422 = vector.shape_cast %421 : vector<8xf32> to vector<8x1xf32>
    %cst_141 = arith.constant 0.000000e+00 : f32
    %423 = vector.broadcast %cst_141 : f32 to vector<8x1xf32>
    %424 = arith.cmpf ogt, %422, %423 : vector<8x1xf32>
    %cst_142 = arith.constant 1.000000e-30 : f32
    %425 = vector.broadcast %cst_142 : f32 to vector<8x1xf32>
    %426 = arith.maximumf %422, %425 : vector<8x1xf32>
    %427 = vector.broadcast %426 : vector<8x1xf32> to vector<8x12xf32>
    %428 = arith.divf %420, %427 : vector<8x12xf32>
    %cst_143 = arith.constant 0.000000e+00 : f32
    %429 = vector.shape_cast %424 : vector<8x1xi1> to vector<8x1xi1>
    %430 = vector.broadcast %429 : vector<8x1xi1> to vector<8x12xi1>
    %431 = vector.broadcast %cst_143 : f32 to vector<8x12xf32>
    %432 = arith.select %430, %428, %431 : vector<8x12xi1>, vector<8x12xf32>
    %433 = vector.extract_strided_slice %0 {offsets = [2, 0], sizes = [1, 32], strides = [1, 1]} : vector<8x32xf32> to vector<1x32xf32>
    %434 = vector.broadcast %433 : vector<1x32xf32> to vector<12x32xf32>
    %435 = arith.mulf %12, %434 : vector<12x32xf32>
    %cst_144 = arith.constant dense<0.000000e+00> : vector<8x32xf32>
    %436 = tpu.matmul %432, %435, %cst_144 {dimension_numbers = #tpu.dot_dimension_numbers<[1], [0], [0], [1], [0, 0, 1, 1], [], []>} : vector<8x12xf32>, vector<12x32xf32>, vector<8x32xf32> -> vector<8x32xf32>
    %437 = arith.addf %400, %436 : vector<8x32xf32>
    %438 = vector.extract_strided_slice %323 {offsets = [0, 3], sizes = [8, 1], strides = [1, 1]} : vector<8x8xf32> to vector<8x1xf32>
    %439 = vector.extract_strided_slice %322 {offsets = [3, 0], sizes = [1, 12], strides = [1, 1]} : vector<8x12xf32> to vector<1x12xf32>
    %440 = vector.broadcast %438 : vector<8x1xf32> to vector<8x12xf32>
    %441 = vector.broadcast %439 : vector<1x12xf32> to vector<8x12xf32>
    %442 = arith.addf %440, %441 : vector<8x12xf32>
    %cst_145 = arith.constant 0.000000e+00 : f32
    %443 = vector.broadcast %cst_145 : f32 to vector<8x12xf32>
    %444 = arith.cmpf ogt, %442, %443 : vector<8x12xf32>
    %cst_146 = arith.constant 2.000000e-01 : f32
    %445 = vector.broadcast %cst_146 : f32 to vector<8x12xf32>
    %446 = arith.mulf %445, %442 : vector<8x12xf32>
    %447 = arith.select %444, %442, %446 : vector<8x12xi1>, vector<8x12xf32>
    %cst_147 = arith.constant -1.000000e+30 : f32
    %448 = vector.broadcast %cst_147 : f32 to vector<8x12xf32>
    %449 = arith.select %325, %447, %448 : vector<8x12xi1>, vector<8x12xf32>
    %cst_148 = arith.constant dense<0xFF800000> : vector<8xf32>
    %450 = vector.multi_reduction <maximumf>, %449, %cst_148 [1] : vector<8x12xf32> to vector<8xf32>
    %451 = vector.shape_cast %450 : vector<8xf32> to vector<8x1xf32>
    %452 = vector.broadcast %451 : vector<8x1xf32> to vector<8x12xf32>
    %453 = arith.subf %447, %452 : vector<8x12xf32>
    %cst_149 = arith.constant 0.000000e+00 : f32
    %454 = vector.broadcast %cst_149 : f32 to vector<8x12xf32>
    %455 = arith.select %325, %453, %454 : vector<8x12xi1>, vector<8x12xf32>
    %456 = math.exp %455 : vector<8x12xf32>
    %457 = arith.mulf %321, %456 : vector<8x12xf32>
    %cst_150 = arith.constant dense<0.000000e+00> : vector<8xf32>
    %458 = vector.multi_reduction <add>, %457, %cst_150 [1] : vector<8x12xf32> to vector<8xf32>
    %459 = vector.shape_cast %458 : vector<8xf32> to vector<8x1xf32>
    %cst_151 = arith.constant 0.000000e+00 : f32
    %460 = vector.broadcast %cst_151 : f32 to vector<8x1xf32>
    %461 = arith.cmpf ogt, %459, %460 : vector<8x1xf32>
    %cst_152 = arith.constant 1.000000e-30 : f32
    %462 = vector.broadcast %cst_152 : f32 to vector<8x1xf32>
    %463 = arith.maximumf %459, %462 : vector<8x1xf32>
    %464 = vector.broadcast %463 : vector<8x1xf32> to vector<8x12xf32>
    %465 = arith.divf %457, %464 : vector<8x12xf32>
    %cst_153 = arith.constant 0.000000e+00 : f32
    %466 = vector.shape_cast %461 : vector<8x1xi1> to vector<8x1xi1>
    %467 = vector.broadcast %466 : vector<8x1xi1> to vector<8x12xi1>
    %468 = vector.broadcast %cst_153 : f32 to vector<8x12xf32>
    %469 = arith.select %467, %465, %468 : vector<8x12xi1>, vector<8x12xf32>
    %470 = vector.extract_strided_slice %0 {offsets = [3, 0], sizes = [1, 32], strides = [1, 1]} : vector<8x32xf32> to vector<1x32xf32>
    %471 = vector.broadcast %470 : vector<1x32xf32> to vector<12x32xf32>
    %472 = arith.mulf %12, %471 : vector<12x32xf32>
    %cst_154 = arith.constant dense<0.000000e+00> : vector<8x32xf32>
    %473 = tpu.matmul %469, %472, %cst_154 {dimension_numbers = #tpu.dot_dimension_numbers<[1], [0], [0], [1], [0, 0, 1, 1], [], []>} : vector<8x12xf32>, vector<12x32xf32>, vector<8x32xf32> -> vector<8x32xf32>
    %474 = arith.addf %437, %473 : vector<8x32xf32>
    %475 = vector.extract_strided_slice %323 {offsets = [0, 4], sizes = [8, 1], strides = [1, 1]} : vector<8x8xf32> to vector<8x1xf32>
    %476 = vector.extract_strided_slice %322 {offsets = [4, 0], sizes = [1, 12], strides = [1, 1]} : vector<8x12xf32> to vector<1x12xf32>
    %477 = vector.broadcast %475 : vector<8x1xf32> to vector<8x12xf32>
    %478 = vector.broadcast %476 : vector<1x12xf32> to vector<8x12xf32>
    %479 = arith.addf %477, %478 : vector<8x12xf32>
    %cst_155 = arith.constant 0.000000e+00 : f32
    %480 = vector.broadcast %cst_155 : f32 to vector<8x12xf32>
    %481 = arith.cmpf ogt, %479, %480 : vector<8x12xf32>
    %cst_156 = arith.constant 2.000000e-01 : f32
    %482 = vector.broadcast %cst_156 : f32 to vector<8x12xf32>
    %483 = arith.mulf %482, %479 : vector<8x12xf32>
    %484 = arith.select %481, %479, %483 : vector<8x12xi1>, vector<8x12xf32>
    %cst_157 = arith.constant -1.000000e+30 : f32
    %485 = vector.broadcast %cst_157 : f32 to vector<8x12xf32>
    %486 = arith.select %325, %484, %485 : vector<8x12xi1>, vector<8x12xf32>
    %cst_158 = arith.constant dense<0xFF800000> : vector<8xf32>
    %487 = vector.multi_reduction <maximumf>, %486, %cst_158 [1] : vector<8x12xf32> to vector<8xf32>
    %488 = vector.shape_cast %487 : vector<8xf32> to vector<8x1xf32>
    %489 = vector.broadcast %488 : vector<8x1xf32> to vector<8x12xf32>
    %490 = arith.subf %484, %489 : vector<8x12xf32>
    %cst_159 = arith.constant 0.000000e+00 : f32
    %491 = vector.broadcast %cst_159 : f32 to vector<8x12xf32>
    %492 = arith.select %325, %490, %491 : vector<8x12xi1>, vector<8x12xf32>
    %493 = math.exp %492 : vector<8x12xf32>
    %494 = arith.mulf %321, %493 : vector<8x12xf32>
    %cst_160 = arith.constant dense<0.000000e+00> : vector<8xf32>
    %495 = vector.multi_reduction <add>, %494, %cst_160 [1] : vector<8x12xf32> to vector<8xf32>
    %496 = vector.shape_cast %495 : vector<8xf32> to vector<8x1xf32>
    %cst_161 = arith.constant 0.000000e+00 : f32
    %497 = vector.broadcast %cst_161 : f32 to vector<8x1xf32>
    %498 = arith.cmpf ogt, %496, %497 : vector<8x1xf32>
    %cst_162 = arith.constant 1.000000e-30 : f32
    %499 = vector.broadcast %cst_162 : f32 to vector<8x1xf32>
    %500 = arith.maximumf %496, %499 : vector<8x1xf32>
    %501 = vector.broadcast %500 : vector<8x1xf32> to vector<8x12xf32>
    %502 = arith.divf %494, %501 : vector<8x12xf32>
    %cst_163 = arith.constant 0.000000e+00 : f32
    %503 = vector.shape_cast %498 : vector<8x1xi1> to vector<8x1xi1>
    %504 = vector.broadcast %503 : vector<8x1xi1> to vector<8x12xi1>
    %505 = vector.broadcast %cst_163 : f32 to vector<8x12xf32>
    %506 = arith.select %504, %502, %505 : vector<8x12xi1>, vector<8x12xf32>
    %507 = vector.extract_strided_slice %0 {offsets = [4, 0], sizes = [1, 32], strides = [1, 1]} : vector<8x32xf32> to vector<1x32xf32>
    %508 = vector.broadcast %507 : vector<1x32xf32> to vector<12x32xf32>
    %509 = arith.mulf %12, %508 : vector<12x32xf32>
    %cst_164 = arith.constant dense<0.000000e+00> : vector<8x32xf32>
    %510 = tpu.matmul %506, %509, %cst_164 {dimension_numbers = #tpu.dot_dimension_numbers<[1], [0], [0], [1], [0, 0, 1, 1], [], []>} : vector<8x12xf32>, vector<12x32xf32>, vector<8x32xf32> -> vector<8x32xf32>
    %511 = arith.addf %474, %510 : vector<8x32xf32>
    %512 = vector.extract_strided_slice %323 {offsets = [0, 5], sizes = [8, 1], strides = [1, 1]} : vector<8x8xf32> to vector<8x1xf32>
    %513 = vector.extract_strided_slice %322 {offsets = [5, 0], sizes = [1, 12], strides = [1, 1]} : vector<8x12xf32> to vector<1x12xf32>
    %514 = vector.broadcast %512 : vector<8x1xf32> to vector<8x12xf32>
    %515 = vector.broadcast %513 : vector<1x12xf32> to vector<8x12xf32>
    %516 = arith.addf %514, %515 : vector<8x12xf32>
    %cst_165 = arith.constant 0.000000e+00 : f32
    %517 = vector.broadcast %cst_165 : f32 to vector<8x12xf32>
    %518 = arith.cmpf ogt, %516, %517 : vector<8x12xf32>
    %cst_166 = arith.constant 2.000000e-01 : f32
    %519 = vector.broadcast %cst_166 : f32 to vector<8x12xf32>
    %520 = arith.mulf %519, %516 : vector<8x12xf32>
    %521 = arith.select %518, %516, %520 : vector<8x12xi1>, vector<8x12xf32>
    %cst_167 = arith.constant -1.000000e+30 : f32
    %522 = vector.broadcast %cst_167 : f32 to vector<8x12xf32>
    %523 = arith.select %325, %521, %522 : vector<8x12xi1>, vector<8x12xf32>
    %cst_168 = arith.constant dense<0xFF800000> : vector<8xf32>
    %524 = vector.multi_reduction <maximumf>, %523, %cst_168 [1] : vector<8x12xf32> to vector<8xf32>
    %525 = vector.shape_cast %524 : vector<8xf32> to vector<8x1xf32>
    %526 = vector.broadcast %525 : vector<8x1xf32> to vector<8x12xf32>
    %527 = arith.subf %521, %526 : vector<8x12xf32>
    %cst_169 = arith.constant 0.000000e+00 : f32
    %528 = vector.broadcast %cst_169 : f32 to vector<8x12xf32>
    %529 = arith.select %325, %527, %528 : vector<8x12xi1>, vector<8x12xf32>
    %530 = math.exp %529 : vector<8x12xf32>
    %531 = arith.mulf %321, %530 : vector<8x12xf32>
    %cst_170 = arith.constant dense<0.000000e+00> : vector<8xf32>
    %532 = vector.multi_reduction <add>, %531, %cst_170 [1] : vector<8x12xf32> to vector<8xf32>
    %533 = vector.shape_cast %532 : vector<8xf32> to vector<8x1xf32>
    %cst_171 = arith.constant 0.000000e+00 : f32
    %534 = vector.broadcast %cst_171 : f32 to vector<8x1xf32>
    %535 = arith.cmpf ogt, %533, %534 : vector<8x1xf32>
    %cst_172 = arith.constant 1.000000e-30 : f32
    %536 = vector.broadcast %cst_172 : f32 to vector<8x1xf32>
    %537 = arith.maximumf %533, %536 : vector<8x1xf32>
    %538 = vector.broadcast %537 : vector<8x1xf32> to vector<8x12xf32>
    %539 = arith.divf %531, %538 : vector<8x12xf32>
    %cst_173 = arith.constant 0.000000e+00 : f32
    %540 = vector.shape_cast %535 : vector<8x1xi1> to vector<8x1xi1>
    %541 = vector.broadcast %540 : vector<8x1xi1> to vector<8x12xi1>
    %542 = vector.broadcast %cst_173 : f32 to vector<8x12xf32>
    %543 = arith.select %541, %539, %542 : vector<8x12xi1>, vector<8x12xf32>
    %544 = vector.extract_strided_slice %0 {offsets = [5, 0], sizes = [1, 32], strides = [1, 1]} : vector<8x32xf32> to vector<1x32xf32>
    %545 = vector.broadcast %544 : vector<1x32xf32> to vector<12x32xf32>
    %546 = arith.mulf %12, %545 : vector<12x32xf32>
    %cst_174 = arith.constant dense<0.000000e+00> : vector<8x32xf32>
    %547 = tpu.matmul %543, %546, %cst_174 {dimension_numbers = #tpu.dot_dimension_numbers<[1], [0], [0], [1], [0, 0, 1, 1], [], []>} : vector<8x12xf32>, vector<12x32xf32>, vector<8x32xf32> -> vector<8x32xf32>
    %548 = arith.addf %511, %547 : vector<8x32xf32>
    %549 = vector.extract_strided_slice %323 {offsets = [0, 6], sizes = [8, 1], strides = [1, 1]} : vector<8x8xf32> to vector<8x1xf32>
    %550 = vector.extract_strided_slice %322 {offsets = [6, 0], sizes = [1, 12], strides = [1, 1]} : vector<8x12xf32> to vector<1x12xf32>
    %551 = vector.broadcast %549 : vector<8x1xf32> to vector<8x12xf32>
    %552 = vector.broadcast %550 : vector<1x12xf32> to vector<8x12xf32>
    %553 = arith.addf %551, %552 : vector<8x12xf32>
    %cst_175 = arith.constant 0.000000e+00 : f32
    %554 = vector.broadcast %cst_175 : f32 to vector<8x12xf32>
    %555 = arith.cmpf ogt, %553, %554 : vector<8x12xf32>
    %cst_176 = arith.constant 2.000000e-01 : f32
    %556 = vector.broadcast %cst_176 : f32 to vector<8x12xf32>
    %557 = arith.mulf %556, %553 : vector<8x12xf32>
    %558 = arith.select %555, %553, %557 : vector<8x12xi1>, vector<8x12xf32>
    %cst_177 = arith.constant -1.000000e+30 : f32
    %559 = vector.broadcast %cst_177 : f32 to vector<8x12xf32>
    %560 = arith.select %325, %558, %559 : vector<8x12xi1>, vector<8x12xf32>
    %cst_178 = arith.constant dense<0xFF800000> : vector<8xf32>
    %561 = vector.multi_reduction <maximumf>, %560, %cst_178 [1] : vector<8x12xf32> to vector<8xf32>
    %562 = vector.shape_cast %561 : vector<8xf32> to vector<8x1xf32>
    %563 = vector.broadcast %562 : vector<8x1xf32> to vector<8x12xf32>
    %564 = arith.subf %558, %563 : vector<8x12xf32>
    %cst_179 = arith.constant 0.000000e+00 : f32
    %565 = vector.broadcast %cst_179 : f32 to vector<8x12xf32>
    %566 = arith.select %325, %564, %565 : vector<8x12xi1>, vector<8x12xf32>
    %567 = math.exp %566 : vector<8x12xf32>
    %568 = arith.mulf %321, %567 : vector<8x12xf32>
    %cst_180 = arith.constant dense<0.000000e+00> : vector<8xf32>
    %569 = vector.multi_reduction <add>, %568, %cst_180 [1] : vector<8x12xf32> to vector<8xf32>
    %570 = vector.shape_cast %569 : vector<8xf32> to vector<8x1xf32>
    %cst_181 = arith.constant 0.000000e+00 : f32
    %571 = vector.broadcast %cst_181 : f32 to vector<8x1xf32>
    %572 = arith.cmpf ogt, %570, %571 : vector<8x1xf32>
    %cst_182 = arith.constant 1.000000e-30 : f32
    %573 = vector.broadcast %cst_182 : f32 to vector<8x1xf32>
    %574 = arith.maximumf %570, %573 : vector<8x1xf32>
    %575 = vector.broadcast %574 : vector<8x1xf32> to vector<8x12xf32>
    %576 = arith.divf %568, %575 : vector<8x12xf32>
    %cst_183 = arith.constant 0.000000e+00 : f32
    %577 = vector.shape_cast %572 : vector<8x1xi1> to vector<8x1xi1>
    %578 = vector.broadcast %577 : vector<8x1xi1> to vector<8x12xi1>
    %579 = vector.broadcast %cst_183 : f32 to vector<8x12xf32>
    %580 = arith.select %578, %576, %579 : vector<8x12xi1>, vector<8x12xf32>
    %581 = vector.extract_strided_slice %0 {offsets = [6, 0], sizes = [1, 32], strides = [1, 1]} : vector<8x32xf32> to vector<1x32xf32>
    %582 = vector.broadcast %581 : vector<1x32xf32> to vector<12x32xf32>
    %583 = arith.mulf %12, %582 : vector<12x32xf32>
    %cst_184 = arith.constant dense<0.000000e+00> : vector<8x32xf32>
    %584 = tpu.matmul %580, %583, %cst_184 {dimension_numbers = #tpu.dot_dimension_numbers<[1], [0], [0], [1], [0, 0, 1, 1], [], []>} : vector<8x12xf32>, vector<12x32xf32>, vector<8x32xf32> -> vector<8x32xf32>
    %585 = arith.addf %548, %584 : vector<8x32xf32>
    %586 = vector.extract_strided_slice %323 {offsets = [0, 7], sizes = [8, 1], strides = [1, 1]} : vector<8x8xf32> to vector<8x1xf32>
    %587 = vector.extract_strided_slice %322 {offsets = [7, 0], sizes = [1, 12], strides = [1, 1]} : vector<8x12xf32> to vector<1x12xf32>
    %588 = vector.broadcast %586 : vector<8x1xf32> to vector<8x12xf32>
    %589 = vector.broadcast %587 : vector<1x12xf32> to vector<8x12xf32>
    %590 = arith.addf %588, %589 : vector<8x12xf32>
    %cst_185 = arith.constant 0.000000e+00 : f32
    %591 = vector.broadcast %cst_185 : f32 to vector<8x12xf32>
    %592 = arith.cmpf ogt, %590, %591 : vector<8x12xf32>
    %cst_186 = arith.constant 2.000000e-01 : f32
    %593 = vector.broadcast %cst_186 : f32 to vector<8x12xf32>
    %594 = arith.mulf %593, %590 : vector<8x12xf32>
    %595 = arith.select %592, %590, %594 : vector<8x12xi1>, vector<8x12xf32>
    %cst_187 = arith.constant -1.000000e+30 : f32
    %596 = vector.broadcast %cst_187 : f32 to vector<8x12xf32>
    %597 = arith.select %325, %595, %596 : vector<8x12xi1>, vector<8x12xf32>
    %cst_188 = arith.constant dense<0xFF800000> : vector<8xf32>
    %598 = vector.multi_reduction <maximumf>, %597, %cst_188 [1] : vector<8x12xf32> to vector<8xf32>
    %599 = vector.shape_cast %598 : vector<8xf32> to vector<8x1xf32>
    %600 = vector.broadcast %599 : vector<8x1xf32> to vector<8x12xf32>
    %601 = arith.subf %595, %600 : vector<8x12xf32>
    %cst_189 = arith.constant 0.000000e+00 : f32
    %602 = vector.broadcast %cst_189 : f32 to vector<8x12xf32>
    %603 = arith.select %325, %601, %602 : vector<8x12xi1>, vector<8x12xf32>
    %604 = math.exp %603 : vector<8x12xf32>
    %605 = arith.mulf %321, %604 : vector<8x12xf32>
    %cst_190 = arith.constant dense<0.000000e+00> : vector<8xf32>
    %606 = vector.multi_reduction <add>, %605, %cst_190 [1] : vector<8x12xf32> to vector<8xf32>
    %607 = vector.shape_cast %606 : vector<8xf32> to vector<8x1xf32>
    %cst_191 = arith.constant 0.000000e+00 : f32
    %608 = vector.broadcast %cst_191 : f32 to vector<8x1xf32>
    %609 = arith.cmpf ogt, %607, %608 : vector<8x1xf32>
    %cst_192 = arith.constant 1.000000e-30 : f32
    %610 = vector.broadcast %cst_192 : f32 to vector<8x1xf32>
    %611 = arith.maximumf %607, %610 : vector<8x1xf32>
    %612 = vector.broadcast %611 : vector<8x1xf32> to vector<8x12xf32>
    %613 = arith.divf %605, %612 : vector<8x12xf32>
    %cst_193 = arith.constant 0.000000e+00 : f32
    %614 = vector.shape_cast %609 : vector<8x1xi1> to vector<8x1xi1>
    %615 = vector.broadcast %614 : vector<8x1xi1> to vector<8x12xi1>
    %616 = vector.broadcast %cst_193 : f32 to vector<8x12xf32>
    %617 = arith.select %615, %613, %616 : vector<8x12xi1>, vector<8x12xf32>
    %618 = vector.extract_strided_slice %0 {offsets = [7, 0], sizes = [1, 32], strides = [1, 1]} : vector<8x32xf32> to vector<1x32xf32>
    %619 = vector.broadcast %618 : vector<1x32xf32> to vector<12x32xf32>
    %620 = arith.mulf %12, %619 : vector<12x32xf32>
    %cst_194 = arith.constant dense<0.000000e+00> : vector<8x32xf32>
    %621 = tpu.matmul %617, %620, %cst_194 {dimension_numbers = #tpu.dot_dimension_numbers<[1], [0], [0], [1], [0, 0, 1, 1], [], []>} : vector<8x12xf32>, vector<12x32xf32>, vector<8x32xf32> -> vector<8x32xf32>
    %622 = arith.addf %585, %621 : vector<8x32xf32>
    %cst_195 = arith.constant 0.000000e+00 : f32
    %623 = vector.broadcast %cst_195 : f32 to vector<8x32xf32>
    %624 = arith.maximumf %622, %623 : vector<8x32xf32>
    %c0_196 = arith.constant 0 : index
    %c0_197 = arith.constant 0 : index
    %625 = vector.load %arg13[%c0_196, %c0_197] : memref<1x32xf32, #tpu.memory_space<vmem>>, vector<1x32xf32>
    %c0_198 = arith.constant 0 : index
    %c0_199 = arith.constant 0 : index
    %626 = vector.load %arg14[%c0_198, %c0_199] : memref<1x32xf32, #tpu.memory_space<vmem>>, vector<1x32xf32>
    %cst_200 = arith.constant dense<0.000000e+00> : vector<32xf32>
    %627 = vector.multi_reduction <add>, %624, %cst_200 [0] : vector<8x32xf32> to vector<32xf32>
    %628 = vector.shape_cast %627 : vector<32xf32> to vector<1x32xf32>
    %cst_201 = arith.constant 8.000000e+00 : f32
    %629 = vector.broadcast %cst_201 : f32 to vector<1x32xf32>
    %630 = arith.divf %628, %629 : vector<1x32xf32>
    %631 = vector.broadcast %630 : vector<1x32xf32> to vector<8x32xf32>
    %632 = arith.subf %624, %631 : vector<8x32xf32>
    %633 = arith.mulf %632, %632 : vector<8x32xf32>
    %cst_202 = arith.constant dense<0.000000e+00> : vector<32xf32>
    %634 = vector.multi_reduction <add>, %633, %cst_202 [0] : vector<8x32xf32> to vector<32xf32>
    %635 = vector.shape_cast %634 : vector<32xf32> to vector<1x32xf32>
    %cst_203 = arith.constant 8.000000e+00 : f32
    %636 = vector.broadcast %cst_203 : f32 to vector<1x32xf32>
    %637 = arith.divf %635, %636 : vector<1x32xf32>
    %638 = vector.broadcast %630 : vector<1x32xf32> to vector<8x32xf32>
    %639 = arith.subf %624, %638 : vector<8x32xf32>
    %cst_204 = arith.constant 9.99999974E-6 : f32
    %640 = vector.broadcast %cst_204 : f32 to vector<1x32xf32>
    %641 = arith.addf %637, %640 : vector<1x32xf32>
    %642 = math.rsqrt %641 : vector<1x32xf32>
    %643 = vector.broadcast %642 : vector<1x32xf32> to vector<8x32xf32>
    %644 = arith.mulf %639, %643 : vector<8x32xf32>
    %645 = vector.broadcast %625 : vector<1x32xf32> to vector<8x32xf32>
    %646 = arith.mulf %644, %645 : vector<8x32xf32>
    %647 = vector.broadcast %626 : vector<1x32xf32> to vector<8x32xf32>
    %648 = arith.addf %646, %647 : vector<8x32xf32>
    %cst_205 = arith.constant 0.000000e+00 : f32
    %649 = vector.broadcast %cst_205 : f32 to vector<8x32xf32>
    %650 = arith.maximumf %648, %649 : vector<8x32xf32>
    %c0_206 = arith.constant 0 : index
    %c0_207 = arith.constant 0 : index
    %651 = vector.load %arg15[%c0_206, %c0_207] : memref<32x16xf32, #tpu.memory_space<vmem>>, vector<32x16xf32>
    %cst_208 = arith.constant dense<0.000000e+00> : vector<8x16xf32>
    %652 = tpu.matmul %650, %651, %cst_208 {dimension_numbers = #tpu.dot_dimension_numbers<[1], [0], [0], [1], [0, 0, 1, 1], [], []>} : vector<8x32xf32>, vector<32x16xf32>, vector<8x16xf32> -> vector<8x16xf32>
    %c0_209 = arith.constant 0 : index
    %c0_210 = arith.constant 0 : index
    %653 = vector.load %arg16[%c0_209, %c0_210] : memref<1x16xf32, #tpu.memory_space<vmem>>, vector<1x16xf32>
    %c0_211 = arith.constant 0 : index
    %c0_212 = arith.constant 0 : index
    %654 = vector.load %arg17[%c0_211, %c0_212] : memref<1x16xf32, #tpu.memory_space<vmem>>, vector<1x16xf32>
    %cst_213 = arith.constant dense<0.000000e+00> : vector<16xf32>
    %655 = vector.multi_reduction <add>, %652, %cst_213 [0] : vector<8x16xf32> to vector<16xf32>
    %656 = vector.shape_cast %655 : vector<16xf32> to vector<1x16xf32>
    %cst_214 = arith.constant 8.000000e+00 : f32
    %657 = vector.broadcast %cst_214 : f32 to vector<1x16xf32>
    %658 = arith.divf %656, %657 : vector<1x16xf32>
    %659 = vector.broadcast %658 : vector<1x16xf32> to vector<8x16xf32>
    %660 = arith.subf %652, %659 : vector<8x16xf32>
    %661 = arith.mulf %660, %660 : vector<8x16xf32>
    %cst_215 = arith.constant dense<0.000000e+00> : vector<16xf32>
    %662 = vector.multi_reduction <add>, %661, %cst_215 [0] : vector<8x16xf32> to vector<16xf32>
    %663 = vector.shape_cast %662 : vector<16xf32> to vector<1x16xf32>
    %cst_216 = arith.constant 8.000000e+00 : f32
    %664 = vector.broadcast %cst_216 : f32 to vector<1x16xf32>
    %665 = arith.divf %663, %664 : vector<1x16xf32>
    %666 = vector.broadcast %658 : vector<1x16xf32> to vector<8x16xf32>
    %667 = arith.subf %652, %666 : vector<8x16xf32>
    %cst_217 = arith.constant 9.99999974E-6 : f32
    %668 = vector.broadcast %cst_217 : f32 to vector<1x16xf32>
    %669 = arith.addf %665, %668 : vector<1x16xf32>
    %670 = math.rsqrt %669 : vector<1x16xf32>
    %671 = vector.broadcast %670 : vector<1x16xf32> to vector<8x16xf32>
    %672 = arith.mulf %667, %671 : vector<8x16xf32>
    %673 = vector.broadcast %653 : vector<1x16xf32> to vector<8x16xf32>
    %674 = arith.mulf %672, %673 : vector<8x16xf32>
    %675 = vector.broadcast %654 : vector<1x16xf32> to vector<8x16xf32>
    %676 = arith.addf %674, %675 : vector<8x16xf32>
    %cst_218 = arith.constant 0.000000e+00 : f32
    %677 = vector.broadcast %cst_218 : f32 to vector<8x16xf32>
    %678 = arith.maximumf %676, %677 : vector<8x16xf32>
    %c0_219 = arith.constant 0 : index
    %c0_220 = arith.constant 0 : index
    %679 = vector.load %arg18[%c0_219, %c0_220] : memref<16x256xf32, #tpu.memory_space<vmem>>, vector<16x256xf32>
    %cst_221 = arith.constant dense<0.000000e+00> : vector<8x256xf32>
    %680 = tpu.matmul %678, %679, %cst_221 {dimension_numbers = #tpu.dot_dimension_numbers<[1], [0], [0], [1], [0, 0, 1, 1], [], []>} : vector<8x16xf32>, vector<16x256xf32>, vector<8x256xf32> -> vector<8x256xf32>
    %c0_222 = arith.constant 0 : index
    %c0_223 = arith.constant 0 : index
    %681 = vector.load %arg19[%c0_222, %c0_223] : memref<1x256xf32, #tpu.memory_space<vmem>>, vector<1x256xf32>
    %682 = vector.broadcast %681 : vector<1x256xf32> to vector<8x256xf32>
    %683 = arith.addf %680, %682 : vector<8x256xf32>
    %c0_224 = arith.constant 0 : index
    %c0_225 = arith.constant 0 : index
    %684 = vector.load %arg20[%c0_224, %c0_225] : memref<1x256xf32, #tpu.memory_space<vmem>>, vector<1x256xf32>
    %c0_226 = arith.constant 0 : index
    %c0_227 = arith.constant 0 : index
    %685 = vector.load %arg21[%c0_226, %c0_227] : memref<1x256xf32, #tpu.memory_space<vmem>>, vector<1x256xf32>
    %cst_228 = arith.constant dense<0.000000e+00> : vector<256xf32>
    %686 = vector.multi_reduction <add>, %683, %cst_228 [0] : vector<8x256xf32> to vector<256xf32>
    %687 = vector.shape_cast %686 : vector<256xf32> to vector<1x256xf32>
    %cst_229 = arith.constant 8.000000e+00 : f32
    %688 = vector.broadcast %cst_229 : f32 to vector<1x256xf32>
    %689 = arith.divf %687, %688 : vector<1x256xf32>
    %690 = vector.broadcast %689 : vector<1x256xf32> to vector<8x256xf32>
    %691 = arith.subf %683, %690 : vector<8x256xf32>
    %692 = arith.mulf %691, %691 : vector<8x256xf32>
    %cst_230 = arith.constant dense<0.000000e+00> : vector<256xf32>
    %693 = vector.multi_reduction <add>, %692, %cst_230 [0] : vector<8x256xf32> to vector<256xf32>
    %694 = vector.shape_cast %693 : vector<256xf32> to vector<1x256xf32>
    %cst_231 = arith.constant 8.000000e+00 : f32
    %695 = vector.broadcast %cst_231 : f32 to vector<1x256xf32>
    %696 = arith.divf %694, %695 : vector<1x256xf32>
    %697 = vector.broadcast %689 : vector<1x256xf32> to vector<8x256xf32>
    %698 = arith.subf %683, %697 : vector<8x256xf32>
    %cst_232 = arith.constant 9.99999974E-6 : f32
    %699 = vector.broadcast %cst_232 : f32 to vector<1x256xf32>
    %700 = arith.addf %696, %699 : vector<1x256xf32>
    %701 = math.rsqrt %700 : vector<1x256xf32>
    %702 = vector.broadcast %701 : vector<1x256xf32> to vector<8x256xf32>
    %703 = arith.mulf %698, %702 : vector<8x256xf32>
    %704 = vector.broadcast %684 : vector<1x256xf32> to vector<8x256xf32>
    %705 = arith.mulf %703, %704 : vector<8x256xf32>
    %706 = vector.broadcast %685 : vector<1x256xf32> to vector<8x256xf32>
    %707 = arith.addf %705, %706 : vector<8x256xf32>
    %cst_233 = arith.constant 0.000000e+00 : f32
    %708 = vector.broadcast %cst_233 : f32 to vector<8x256xf32>
    %709 = arith.maximumf %707, %708 : vector<8x256xf32>
    %c0_234 = arith.constant 0 : index
    %c0_235 = arith.constant 0 : index
    %710 = vector.load %arg22[%c0_234, %c0_235] : memref<256x256xf32, #tpu.memory_space<vmem>>, vector<256x256xf32>
    %cst_236 = arith.constant dense<0.000000e+00> : vector<8x256xf32>
    %711 = tpu.matmul %709, %710, %cst_236 {dimension_numbers = #tpu.dot_dimension_numbers<[1], [0], [0], [1], [0, 0, 1, 1], [], []>} : vector<8x256xf32>, vector<256x256xf32>, vector<8x256xf32> -> vector<8x256xf32>
    %c0_237 = arith.constant 0 : index
    %c0_238 = arith.constant 0 : index
    %712 = vector.load %arg23[%c0_237, %c0_238] : memref<1x256xf32, #tpu.memory_space<vmem>>, vector<1x256xf32>
    %713 = vector.broadcast %712 : vector<1x256xf32> to vector<8x256xf32>
    %714 = arith.addf %711, %713 : vector<8x256xf32>
    %c0_239 = arith.constant 0 : index
    %c0_240 = arith.constant 0 : index
    %715 = vector.load %arg20[%c0_239, %c0_240] : memref<1x256xf32, #tpu.memory_space<vmem>>, vector<1x256xf32>
    %c0_241 = arith.constant 0 : index
    %c0_242 = arith.constant 0 : index
    %716 = vector.load %arg21[%c0_241, %c0_242] : memref<1x256xf32, #tpu.memory_space<vmem>>, vector<1x256xf32>
    %cst_243 = arith.constant dense<0.000000e+00> : vector<256xf32>
    %717 = vector.multi_reduction <add>, %714, %cst_243 [0] : vector<8x256xf32> to vector<256xf32>
    %718 = vector.shape_cast %717 : vector<256xf32> to vector<1x256xf32>
    %cst_244 = arith.constant 8.000000e+00 : f32
    %719 = vector.broadcast %cst_244 : f32 to vector<1x256xf32>
    %720 = arith.divf %718, %719 : vector<1x256xf32>
    %721 = vector.broadcast %720 : vector<1x256xf32> to vector<8x256xf32>
    %722 = arith.subf %714, %721 : vector<8x256xf32>
    %723 = arith.mulf %722, %722 : vector<8x256xf32>
    %cst_245 = arith.constant dense<0.000000e+00> : vector<256xf32>
    %724 = vector.multi_reduction <add>, %723, %cst_245 [0] : vector<8x256xf32> to vector<256xf32>
    %725 = vector.shape_cast %724 : vector<256xf32> to vector<1x256xf32>
    %cst_246 = arith.constant 8.000000e+00 : f32
    %726 = vector.broadcast %cst_246 : f32 to vector<1x256xf32>
    %727 = arith.divf %725, %726 : vector<1x256xf32>
    %728 = vector.broadcast %720 : vector<1x256xf32> to vector<8x256xf32>
    %729 = arith.subf %714, %728 : vector<8x256xf32>
    %cst_247 = arith.constant 9.99999974E-6 : f32
    %730 = vector.broadcast %cst_247 : f32 to vector<1x256xf32>
    %731 = arith.addf %727, %730 : vector<1x256xf32>
    %732 = math.rsqrt %731 : vector<1x256xf32>
    %733 = vector.broadcast %732 : vector<1x256xf32> to vector<8x256xf32>
    %734 = arith.mulf %729, %733 : vector<8x256xf32>
    %735 = vector.broadcast %715 : vector<1x256xf32> to vector<8x256xf32>
    %736 = arith.mulf %734, %735 : vector<8x256xf32>
    %737 = vector.broadcast %716 : vector<1x256xf32> to vector<8x256xf32>
    %738 = arith.addf %736, %737 : vector<8x256xf32>
    %cst_248 = arith.constant 0.000000e+00 : f32
    %739 = vector.broadcast %cst_248 : f32 to vector<8x256xf32>
    %740 = arith.maximumf %738, %739 : vector<8x256xf32>
    %c0_249 = arith.constant 0 : index
    %c0_250 = arith.constant 0 : index
    %741 = vector.load %arg24[%c0_249, %c0_250] : memref<256x64xf32, #tpu.memory_space<vmem>>, vector<256x64xf32>
    %cst_251 = arith.constant dense<0.000000e+00> : vector<8x64xf32>
    %742 = tpu.matmul %740, %741, %cst_251 {dimension_numbers = #tpu.dot_dimension_numbers<[1], [0], [0], [1], [0, 0, 1, 1], [], []>} : vector<8x256xf32>, vector<256x64xf32>, vector<8x64xf32> -> vector<8x64xf32>
    %c0_252 = arith.constant 0 : index
    %c0_253 = arith.constant 0 : index
    %743 = vector.load %arg25[%c0_252, %c0_253] : memref<1x64xf32, #tpu.memory_space<vmem>>, vector<1x64xf32>
    %744 = vector.broadcast %743 : vector<1x64xf32> to vector<8x64xf32>
    %745 = arith.addf %742, %744 : vector<8x64xf32>
    %c0_254 = arith.constant 0 : index
    %c0_255 = arith.constant 0 : index
    %746 = vector.load %arg26[%c0_254, %c0_255] : memref<1x64xf32, #tpu.memory_space<vmem>>, vector<1x64xf32>
    %c0_256 = arith.constant 0 : index
    %c0_257 = arith.constant 0 : index
    %747 = vector.load %arg27[%c0_256, %c0_257] : memref<1x64xf32, #tpu.memory_space<vmem>>, vector<1x64xf32>
    %cst_258 = arith.constant dense<0.000000e+00> : vector<64xf32>
    %748 = vector.multi_reduction <add>, %745, %cst_258 [0] : vector<8x64xf32> to vector<64xf32>
    %749 = vector.shape_cast %748 : vector<64xf32> to vector<1x64xf32>
    %cst_259 = arith.constant 8.000000e+00 : f32
    %750 = vector.broadcast %cst_259 : f32 to vector<1x64xf32>
    %751 = arith.divf %749, %750 : vector<1x64xf32>
    %752 = vector.broadcast %751 : vector<1x64xf32> to vector<8x64xf32>
    %753 = arith.subf %745, %752 : vector<8x64xf32>
    %754 = arith.mulf %753, %753 : vector<8x64xf32>
    %cst_260 = arith.constant dense<0.000000e+00> : vector<64xf32>
    %755 = vector.multi_reduction <add>, %754, %cst_260 [0] : vector<8x64xf32> to vector<64xf32>
    %756 = vector.shape_cast %755 : vector<64xf32> to vector<1x64xf32>
    %cst_261 = arith.constant 8.000000e+00 : f32
    %757 = vector.broadcast %cst_261 : f32 to vector<1x64xf32>
    %758 = arith.divf %756, %757 : vector<1x64xf32>
    %759 = vector.broadcast %751 : vector<1x64xf32> to vector<8x64xf32>
    %760 = arith.subf %745, %759 : vector<8x64xf32>
    %cst_262 = arith.constant 9.99999974E-6 : f32
    %761 = vector.broadcast %cst_262 : f32 to vector<1x64xf32>
    %762 = arith.addf %758, %761 : vector<1x64xf32>
    %763 = math.rsqrt %762 : vector<1x64xf32>
    %764 = vector.broadcast %763 : vector<1x64xf32> to vector<8x64xf32>
    %765 = arith.mulf %760, %764 : vector<8x64xf32>
    %766 = vector.broadcast %746 : vector<1x64xf32> to vector<8x64xf32>
    %767 = arith.mulf %765, %766 : vector<8x64xf32>
    %768 = vector.broadcast %747 : vector<1x64xf32> to vector<8x64xf32>
    %769 = arith.addf %767, %768 : vector<8x64xf32>
    %cst_263 = arith.constant 0.000000e+00 : f32
    %770 = vector.broadcast %cst_263 : f32 to vector<8x64xf32>
    %771 = arith.maximumf %769, %770 : vector<8x64xf32>
    %c0_264 = arith.constant 0 : index
    %c0_265 = arith.constant 0 : index
    %772 = vector.load %arg13[%c0_264, %c0_265] : memref<1x32xf32, #tpu.memory_space<vmem>>, vector<1x32xf32>
    %c0_266 = arith.constant 0 : index
    %c0_267 = arith.constant 0 : index
    %773 = vector.load %arg14[%c0_266, %c0_267] : memref<1x32xf32, #tpu.memory_space<vmem>>, vector<1x32xf32>
    %cst_268 = arith.constant dense<0.000000e+00> : vector<32xf32>
    %774 = vector.multi_reduction <add>, %318, %cst_268 [0] : vector<12x32xf32> to vector<32xf32>
    %775 = vector.shape_cast %774 : vector<32xf32> to vector<1x32xf32>
    %cst_269 = arith.constant 1.200000e+01 : f32
    %776 = vector.broadcast %cst_269 : f32 to vector<1x32xf32>
    %777 = arith.divf %775, %776 : vector<1x32xf32>
    %778 = vector.broadcast %777 : vector<1x32xf32> to vector<12x32xf32>
    %779 = arith.subf %318, %778 : vector<12x32xf32>
    %780 = arith.mulf %779, %779 : vector<12x32xf32>
    %cst_270 = arith.constant dense<0.000000e+00> : vector<32xf32>
    %781 = vector.multi_reduction <add>, %780, %cst_270 [0] : vector<12x32xf32> to vector<32xf32>
    %782 = vector.shape_cast %781 : vector<32xf32> to vector<1x32xf32>
    %cst_271 = arith.constant 1.200000e+01 : f32
    %783 = vector.broadcast %cst_271 : f32 to vector<1x32xf32>
    %784 = arith.divf %782, %783 : vector<1x32xf32>
    %785 = vector.broadcast %777 : vector<1x32xf32> to vector<12x32xf32>
    %786 = arith.subf %318, %785 : vector<12x32xf32>
    %cst_272 = arith.constant 9.99999974E-6 : f32
    %787 = vector.broadcast %cst_272 : f32 to vector<1x32xf32>
    %788 = arith.addf %784, %787 : vector<1x32xf32>
    %789 = math.rsqrt %788 : vector<1x32xf32>
    %790 = vector.broadcast %789 : vector<1x32xf32> to vector<12x32xf32>
    %791 = arith.mulf %786, %790 : vector<12x32xf32>
    %792 = vector.broadcast %772 : vector<1x32xf32> to vector<12x32xf32>
    %793 = arith.mulf %791, %792 : vector<12x32xf32>
    %794 = vector.broadcast %773 : vector<1x32xf32> to vector<12x32xf32>
    %795 = arith.addf %793, %794 : vector<12x32xf32>
    %cst_273 = arith.constant 0.000000e+00 : f32
    %796 = vector.broadcast %cst_273 : f32 to vector<12x32xf32>
    %797 = arith.maximumf %795, %796 : vector<12x32xf32>
    %c0_274 = arith.constant 0 : index
    %c0_275 = arith.constant 0 : index
    %798 = vector.load %arg15[%c0_274, %c0_275] : memref<32x16xf32, #tpu.memory_space<vmem>>, vector<32x16xf32>
    %cst_276 = arith.constant dense<0.000000e+00> : vector<12x16xf32>
    %799 = tpu.matmul %797, %798, %cst_276 {dimension_numbers = #tpu.dot_dimension_numbers<[1], [0], [0], [1], [0, 0, 1, 1], [], []>} : vector<12x32xf32>, vector<32x16xf32>, vector<12x16xf32> -> vector<12x16xf32>
    %c0_277 = arith.constant 0 : index
    %c0_278 = arith.constant 0 : index
    %800 = vector.load %arg16[%c0_277, %c0_278] : memref<1x16xf32, #tpu.memory_space<vmem>>, vector<1x16xf32>
    %c0_279 = arith.constant 0 : index
    %c0_280 = arith.constant 0 : index
    %801 = vector.load %arg17[%c0_279, %c0_280] : memref<1x16xf32, #tpu.memory_space<vmem>>, vector<1x16xf32>
    %cst_281 = arith.constant dense<0.000000e+00> : vector<16xf32>
    %802 = vector.multi_reduction <add>, %799, %cst_281 [0] : vector<12x16xf32> to vector<16xf32>
    %803 = vector.shape_cast %802 : vector<16xf32> to vector<1x16xf32>
    %cst_282 = arith.constant 1.200000e+01 : f32
    %804 = vector.broadcast %cst_282 : f32 to vector<1x16xf32>
    %805 = arith.divf %803, %804 : vector<1x16xf32>
    %806 = vector.broadcast %805 : vector<1x16xf32> to vector<12x16xf32>
    %807 = arith.subf %799, %806 : vector<12x16xf32>
    %808 = arith.mulf %807, %807 : vector<12x16xf32>
    %cst_283 = arith.constant dense<0.000000e+00> : vector<16xf32>
    %809 = vector.multi_reduction <add>, %808, %cst_283 [0] : vector<12x16xf32> to vector<16xf32>
    %810 = vector.shape_cast %809 : vector<16xf32> to vector<1x16xf32>
    %cst_284 = arith.constant 1.200000e+01 : f32
    %811 = vector.broadcast %cst_284 : f32 to vector<1x16xf32>
    %812 = arith.divf %810, %811 : vector<1x16xf32>
    %813 = vector.broadcast %805 : vector<1x16xf32> to vector<12x16xf32>
    %814 = arith.subf %799, %813 : vector<12x16xf32>
    %cst_285 = arith.constant 9.99999974E-6 : f32
    %815 = vector.broadcast %cst_285 : f32 to vector<1x16xf32>
    %816 = arith.addf %812, %815 : vector<1x16xf32>
    %817 = math.rsqrt %816 : vector<1x16xf32>
    %818 = vector.broadcast %817 : vector<1x16xf32> to vector<12x16xf32>
    %819 = arith.mulf %814, %818 : vector<12x16xf32>
    %820 = vector.broadcast %800 : vector<1x16xf32> to vector<12x16xf32>
    %821 = arith.mulf %819, %820 : vector<12x16xf32>
    %822 = vector.broadcast %801 : vector<1x16xf32> to vector<12x16xf32>
    %823 = arith.addf %821, %822 : vector<12x16xf32>
    %cst_286 = arith.constant 0.000000e+00 : f32
    %824 = vector.broadcast %cst_286 : f32 to vector<12x16xf32>
    %825 = arith.maximumf %823, %824 : vector<12x16xf32>
    %c0_287 = arith.constant 0 : index
    %c0_288 = arith.constant 0 : index
    %826 = vector.load %arg18[%c0_287, %c0_288] : memref<16x256xf32, #tpu.memory_space<vmem>>, vector<16x256xf32>
    %cst_289 = arith.constant dense<0.000000e+00> : vector<12x256xf32>
    %827 = tpu.matmul %825, %826, %cst_289 {dimension_numbers = #tpu.dot_dimension_numbers<[1], [0], [0], [1], [0, 0, 1, 1], [], []>} : vector<12x16xf32>, vector<16x256xf32>, vector<12x256xf32> -> vector<12x256xf32>
    %c0_290 = arith.constant 0 : index
    %c0_291 = arith.constant 0 : index
    %828 = vector.load %arg19[%c0_290, %c0_291] : memref<1x256xf32, #tpu.memory_space<vmem>>, vector<1x256xf32>
    %829 = vector.broadcast %828 : vector<1x256xf32> to vector<12x256xf32>
    %830 = arith.addf %827, %829 : vector<12x256xf32>
    %c0_292 = arith.constant 0 : index
    %c0_293 = arith.constant 0 : index
    %831 = vector.load %arg20[%c0_292, %c0_293] : memref<1x256xf32, #tpu.memory_space<vmem>>, vector<1x256xf32>
    %c0_294 = arith.constant 0 : index
    %c0_295 = arith.constant 0 : index
    %832 = vector.load %arg21[%c0_294, %c0_295] : memref<1x256xf32, #tpu.memory_space<vmem>>, vector<1x256xf32>
    %cst_296 = arith.constant dense<0.000000e+00> : vector<256xf32>
    %833 = vector.multi_reduction <add>, %830, %cst_296 [0] : vector<12x256xf32> to vector<256xf32>
    %834 = vector.shape_cast %833 : vector<256xf32> to vector<1x256xf32>
    %cst_297 = arith.constant 1.200000e+01 : f32
    %835 = vector.broadcast %cst_297 : f32 to vector<1x256xf32>
    %836 = arith.divf %834, %835 : vector<1x256xf32>
    %837 = vector.broadcast %836 : vector<1x256xf32> to vector<12x256xf32>
    %838 = arith.subf %830, %837 : vector<12x256xf32>
    %839 = arith.mulf %838, %838 : vector<12x256xf32>
    %cst_298 = arith.constant dense<0.000000e+00> : vector<256xf32>
    %840 = vector.multi_reduction <add>, %839, %cst_298 [0] : vector<12x256xf32> to vector<256xf32>
    %841 = vector.shape_cast %840 : vector<256xf32> to vector<1x256xf32>
    %cst_299 = arith.constant 1.200000e+01 : f32
    %842 = vector.broadcast %cst_299 : f32 to vector<1x256xf32>
    %843 = arith.divf %841, %842 : vector<1x256xf32>
    %844 = vector.broadcast %836 : vector<1x256xf32> to vector<12x256xf32>
    %845 = arith.subf %830, %844 : vector<12x256xf32>
    %cst_300 = arith.constant 9.99999974E-6 : f32
    %846 = vector.broadcast %cst_300 : f32 to vector<1x256xf32>
    %847 = arith.addf %843, %846 : vector<1x256xf32>
    %848 = math.rsqrt %847 : vector<1x256xf32>
    %849 = vector.broadcast %848 : vector<1x256xf32> to vector<12x256xf32>
    %850 = arith.mulf %845, %849 : vector<12x256xf32>
    %851 = vector.broadcast %831 : vector<1x256xf32> to vector<12x256xf32>
    %852 = arith.mulf %850, %851 : vector<12x256xf32>
    %853 = vector.broadcast %832 : vector<1x256xf32> to vector<12x256xf32>
    %854 = arith.addf %852, %853 : vector<12x256xf32>
    %cst_301 = arith.constant 0.000000e+00 : f32
    %855 = vector.broadcast %cst_301 : f32 to vector<12x256xf32>
    %856 = arith.maximumf %854, %855 : vector<12x256xf32>
    %c0_302 = arith.constant 0 : index
    %c0_303 = arith.constant 0 : index
    %857 = vector.load %arg22[%c0_302, %c0_303] : memref<256x256xf32, #tpu.memory_space<vmem>>, vector<256x256xf32>
    %cst_304 = arith.constant dense<0.000000e+00> : vector<12x256xf32>
    %858 = tpu.matmul %856, %857, %cst_304 {dimension_numbers = #tpu.dot_dimension_numbers<[1], [0], [0], [1], [0, 0, 1, 1], [], []>} : vector<12x256xf32>, vector<256x256xf32>, vector<12x256xf32> -> vector<12x256xf32>
    %c0_305 = arith.constant 0 : index
    %c0_306 = arith.constant 0 : index
    %859 = vector.load %arg23[%c0_305, %c0_306] : memref<1x256xf32, #tpu.memory_space<vmem>>, vector<1x256xf32>
    %860 = vector.broadcast %859 : vector<1x256xf32> to vector<12x256xf32>
    %861 = arith.addf %858, %860 : vector<12x256xf32>
    %c0_307 = arith.constant 0 : index
    %c0_308 = arith.constant 0 : index
    %862 = vector.load %arg20[%c0_307, %c0_308] : memref<1x256xf32, #tpu.memory_space<vmem>>, vector<1x256xf32>
    %c0_309 = arith.constant 0 : index
    %c0_310 = arith.constant 0 : index
    %863 = vector.load %arg21[%c0_309, %c0_310] : memref<1x256xf32, #tpu.memory_space<vmem>>, vector<1x256xf32>
    %cst_311 = arith.constant dense<0.000000e+00> : vector<256xf32>
    %864 = vector.multi_reduction <add>, %861, %cst_311 [0] : vector<12x256xf32> to vector<256xf32>
    %865 = vector.shape_cast %864 : vector<256xf32> to vector<1x256xf32>
    %cst_312 = arith.constant 1.200000e+01 : f32
    %866 = vector.broadcast %cst_312 : f32 to vector<1x256xf32>
    %867 = arith.divf %865, %866 : vector<1x256xf32>
    %868 = vector.broadcast %867 : vector<1x256xf32> to vector<12x256xf32>
    %869 = arith.subf %861, %868 : vector<12x256xf32>
    %870 = arith.mulf %869, %869 : vector<12x256xf32>
    %cst_313 = arith.constant dense<0.000000e+00> : vector<256xf32>
    %871 = vector.multi_reduction <add>, %870, %cst_313 [0] : vector<12x256xf32> to vector<256xf32>
    %872 = vector.shape_cast %871 : vector<256xf32> to vector<1x256xf32>
    %cst_314 = arith.constant 1.200000e+01 : f32
    %873 = vector.broadcast %cst_314 : f32 to vector<1x256xf32>
    %874 = arith.divf %872, %873 : vector<1x256xf32>
    %875 = vector.broadcast %867 : vector<1x256xf32> to vector<12x256xf32>
    %876 = arith.subf %861, %875 : vector<12x256xf32>
    %cst_315 = arith.constant 9.99999974E-6 : f32
    %877 = vector.broadcast %cst_315 : f32 to vector<1x256xf32>
    %878 = arith.addf %874, %877 : vector<1x256xf32>
    %879 = math.rsqrt %878 : vector<1x256xf32>
    %880 = vector.broadcast %879 : vector<1x256xf32> to vector<12x256xf32>
    %881 = arith.mulf %876, %880 : vector<12x256xf32>
    %882 = vector.broadcast %862 : vector<1x256xf32> to vector<12x256xf32>
    %883 = arith.mulf %881, %882 : vector<12x256xf32>
    %884 = vector.broadcast %863 : vector<1x256xf32> to vector<12x256xf32>
    %885 = arith.addf %883, %884 : vector<12x256xf32>
    %cst_316 = arith.constant 0.000000e+00 : f32
    %886 = vector.broadcast %cst_316 : f32 to vector<12x256xf32>
    %887 = arith.maximumf %885, %886 : vector<12x256xf32>
    %c0_317 = arith.constant 0 : index
    %c0_318 = arith.constant 0 : index
    %888 = vector.load %arg24[%c0_317, %c0_318] : memref<256x64xf32, #tpu.memory_space<vmem>>, vector<256x64xf32>
    %cst_319 = arith.constant dense<0.000000e+00> : vector<12x64xf32>
    %889 = tpu.matmul %887, %888, %cst_319 {dimension_numbers = #tpu.dot_dimension_numbers<[1], [0], [0], [1], [0, 0, 1, 1], [], []>} : vector<12x256xf32>, vector<256x64xf32>, vector<12x64xf32> -> vector<12x64xf32>
    %c0_320 = arith.constant 0 : index
    %c0_321 = arith.constant 0 : index
    %890 = vector.load %arg25[%c0_320, %c0_321] : memref<1x64xf32, #tpu.memory_space<vmem>>, vector<1x64xf32>
    %891 = vector.broadcast %890 : vector<1x64xf32> to vector<12x64xf32>
    %892 = arith.addf %889, %891 : vector<12x64xf32>
    %c0_322 = arith.constant 0 : index
    %c0_323 = arith.constant 0 : index
    %893 = vector.load %arg26[%c0_322, %c0_323] : memref<1x64xf32, #tpu.memory_space<vmem>>, vector<1x64xf32>
    %c0_324 = arith.constant 0 : index
    %c0_325 = arith.constant 0 : index
    %894 = vector.load %arg27[%c0_324, %c0_325] : memref<1x64xf32, #tpu.memory_space<vmem>>, vector<1x64xf32>
    %cst_326 = arith.constant dense<0.000000e+00> : vector<64xf32>
    %895 = vector.multi_reduction <add>, %892, %cst_326 [0] : vector<12x64xf32> to vector<64xf32>
    %896 = vector.shape_cast %895 : vector<64xf32> to vector<1x64xf32>
    %cst_327 = arith.constant 1.200000e+01 : f32
    %897 = vector.broadcast %cst_327 : f32 to vector<1x64xf32>
    %898 = arith.divf %896, %897 : vector<1x64xf32>
    %899 = vector.broadcast %898 : vector<1x64xf32> to vector<12x64xf32>
    %900 = arith.subf %892, %899 : vector<12x64xf32>
    %901 = arith.mulf %900, %900 : vector<12x64xf32>
    %cst_328 = arith.constant dense<0.000000e+00> : vector<64xf32>
    %902 = vector.multi_reduction <add>, %901, %cst_328 [0] : vector<12x64xf32> to vector<64xf32>
    %903 = vector.shape_cast %902 : vector<64xf32> to vector<1x64xf32>
    %cst_329 = arith.constant 1.200000e+01 : f32
    %904 = vector.broadcast %cst_329 : f32 to vector<1x64xf32>
    %905 = arith.divf %903, %904 : vector<1x64xf32>
    %906 = vector.broadcast %898 : vector<1x64xf32> to vector<12x64xf32>
    %907 = arith.subf %892, %906 : vector<12x64xf32>
    %cst_330 = arith.constant 9.99999974E-6 : f32
    %908 = vector.broadcast %cst_330 : f32 to vector<1x64xf32>
    %909 = arith.addf %905, %908 : vector<1x64xf32>
    %910 = math.rsqrt %909 : vector<1x64xf32>
    %911 = vector.broadcast %910 : vector<1x64xf32> to vector<12x64xf32>
    %912 = arith.mulf %907, %911 : vector<12x64xf32>
    %913 = vector.broadcast %893 : vector<1x64xf32> to vector<12x64xf32>
    %914 = arith.mulf %912, %913 : vector<12x64xf32>
    %915 = vector.broadcast %894 : vector<1x64xf32> to vector<12x64xf32>
    %916 = arith.addf %914, %915 : vector<12x64xf32>
    %cst_331 = arith.constant 0.000000e+00 : f32
    %917 = vector.broadcast %cst_331 : f32 to vector<12x64xf32>
    %918 = arith.maximumf %916, %917 : vector<12x64xf32>
    %c0_332 = arith.constant 0 : index
    %c0_333 = arith.constant 0 : index
    %919 = vector.load %arg28[%c0_332, %c0_333] : memref<6x8xf32, #tpu.memory_space<vmem>>, vector<6x8xf32>
    %cst_334 = arith.constant dense<0.000000e+00> : vector<6x64xf32>
    %920 = tpu.matmul %919, %771, %cst_334 {dimension_numbers = #tpu.dot_dimension_numbers<[1], [0], [0], [1], [0, 0, 1, 1], [], []>} : vector<6x8xf32>, vector<8x64xf32>, vector<6x64xf32> -> vector<6x64xf32>
    %c0_335 = arith.constant 0 : index
    %c0_336 = arith.constant 0 : index
    %921 = vector.load %arg29[%c0_335, %c0_336] : memref<6x12xf32, #tpu.memory_space<vmem>>, vector<6x12xf32>
    %cst_337 = arith.constant dense<0.000000e+00> : vector<6x64xf32>
    %922 = tpu.matmul %921, %918, %cst_337 {dimension_numbers = #tpu.dot_dimension_numbers<[1], [0], [0], [1], [0, 0, 1, 1], [], []>} : vector<6x12xf32>, vector<12x64xf32>, vector<6x64xf32> -> vector<6x64xf32>
    %923 = arith.mulf %920, %922 : vector<6x64xf32>
    %cst_338 = arith.constant dense<0.000000e+00> : vector<6xf32>
    %924 = vector.multi_reduction <add>, %923, %cst_338 [1] : vector<6x64xf32> to vector<6xf32>
    %925 = vector.shape_cast %924 : vector<6xf32> to vector<6x1xf32>
    %cst_339 = arith.constant 0.000000e+00 : f32
    %926 = vector.broadcast %cst_339 : f32 to vector<6x1xf32>
    %927 = arith.subf %926, %925 : vector<6x1xf32>
    %928 = math.exp %927 : vector<6x1xf32>
    %cst_340 = arith.constant 1.000000e+00 : f32
    %929 = vector.broadcast %cst_340 : f32 to vector<6x1xf32>
    %930 = arith.addf %929, %928 : vector<6x1xf32>
    %cst_341 = arith.constant 1.000000e+00 : f32
    %931 = vector.broadcast %cst_341 : f32 to vector<6x1xf32>
    %932 = arith.divf %931, %930 : vector<6x1xf32>
    %c0_342 = arith.constant 0 : index
    %c0_343 = arith.constant 0 : index
    %933 = vector.load %arg30[%c0_342, %c0_343] : memref<6x1xf32, #tpu.memory_space<vmem>>, vector<6x1xf32>
    tpu.vector_store %arg30[%c0_342, %c0_343], %932 {strides = array<i32>} : memref<6x1xf32, #tpu.memory_space<vmem>>, vector<6x1xf32>,
    return
  }
}

</mosaic_0001>

<llo_original>
// kernel: model_forward.1
$region0: #{model_forward.1}
  #allocation0 [shape = 'u32[]', space=smem, size = 0x4, offset = 0x4, fixed_abs, tag = 'smem constant byte address 0x4 - core index']
  #allocation1 [shape = 'u32[72,128]{1,0:T(1,128)}', space=vmem, size = 0x9000, scoped, tag = 'internal scratch']
  %s0 = inlined_call_operand.smem [shape: u32[31], index: -1, kind: input, shape index: {}]
  %s1 = sld [smem:[%s0]]
  %s2 = scalar_lea.smem %s0, 1
  %s3 = sld [smem:[%s2]]
  %s4 = scalar_lea.smem %s0, 2
  %s5 = sld [smem:[%s4]]
  %s6 = scalar_lea.smem %s0, 3
  %s7 = sld [smem:[%s6]]
  %s8 = scalar_lea.smem %s0, 4
  %s9 = sld [smem:[%s8]]
  %s10 = scalar_lea.smem %s0, 5
  %s11 = sld [smem:[%s10]]
  %s12 = scalar_lea.smem %s0, 6
  %s13 = sld [smem:[%s12]]
  %s14 = scalar_lea.smem %s0, 7
  %s15 = sld [smem:[%s14]]
  %s16 = scalar_lea.smem %s0, 8
  %s17 = sld [smem:[%s16]]
  %s18 = scalar_lea.smem %s0, 9
  %s19 = sld [smem:[%s18]]
  %s20 = scalar_lea.smem %s0, 10
  %s21 = sld [smem:[%s20]]
  %s22 = scalar_lea.smem %s0, 11
  %s23 = sld [smem:[%s22]]
  %s24 = scalar_lea.smem %s0, 12
  %s25 = sld [smem:[%s24]]
  %s26 = scalar_lea.smem %s0, 13
  %s27 = sld [smem:[%s26]]
  %s28 = scalar_lea.smem %s0, 14
  %s29 = sld [smem:[%s28]]
  %s30 = scalar_lea.smem %s0, 15
  %s31 = sld [smem:[%s30]]
  %s32 = scalar_lea.smem %s0, 16
  %s33 = sld [smem:[%s32]]
  %s34 = scalar_lea.smem %s0, 17
  %s35 = sld [smem:[%s34]]
  %s36 = scalar_lea.smem %s0, 18
  %s37 = sld [smem:[%s36]]
  %s38 = scalar_lea.smem %s0, 19
  %s39 = sld [smem:[%s38]]
  %s40 = scalar_lea.smem %s0, 20
  %s41 = sld [smem:[%s40]]
  %s42 = scalar_lea.smem %s0, 21
  %s43 = sld [smem:[%s42]]
  %s44 = scalar_lea.smem %s0, 22
  %s45 = sld [smem:[%s44]]
  %s46 = scalar_lea.smem %s0, 23
  %s47 = sld [smem:[%s46]]
  %s48 = scalar_lea.smem %s0, 24
  %s49 = sld [smem:[%s48]]
  %s50 = scalar_lea.smem %s0, 25
  %s51 = sld [smem:[%s50]]
  %s52 = scalar_lea.smem %s0, 26
  %s53 = sld [smem:[%s52]]
  %s54 = scalar_lea.smem %s0, 27
  %s55 = sld [smem:[%s54]]
  %s56 = scalar_lea.smem %s0, 28
  %s57 = sld [smem:[%s56]]
  %s58 = scalar_lea.smem %s0, 29
  %s59 = sld [smem:[%s58]]
  %s60 = scalar_lea.smem %s0, 30
  %s61 = sld [smem:[%s60]]
  %s62 = sld [smem:[#allocation0]]
  $region130: #{model_forward.1} parent=0
    _
  %s64 = ssub.s32 1, %s62
  %s65 = scalar_select 0, %s64, %s62
  // Predicated region
  $region2: #{model_forward.1} parent=0 // pred_check
    _
  $region3: #{model_forward.1} parent=0 // pred_check_branch
    %67 = sbr.rel (0) target = $region5
  $region4: #{model_forward.1} parent=0 // pred_region
    _
  $region5: #{model_forward.1} parent=0 // pred_fallthru
    _
  // Predicated region
  $region6: #{model_forward.1} parent=0 // pred_check
    _
  $region7: #{model_forward.1} parent=0 // pred_check_branch
    %69 = sbr.rel (0) target = $region9
  $region8: #{model_forward.1} parent=0 // pred_region
    _
  $region9: #{model_forward.1} parent=0 // pred_fallthru
    _
  // Predicated region
  $region10: #{model_forward.1} parent=0 // pred_check
    _
  $region11: #{model_forward.1} parent=0 // pred_check_branch
    %71 = sbr.rel (0) target = $region13
  $region12: #{model_forward.1} parent=0 // pred_region
    _
  $region13: #{model_forward.1} parent=0 // pred_fallthru
    _
  // Predicated region
  $region14: #{model_forward.1} parent=0 // pred_check
    _
  $region15: #{model_forward.1} parent=0 // pred_check_branch
    %73 = sbr.rel (0) target = $region17
  $region16: #{model_forward.1} parent=0 // pred_region
    _
  $region17: #{model_forward.1} parent=0 // pred_fallthru
    _
  // Predicated region
  $region18: #{model_forward.1} parent=0 // pred_check
    _
  $region19: #{model_forward.1} parent=0 // pred_check_branch
    %75 = sbr.rel (0) target = $region21
  $region20: #{model_forward.1} parent=0 // pred_region
    _
  $region21: #{model_forward.1} parent=0 // pred_fallthru
    _
  // Predicated region
  $region22: #{model_forward.1} parent=0 // pred_check
    _
  $region23: #{model_forward.1} parent=0 // pred_check_branch
    %77 = sbr.rel (0) target = $region25
  $region24: #{model_forward.1} parent=0 // pred_region
    _
  $region25: #{model_forward.1} parent=0 // pred_fallthru
    _
  // Predicated region
  $region26: #{model_forward.1} parent=0 // pred_check
    _
  $region27: #{model_forward.1} parent=0 // pred_check_branch
    %79 = sbr.rel (0) target = $region29
  $region28: #{model_forward.1} parent=0 // pred_region
    _
  $region29: #{model_forward.1} parent=0 // pred_fallthru
    _
  // Predicated region
  $region30: #{model_forward.1} parent=0 // pred_check
    _
  $region31: #{model_forward.1} parent=0 // pred_check_branch
    %81 = sbr.rel (0) target = $region33
  $region32: #{model_forward.1} parent=0 // pred_region
    _
  $region33: #{model_forward.1} parent=0 // pred_fallthru
    _
  // Predicated region
  $region34: #{model_forward.1} parent=0 // pred_check
    _
  $region35: #{model_forward.1} parent=0 // pred_check_branch
    %83 = sbr.rel (0) target = $region37
  $region36: #{model_forward.1} parent=0 // pred_region
    _
  $region37: #{model_forward.1} parent=0 // pred_fallthru
    _
  // Predicated region
  $region38: #{model_forward.1} parent=0 // pred_check
    _
  $region39: #{model_forward.1} parent=0 // pred_check_branch
    %85 = sbr.rel (0) target = $region41
  $region40: #{model_forward.1} parent=0 // pred_region
    _
  $region41: #{model_forward.1} parent=0 // pred_fallthru
    _
  // Predicated region
  $region42: #{model_forward.1} parent=0 // pred_check
    _
  $region43: #{model_forward.1} parent=0 // pred_check_branch
    %87 = sbr.rel (0) target = $region45
  $region44: #{model_forward.1} parent=0 // pred_region
    _
  $region45: #{model_forward.1} parent=0 // pred_fallthru
    _
  // Predicated region
  $region46: #{model_forward.1} parent=0 // pred_check
    _
  $region47: #{model_forward.1} parent=0 // pred_check_branch
    %89 = sbr.rel (0) target = $region49
  $region48: #{model_forward.1} parent=0 // pred_region
    _
  $region49: #{model_forward.1} parent=0 // pred_fallthru
    _
  // Predicated region
  $region50: #{model_forward.1} parent=0 // pred_check
    _
  $region51: #{model_forward.1} parent=0 // pred_check_branch
    %91 = sbr.rel (0) target = $region53
  $region52: #{model_forward.1} parent=0 // pred_region
    _
  $region53: #{model_forward.1} parent=0 // pred_fallthru
    _
  // Predicated region
  $region54: #{model_forward.1} parent=0 // pred_check
    _
  $region55: #{model_forward.1} parent=0 // pred_check_branch
    %93 = sbr.rel (0) target = $region57
  $region56: #{model_forward.1} parent=0 // pred_region
    _
  $region57: #{model_forward.1} parent=0 // pred_fallthru
    _
  // Predicated region
  $region58: #{model_forward.1} parent=0 // pred_check
    _
  $region59: #{model_forward.1} parent=0 // pred_check_branch
    %95 = sbr.rel (0) target = $region61
  $region60: #{model_forward.1} parent=0 // pred_region
    _
  $region61: #{model_forward.1} parent=0 // pred_fallthru
    _
  // Predicated region
  $region62: #{model_forward.1} parent=0 // pred_check
    _
  $region63: #{model_forward.1} parent=0 // pred_check_branch
    %97 = sbr.rel (0) target = $region65
  $region64: #{model_forward.1} parent=0 // pred_region
    _
  $region65: #{model_forward.1} parent=0 // pred_fallthru
    _
  // Predicated region
  $region66: #{model_forward.1} parent=0 // pred_check
    _
  $region67: #{model_forward.1} parent=0 // pred_check_branch
    %99 = sbr.rel (0) target = $region69
  $region68: #{model_forward.1} parent=0 // pred_region
    _
  $region69: #{model_forward.1} parent=0 // pred_fallthru
    _
  // Predicated region
  $region70: #{model_forward.1} parent=0 // pred_check
    _
  $region71: #{model_forward.1} parent=0 // pred_check_branch
    %101 = sbr.rel (0) target = $region73
  $region72: #{model_forward.1} parent=0 // pred_region
    _
  $region73: #{model_forward.1} parent=0 // pred_fallthru
    _
  // Predicated region
  $region74: #{model_forward.1} parent=0 // pred_check
    _
  $region75: #{model_forward.1} parent=0 // pred_check_branch
    %103 = sbr.rel (0) target = $region77
  $region76: #{model_forward.1} parent=0 // pred_region
    _
  $region77: #{model_forward.1} parent=0 // pred_fallthru
    _
  // Predicated region
  $region78: #{model_forward.1} parent=0 // pred_check
    _
  $region79: #{model_forward.1} parent=0 // pred_check_branch
    %105 = sbr.rel (0) target = $region81
  $region80: #{model_forward.1} parent=0 // pred_region
    _
  $region81: #{model_forward.1} parent=0 // pred_fallthru
    _
  // Predicated region
  $region82: #{model_forward.1} parent=0 // pred_check
    _
  $region83: #{model_forward.1} parent=0 // pred_check_branch
    %107 = sbr.rel (0) target = $region85
  $region84: #{model_forward.1} parent=0 // pred_region
    _
  $region85: #{model_forward.1} parent=0 // pred_fallthru
    _
  // Predicated region
  $region86: #{model_forward.1} parent=0 // pred_check
    _
  $region87: #{model_forward.1} parent=0 // pred_check_branch
    %109 = sbr.rel (0) target = $region89
  $region88: #{model_forward.1} parent=0 // pred_region
    _
  $region89: #{model_forward.1} parent=0 // pred_fallthru
    _
  // Predicated region
  $region90: #{model_forward.1} parent=0 // pred_check
    _
  $region91: #{model_forward.1} parent=0 // pred_check_branch
    %111 = sbr.rel (0) target = $region93
  $region92: #{model_forward.1} parent=0 // pred_region
    _
  $region93: #{model_forward.1} parent=0 // pred_fallthru
    _
  // Predicated region
  $region94: #{model_forward.1} parent=0 // pred_check
    _
  $region95: #{model_forward.1} parent=0 // pred_check_branch
    %113 = sbr.rel (0) target = $region97
  $region96: #{model_forward.1} parent=0 // pred_region
    _
  $region97: #{model_forward.1} parent=0 // pred_fallthru
    _
  // Predicated region
  $region98: #{model_forward.1} parent=0 // pred_check
    _
  $region99: #{model_forward.1} parent=0 // pred_check_branch
    %115 = sbr.rel (0) target = $region101
  $region100: #{model_forward.1} parent=0 // pred_region
    _
  $region101: #{model_forward.1} parent=0 // pred_fallthru
    _
  // Predicated region
  $region102: #{model_forward.1} parent=0 // pred_check
    _
  $region103: #{model_forward.1} parent=0 // pred_check_branch
    %117 = sbr.rel (0) target = $region105
  $region104: #{model_forward.1} parent=0 // pred_region
    _
  $region105: #{model_forward.1} parent=0 // pred_fallthru
    _
  // Predicated region
  $region106: #{model_forward.1} parent=0 // pred_check
    _
  $region107: #{model_forward.1} parent=0 // pred_check_branch
    %119 = sbr.rel (0) target = $region109
  $region108: #{model_forward.1} parent=0 // pred_region
    _
  $region109: #{model_forward.1} parent=0 // pred_fallthru
    _
  // Predicated region
  $region110: #{model_forward.1} parent=0 // pred_check
    _
  $region111: #{model_forward.1} parent=0 // pred_check_branch
    %121 = sbr.rel (0) target = $region113
  $region112: #{model_forward.1} parent=0 // pred_region
    _
  $region113: #{model_forward.1} parent=0 // pred_fallthru
    _
  // Predicated region
  $region114: #{model_forward.1} parent=0 // pred_check
    _
  $region115: #{model_forward.1} parent=0 // pred_check_branch
    %123 = sbr.rel (0) target = $region117
  $region116: #{model_forward.1} parent=0 // pred_region
    _
  $region117: #{model_forward.1} parent=0 // pred_fallthru
    _
  // Predicated region
  $region118: #{model_forward.1} parent=0 // pred_check
    _
  $region119: #{model_forward.1} parent=0 // pred_check_branch
    %125 = sbr.rel (0) target = $region121
  $region120: #{model_forward.1} parent=0 // pred_region
    _
  $region121: #{model_forward.1} parent=0 // pred_fallthru
    _
  %v126 = vld [vmem:[%s25] sm:$0xff]
  %v127 = vld [vmem:[%s1] sm:$0xff]
  %v128 = vld [vmem:[%s5] sm:$0xff]
  %v129 = vld [vmem:[%s5 + $0x8] sm:$0xff]
  %v130 = vld [vmem:[%s7] sm:$0x1]
  %v132 = vperm.slane %v130, 0
  %vm134 = vcmask 130048
  %v136 = vsel %vm134, %v127, 0
  %138 = vmatpush.msra.mxu0 0.0
  %139 = vmatpush.msra.mxu0 0.0
  %140 = vmatpush.msra.mxu0 0.0
  %141 = vmatpush.msra.mxu0 0.0
  %142 = vmatpush.msra.mxu0 0.0
  %143 = vmatpush.msra.mxu0 0.0
  %144 = vmatpush.msra.mxu0 0.0
  %145 = vmatpush.msra.mxu0 0.0
  %146 = vmatpush.msra.mxu0 0.0
  %147 = vmatpush.msra.mxu0 0.0
  %148 = vmatpush.msra.mxu0 0.0
  %149 = vmatpush.msra.mxu0 0.0
  %150 = vmatpush.msra.mxu0 0.0
  %151 = vmatpush.msra.mxu0 0.0
  %152 = vmatpush.msra.mxu0 %v129
  %153 = vmatpush.msra.mxu0 %v128
  %154 = vmatmul.f32.gmra.mxu0 %v136
  %v155 = vpop.f32.mrf.mxu0
  %v156 = vadd.f32 %v132, %v155
  %157 = vdwg.mxu0
  %v158 = vld [vmem:[%s3] sm:$0xff]
  %v159 = vld [vmem:[%s3 + $0x8] sm:$0xf]
  %v160 = vld [vmem:[%s9] sm:$0xff]
  %v161 = vld [vmem:[%s9 + $0x8] sm:$0xff]
  %v162 = vld [vmem:[%s11] sm:$0x1]
  %v164 = vperm.slane %v162, 0
  %v167 = vsel %vm134, %v158, 0
  %v170 = vsel %vm134, %v159, 0
  %172 = vmatpush.msra.mxu0 0.0
  %173 = vmatpush.msra.mxu0 0.0
  %174 = vmatpush.msra.mxu0 0.0
  %175 = vmatpush.msra.mxu0 0.0
  %176 = vmatpush.msra.mxu0 0.0
  %177 = vmatpush.msra.mxu0 0.0
  %178 = vmatpush.msra.mxu0 0.0
  %179 = vmatpush.msra.mxu0 0.0
  %180 = vmatpush.msra.mxu0 0.0
  %181 = vmatpush.msra.mxu0 0.0
  %182 = vmatpush.msra.mxu0 0.0
  %183 = vmatpush.msra.mxu0 0.0
  %184 = vmatpush.msra.mxu0 0.0
  %185 = vmatpush.msra.mxu0 0.0
  %186 = vmatpush.msra.mxu0 %v161
  %187 = vmatpush.msra.mxu0 %v160
  %188 = vmatmul.f32.gmra.mxu0 %v167
  %v189 = vpop.f32.mrf.mxu0
  %v190 = vadd.f32 %v164, %v189
  %191 = vmatmul.f32.gmra.mxu0 %v170
  %v192 = vpop.f32.mrf.mxu0
  %v193 = vadd.f32 %v164, %v192
  %194 = vdwg.mxu0
  %v195 = vld [vmem:[%s13] sm:$0xff]
  %v196 = vld [vmem:[%s13 + $0x8] sm:$0xff]
  %v197 = vld [vmem:[%s13 + $0x10] sm:$0xff]
  %v198 = vld [vmem:[%s13 + $0x18] sm:$0xff]
  %v199 = vld [vmem:[%s15] sm:$0xff]
  %v200 = vld [vmem:[%s15 + $0x8] sm:$0xff]
  %v201 = vld [vmem:[%s15 + $0x10] sm:$0xff]
  %v202 = vld [vmem:[%s15 + $0x18] sm:$0xff]
  %v203 = vld [vmem:[%s21] sm:$0xff]
  %v204 = vld [vmem:[%s21 + $0x8] sm:$0xf]
  %205 = vxpose.xlu0.b32.start [1/16] %v195, 128
  %206 = vxpose.xlu0.b32.cont [2/16] %v196, 128
  %207 = vxpose.xlu0.b32.cont [3/16] %v197, 128
  %208 = vxpose.xlu0.b32.cont [4/16] %v198, 128
  %209 = vxpose.xlu0.b32.cont [5/16] 0.0, 128
  %210 = vxpose.xlu0.b32.cont [6/16] 0.0, 128
  %211 = vxpose.xlu0.b32.cont [7/16] 0.0, 128
  %212 = vxpose.xlu0.b32.cont [8/16] 0.0, 128
  %213 = vxpose.xlu0.b32.cont [9/16] 0.0, 128
  %214 = vxpose.xlu0.b32.cont [10/16] 0.0, 128
  %215 = vxpose.xlu0.b32.cont [11/16] 0.0, 128
  %216 = vxpose.xlu0.b32.cont [12/16] 0.0, 128
  %217 = vxpose.xlu0.b32.cont [13/16] 0.0, 128
  %218 = vxpose.xlu0.b32.cont [14/16] 0.0, 128
  %219 = vxpose.xlu0.b32.cont [15/16] 0.0, 128
  %220 = vxpose.xlu0.b32.end [16/16] 0.0, 128
  %v221 = vpop.trf.xlu0
  %v222 = vpop.trf.xlu0
  %v223 = vpop.trf.xlu0
  %v224 = vpop.trf.xlu0
  %v225 = vpop.trf.xlu0
  %v226 = vpop.trf.xlu0
  %v227 = vpop.trf.xlu0
  %v228 = vpop.trf.xlu0
  %v229 = vpop.trf.xlu0
  %v230 = vpop.trf.xlu0
  %v231 = vpop.trf.xlu0
  %v232 = vpop.trf.xlu0
  %v233 = vpop.trf.xlu0
  %v234 = vpop.trf.xlu0
  %v235 = vpop.trf.xlu0
  %v236 = vpop.trf.xlu0
  %vm237 = vcmask 261120
  %v239 = vsel %vm237, %v221, 0
  %v242 = vsel %vm237, %v156, 0
  %244 = vmatpush.xpose.msra.mxu0 0.0
  %245 = vmatpush.xpose.msra.mxu0 0.0
  %246 = vmatpush.xpose.msra.mxu0 0.0
  %247 = vmatpush.xpose.msra.mxu0 0.0
  %248 = vmatpush.xpose.msra.mxu0 0.0
  %249 = vmatpush.xpose.msra.mxu0 0.0
  %250 = vmatpush.xpose.msra.mxu0 0.0
  %251 = vmatpush.xpose.msra.mxu0 0.0
  %252 = vmatpush.xpose.msra.mxu0 0.0
  %253 = vmatpush.xpose.msra.mxu0 0.0
  %254 = vmatpush.xpose.msra.mxu0 0.0
  %255 = vmatpush.xpose.msra.mxu0 0.0
  %256 = vmatpush.xpose.msra.mxu0 0.0
  %257 = vmatpush.xpose.msra.mxu0 0.0
  %258 = vmatpush.xpose.msra.mxu0 0.0
  %259 = vmatpush.xpose.msra.mxu0 %v242
  %260 = vmatmul.f32.gmra.mxu0 %v239
  %v261 = vpop.f32.mrf.mxu0
  %v262 = vadd.f32 0.0, %v261
  %263 = vdwg.mxu0
  %v265 = vsel %vm237, %v190, 0
  %v268 = vsel %vm237, %v193, 0
  %270 = vmatpush.msra.mxu0 0.0
  %271 = vmatpush.msra.mxu0 0.0
  %272 = vmatpush.msra.mxu0 0.0
  %273 = vmatpush.msra.mxu0 0.0
  %274 = vmatpush.msra.mxu0 0.0
  %275 = vmatpush.msra.mxu0 0.0
  %276 = vmatpush.msra.mxu0 0.0
  %277 = vmatpush.msra.mxu0 0.0
  %278 = vmatpush.msra.mxu0 0.0
  %279 = vmatpush.msra.mxu0 0.0
  %280 = vmatpush.msra.mxu0 0.0
  %281 = vmatpush.msra.mxu0 0.0
  %282 = vmatpush.msra.mxu0 %v202
  %283 = vmatpush.msra.mxu0 %v201
  %284 = vmatpush.msra.mxu0 %v200
  %285 = vmatpush.msra.mxu0 %v199
  %286 = vmatmul.f32.gmra.mxu0 %v265
  %v287 = vpop.f32.mrf.mxu0
  %v288 = vadd.f32 0.0, %v287
  %289 = vmatmul.f32.gmra.mxu0 %v268
  %v290 = vpop.f32.mrf.mxu0
  %v291 = vadd.f32 0.0, %v290
  %292 = vdwg.mxu0
  %vm293 = vcmp.gt.f32.partialorder %v203, 0.0
  %vm294 = vcmp.gt.f32.partialorder %v204, 0.0
  %296 = vset.pattern.permute.xlu0 0
  %297 = vperm.xlu0 %296, %v288
  %v298 = vpop.permute.xlu0 %297
  %301 = vset.pattern.permute.xlu0 0
  %302 = vperm.xlu0 %301, %v291
  %v303 = vpop.permute.xlu0 %302
  %v305 = vperm.slane %v262, 0
  %v306 = vadd.f32 %v298, %v305
  %v307 = vadd.f32 %v303, %v305
  %vm308 = vcmp.gt.f32.partialorder %v306, 0.0
  %vm309 = vcmp.gt.f32.partialorder %v307, 0.0
  %v310 = vmul.f32 %v306, 0.2
  %v311 = vmul.f32 %v307, 0.2
  %v312 = vsel %vm308, %v306, %v310
  %v313 = vsel %vm309, %v307, %v311
  %v314 = vsel %vm293, %v312, -1e+30
  %v315 = vsel %vm294, %v313, -1e+30
  %vm316 = vcmask 64512
  %v317 = vsel %vm316, %v314, -inf
  %318 = vmax.xlane.f32.xlu0 %v317
  %v319 = vpop.xlane.xlu0 %318
  %vm320 = vcmask 60416
  %v321 = vsel %vm320, %v315, -inf
  %322 = vmax.xlane.f32.xlu0 %v321
  %v323 = vpop.xlane.xlu0 %322
  %v324 = vsub.f32 %v312, %v319
  %v325 = vsub.f32 %v313, %v323
  %v326 = vsel %vm293, %v324, 0.0
  %v327 = vsel %vm294, %v325, 0.0
  %v328 = vmul.f32 %v326, 1.442695
  %v329 = vpow.pop %v328
  %v330 = vmul.f32 %v327, 1.442695
  %v331 = vpow.pop %v330
  %v332 = vmul.f32 %v203, %v329
  %v333 = vmul.f32 %v204, %v331
  %v334 = vsel %vm316, %v332, 0.0
  %335 = vadd.xlane.f32.xlu0 %v334
  %v336 = vpop.xlane.xlu0 %335
  %v337 = vsel %vm320, %v333, 0.0
  %338 = vadd.xlane.f32.xlu0 %v337
  %v339 = vpop.xlane.xlu0 %338
  %vm340 = vcmp.gt.f32.partialorder %v336, 0.0
  %vm341 = vcmp.gt.f32.partialorder %v339, 0.0
  %v342 = vmax.f32 %v336, 1e-30
  %v343 = vmax.f32 %v339, 1e-30
  %v344 = vrcp.pop %v342
  %v345 = vmul.f32 %v342, %v344
  %v346 = vsub.f32 1.0, %v345
  %v347 = vmul.f32 %v344, %v346
  %v348 = vadd.f32 %v344, %v347
  %vm349 = vweird.f32 %v342
  %vm350 = vweird.f32 %v344
  %vm351 = vmor %vm349, %vm350
  %v352 = vsel %vm351, %v344, %v348
  %v353 = vand.u32 2147483647, %v342
  %vm354 = vcmp.eq.f32.partialorder %v353, 8.507059e+37
  %v355 = vand.u32 %v342, 2147483648
  %v356 = vor.u32 1.1754944e-38, %v355
  %v357 = vsel %vm354, %v356, %v352
  %v358 = vmul.f32 %v332, %v357
  %v359 = vrcp.pop %v343
  %v360 = vmul.f32 %v343, %v359
  %v361 = vsub.f32 1.0, %v360
  %v362 = vmul.f32 %v359, %v361
  %v363 = vadd.f32 %v359, %v362
  %vm364 = vweird.f32 %v343
  %vm365 = vweird.f32 %v359
  %vm366 = vmor %vm364, %vm365
  %v367 = vsel %vm366, %v359, %v363
  %v368 = vand.u32 2147483647, %v343
  %vm369 = vcmp.eq.f32.partialorder %v368, 8.507059e+37
  %v370 = vand.u32 %v343, 2147483648
  %v371 = vor.u32 1.1754944e-38, %v370
  %v372 = vsel %vm369, %v371, %v367
  %v373 = vmul.f32 %v333, %v372
  %v374 = vsel %vm340, 1, 0
  %v375 = vsel %vm341, 1, 0
  %vm376 = vcmp.eq.s32.totalorder %v374, 1
  %vm377 = vcmp.eq.s32.totalorder %v375, 1
  %v378 = vsel %vm376, %v358, 0.0
  %v379 = vsel %vm377, %v373, 0.0
  %v380 = vperm.slane %v126, 0
  %v381 = vmul.f32 %v156, %v380
  %382 = vset.pattern.permute.xlu0 1
  %383 = vperm.xlu0 %382, %v288
  %v384 = vpop.permute.xlu0 %383
  %386 = vset.pattern.permute.xlu0 1
  %387 = vperm.xlu0 %386, %v291
  %v388 = vpop.permute.xlu0 %387
  %v390 = vperm.slane %v262, 1
  %v391 = vadd.f32 %v384, %v390
  %v392 = vadd.f32 %v388, %v390
  %vm393 = vcmp.gt.f32.partialorder %v391, 0.0
  %vm394 = vcmp.gt.f32.partialorder %v392, 0.0
  %v395 = vmul.f32 %v391, 0.2
  %v396 = vmul.f32 %v392, 0.2
  %v397 = vsel %vm393, %v391, %v395
  %v398 = vsel %vm394, %v392, %v396
  %v399 = vsel %vm293, %v397, -1e+30
  %v400 = vsel %vm294, %v398, -1e+30
  %v401 = vsel %vm316, %v399, -inf
  %402 = vmax.xlane.f32.xlu0 %v401
  %v403 = vpop.xlane.xlu0 %402
  %v404 = vsel %vm320, %v400, -inf
  %405 = vmax.xlane.f32.xlu0 %v404
  %v406 = vpop.xlane.xlu0 %405
  %v407 = vsub.f32 %v397, %v403
  %v408 = vsub.f32 %v398, %v406
  %v409 = vsel %vm293, %v407, 0.0
  %v410 = vsel %vm294, %v408, 0.0
  %v411 = vmul.f32 %v409, 1.442695
  %v412 = vpow.pop %v411
  %v413 = vmul.f32 %v410, 1.442695
  %v414 = vpow.pop %v413
  %v415 = vmul.f32 %v203, %v412
  %v416 = vmul.f32 %v204, %v414
  %v417 = vsel %vm316, %v415, 0.0
  %418 = vadd.xlane.f32.xlu0 %v417
  %v419 = vpop.xlane.xlu0 %418
  %v420 = vsel %vm320, %v416, 0.0
  %421 = vadd.xlane.f32.xlu0 %v420
  %v422 = vpop.xlane.xlu0 %421
  %vm423 = vcmp.gt.f32.partialorder %v419, 0.0
  %vm424 = vcmp.gt.f32.partialorder %v422, 0.0
  %v425 = vmax.f32 %v419, 1e-30
  %v426 = vmax.f32 %v422, 1e-30
  %v427 = vrcp.pop %v425
  %v428 = vmul.f32 %v425, %v427
  %v429 = vsub.f32 1.0, %v428
  %v430 = vmul.f32 %v427, %v429
  %v431 = vadd.f32 %v427, %v430
  %vm432 = vweird.f32 %v425
  %vm433 = vweird.f32 %v427
  %vm434 = vmor %vm432, %vm433
  %v435 = vsel %vm434, %v427, %v431
  %v436 = vand.u32 2147483647, %v425
  %vm437 = vcmp.eq.f32.partialorder %v436, 8.507059e+37
  %v438 = vand.u32 %v425, 2147483648
  %v439 = vor.u32 1.1754944e-38, %v438
  %v440 = vsel %vm437, %v439, %v435
  %v441 = vmul.f32 %v415, %v440
  %v442 = vrcp.pop %v426
  %v443 = vmul.f32 %v426, %v442
  %v444 = vsub.f32 1.0, %v443
  %v445 = vmul.f32 %v442, %v444
  %v446 = vadd.f32 %v442, %v445
  %vm447 = vweird.f32 %v426
  %vm448 = vweird.f32 %v442
  %vm449 = vmor %vm447, %vm448
  %v450 = vsel %vm449, %v442, %v446
  %v451 = vand.u32 2147483647, %v426
  %vm452 = vcmp.eq.f32.partialorder %v451, 8.507059e+37
  %v453 = vand.u32 %v426, 2147483648
  %v454 = vor.u32 1.1754944e-38, %v453
  %v455 = vsel %vm452, %v454, %v450
  %v456 = vmul.f32 %v416, %v455
  %v457 = vsel %vm423, 1, 0
  %v458 = vsel %vm424, 1, 0
  %vm459 = vcmp.eq.s32.totalorder %v457, 1
  %vm460 = vcmp.eq.s32.totalorder %v458, 1
  %v461 = vsel %vm459, %v441, 0.0
  %v462 = vsel %vm460, %v456, 0.0
  %v463 = vperm.slane %v126, 1
  %v464 = vmul.f32 %v156, %v463
  %v466 = vsel %vm316, %v461, 0
  %v469 = vsel %vm316, %v462, 0
  %471 = vmatpush.msra.mxu0 0.0
  %472 = vmatpush.msra.mxu0 0.0
  %473 = vmatpush.msra.mxu0 0.0
  %474 = vmatpush.msra.mxu0 0.0
  %475 = vmatpush.msra.mxu0 0.0
  %476 = vmatpush.msra.mxu0 0.0
  %477 = vmatpush.msra.mxu0 0.0
  %478 = vmatpush.msra.mxu0 0.0
  %479 = vmatpush.msra.mxu0 0.0
  %480 = vmatpush.msra.mxu0 0.0
  %481 = vmatpush.msra.mxu0 0.0
  %482 = vmatpush.msra.mxu0 0.0
  %483 = vmatpush.msra.mxu0 0.0
  %484 = vmatpush.msra.mxu0 0.0
  %485 = vmatpush.msra.mxu0 0.0
  %486 = vmatpush.msra.mxu0 %v464
  %487 = vmatmul.f32.gmra.mxu0 %v466
  %v488 = vpop.f32.mrf.mxu0
  %v489 = vadd.f32 0.0, %v488
  %490 = vmatmul.f32.gmra.mxu0 %v469
  %v491 = vpop.f32.mrf.mxu0
  %v492 = vadd.f32 0.0, %v491
  %493 = vdwg.mxu0
  %v495 = vsel %vm316, %v378, 0
  %v498 = vsel %vm316, %v379, 0
  %500 = vmatpush.msra.mxu0 0.0
  %501 = vmatpush.msra.mxu0 0.0
  %502 = vmatpush.msra.mxu0 0.0
  %503 = vmatpush.msra.mxu0 0.0
  %504 = vmatpush.msra.mxu0 0.0
  %505 = vmatpush.msra.mxu0 0.0
  %506 = vmatpush.msra.mxu0 0.0
  %507 = vmatpush.msra.mxu0 0.0
  %508 = vmatpush.msra.mxu0 0.0
  %509 = vmatpush.msra.mxu0 0.0
  %510 = vmatpush.msra.mxu0 0.0
  %511 = vmatpush.msra.mxu0 0.0
  %512 = vmatpush.msra.mxu0 0.0
  %513 = vmatpush.msra.mxu0 0.0
  %514 = vmatpush.msra.mxu0 0.0
  %515 = vmatpush.msra.mxu0 %v381
  %516 = vmatmul.f32.gmra.mxu0 %v495
  %v517 = vpop.f32.mrf.mxu0
  %v518 = vadd.f32 %v489, %v517
  %519 = vmatmul.f32.gmra.mxu0 %v498
  %v520 = vpop.f32.mrf.mxu0
  %v521 = vadd.f32 %v492, %v520
  %522 = vdwg.mxu0
  %523 = vset.pattern.permute.xlu0 2
  %524 = vperm.xlu0 %523, %v288
  %v525 = vpop.permute.xlu0 %524
  %527 = vset.pattern.permute.xlu0 2
  %528 = vperm.xlu0 %527, %v291
  %v529 = vpop.permute.xlu0 %528
  %v531 = vperm.slane %v262, 2
  %v532 = vadd.f32 %v525, %v531
  %v533 = vadd.f32 %v529, %v531
  %vm534 = vcmp.gt.f32.partialorder %v532, 0.0
  %vm535 = vcmp.gt.f32.partialorder %v533, 0.0
  %v536 = vmul.f32 %v532, 0.2
  %v537 = vmul.f32 %v533, 0.2
  %v538 = vsel %vm534, %v532, %v536
  %v539 = vsel %vm535, %v533, %v537
  %v540 = vsel %vm293, %v538, -1e+30
  %v541 = vsel %vm294, %v539, -1e+30
  %v542 = vsel %vm316, %v540, -inf
  %543 = vmax.xlane.f32.xlu0 %v542
  %v544 = vpop.xlane.xlu0 %543
  %v545 = vsel %vm320, %v541, -inf
  %546 = vmax.xlane.f32.xlu0 %v545
  %v547 = vpop.xlane.xlu0 %546
  %v548 = vsub.f32 %v538, %v544
  %v549 = vsub.f32 %v539, %v547
  %v550 = vsel %vm293, %v548, 0.0
  %v551 = vsel %vm294, %v549, 0.0
  %v552 = vmul.f32 %v550, 1.442695
  %v553 = vpow.pop %v552
  %v554 = vmul.f32 %v551, 1.442695
  %v555 = vpow.pop %v554
  %v556 = vmul.f32 %v203, %v553
  %v557 = vmul.f32 %v204, %v555
  %v558 = vsel %vm316, %v556, 0.0
  %559 = vadd.xlane.f32.xlu0 %v558
  %v560 = vpop.xlane.xlu0 %559
  %v561 = vsel %vm320, %v557, 0.0
  %562 = vadd.xlane.f32.xlu0 %v561
  %v563 = vpop.xlane.xlu0 %562
  %vm564 = vcmp.gt.f32.partialorder %v560, 0.0
  %vm565 = vcmp.gt.f32.partialorder %v563, 0.0
  %v566 = vmax.f32 %v560, 1e-30
  %v567 = vmax.f32 %v563, 1e-30
  %v568 = vrcp.pop %v566
  %v569 = vmul.f32 %v566, %v568
  %v570 = vsub.f32 1.0, %v569
  %v571 = vmul.f32 %v568, %v570
  %v572 = vadd.f32 %v568, %v571
  %vm573 = vweird.f32 %v566
  %vm574 = vweird.f32 %v568
  %vm575 = vmor %vm573, %vm574
  %v576 = vsel %vm575, %v568, %v572
  %v577 = vand.u32 2147483647, %v566
  %vm578 = vcmp.eq.f32.partialorder %v577, 8.507059e+37
  %v579 = vand.u32 %v566, 2147483648
  %v580 = vor.u32 1.1754944e-38, %v579
  %v581 = vsel %vm578, %v580, %v576
  %v582 = vmul.f32 %v556, %v581
  %v583 = vrcp.pop %v567
  %v584 = vmul.f32 %v567, %v583
  %v585 = vsub.f32 1.0, %v584
  %v586 = vmul.f32 %v583, %v585
  %v587 = vadd.f32 %v583, %v586
  %vm588 = vweird.f32 %v567
  %vm589 = vweird.f32 %v583
  %vm590 = vmor %vm588, %vm589
  %v591 = vsel %vm590, %v583, %v587
  %v592 = vand.u32 2147483647, %v567
  %vm593 = vcmp.eq.f32.partialorder %v592, 8.507059e+37
  %v594 = vand.u32 %v567, 2147483648
  %v595 = vor.u32 1.1754944e-38, %v594
  %v596 = vsel %vm593, %v595, %v591
  %v597 = vmul.f32 %v557, %v596
  %v598 = vsel %vm564, 1, 0
  %v599 = vsel %vm565, 1, 0
  %vm600 = vcmp.eq.s32.totalorder %v598, 1
  %vm601 = vcmp.eq.s32.totalorder %v599, 1
  %v602 = vsel %vm600, %v582, 0.0
  %v603 = vsel %vm601, %v597, 0.0
  %v604 = vperm.slane %v126, 2
  %v605 = vmul.f32 %v156, %v604
  %v607 = vsel %vm316, %v602, 0
  %v610 = vsel %vm316, %v603, 0
  %612 = vmatpush.msra.mxu0 0.0
  %613 = vmatpush.msra.mxu0 0.0
  %614 = vmatpush.msra.mxu0 0.0
  %615 = vmatpush.msra.mxu0 0.0
  %616 = vmatpush.msra.mxu0 0.0
  %617 = vmatpush.msra.mxu0 0.0
  %618 = vmatpush.msra.mxu0 0.0
  %619 = vmatpush.msra.mxu0 0.0
  %620 = vmatpush.msra.mxu0 0.0
  %621 = vmatpush.msra.mxu0 0.0
  %622 = vmatpush.msra.mxu0 0.0
  %623 = vmatpush.msra.mxu0 0.0
  %624 = vmatpush.msra.mxu0 0.0
  %625 = vmatpush.msra.mxu0 0.0
  %626 = vmatpush.msra.mxu0 0.0
  %627 = vmatpush.msra.mxu0 %v605
  %628 = vmatmul.f32.gmra.mxu0 %v607
  %v629 = vpop.f32.mrf.mxu0
  %v630 = vadd.f32 0.0, %v629
  %631 = vmatmul.f32.gmra.mxu0 %v610
  %v632 = vpop.f32.mrf.mxu0
  %v633 = vadd.f32 0.0, %v632
  %634 = vdwg.mxu0
  %v635 = vadd.f32 %v518, %v630
  %v636 = vadd.f32 %v521, %v633
  %637 = vset.pattern.permute.xlu0 3
  %638 = vperm.xlu0 %637, %v288
  %v639 = vpop.permute.xlu0 %638
  %641 = vset.pattern.permute.xlu0 3
  %642 = vperm.xlu0 %641, %v291
  %v643 = vpop.permute.xlu0 %642
  %v645 = vperm.slane %v262, 3
  %v646 = vadd.f32 %v639, %v645
  %v647 = vadd.f32 %v643, %v645
  %vm648 = vcmp.gt.f32.partialorder %v646, 0.0
  %vm649 = vcmp.gt.f32.partialorder %v647, 0.0
  %v650 = vmul.f32 %v646, 0.2
  %v651 = vmul.f32 %v647, 0.2
  %v652 = vsel %vm648, %v646, %v650
  %v653 = vsel %vm649, %v647, %v651
  %v654 = vsel %vm293, %v652, -1e+30
  %v655 = vsel %vm294, %v653, -1e+30
  %v656 = vsel %vm316, %v654, -inf
  %657 = vmax.xlane.f32.xlu0 %v656
  %v658 = vpop.xlane.xlu0 %657
  %v659 = vsel %vm320, %v655, -inf
  %660 = vmax.xlane.f32.xlu0 %v659
  %v661 = vpop.xlane.xlu0 %660
  %v662 = vsub.f32 %v652, %v658
  %v663 = vsub.f32 %v653, %v661
  %v664 = vsel %vm293, %v662, 0.0
  %v665 = vsel %vm294, %v663, 0.0
  %v666 = vmul.f32 %v664, 1.442695
  %v667 = vpow.pop %v666
  %v668 = vmul.f32 %v665, 1.442695
  %v669 = vpow.pop %v668
  %v670 = vmul.f32 %v203, %v667
  %v671 = vmul.f32 %v204, %v669
  %v672 = vsel %vm316, %v670, 0.0
  %673 = vadd.xlane.f32.xlu0 %v672
  %v674 = vpop.xlane.xlu0 %673
  %v675 = vsel %vm320, %v671, 0.0
  %676 = vadd.xlane.f32.xlu0 %v675
  %v677 = vpop.xlane.xlu0 %676
  %vm678 = vcmp.gt.f32.partialorder %v674, 0.0
  %vm679 = vcmp.gt.f32.partialorder %v677, 0.0
  %v680 = vmax.f32 %v674, 1e-30
  %v681 = vmax.f32 %v677, 1e-30
  %v682 = vrcp.pop %v680
  %v683 = vmul.f32 %v680, %v682
  %v684 = vsub.f32 1.0, %v683
  %v685 = vmul.f32 %v682, %v684
  %v686 = vadd.f32 %v682, %v685
  %vm687 = vweird.f32 %v680
  %vm688 = vweird.f32 %v682
  %vm689 = vmor %vm687, %vm688
  %v690 = vsel %vm689, %v682, %v686
  %v691 = vand.u32 2147483647, %v680
  %vm692 = vcmp.eq.f32.partialorder %v691, 8.507059e+37
  %v693 = vand.u32 %v680, 2147483648
  %v694 = vor.u32 1.1754944e-38, %v693
  %v695 = vsel %vm692, %v694, %v690
  %v696 = vmul.f32 %v670, %v695
  %v697 = vrcp.pop %v681
  %v698 = vmul.f32 %v681, %v697
  %v699 = vsub.f32 1.0, %v698
  %v700 = vmul.f32 %v697, %v699
  %v701 = vadd.f32 %v697, %v700
  %vm702 = vweird.f32 %v681
  %vm703 = vweird.f32 %v697
  %vm704 = vmor %vm702, %vm703
  %v705 = vsel %vm704, %v697, %v701
  %v706 = vand.u32 2147483647, %v681
  %vm707 = vcmp.eq.f32.partialorder %v706, 8.507059e+37
  %v708 = vand.u32 %v681, 2147483648
  %v709 = vor.u32 1.1754944e-38, %v708
  %v710 = vsel %vm707, %v709, %v705
  %v711 = vmul.f32 %v671, %v710
  %v712 = vsel %vm678, 1, 0
  %v713 = vsel %vm679, 1, 0
  %vm714 = vcmp.eq.s32.totalorder %v712, 1
  %vm715 = vcmp.eq.s32.totalorder %v713, 1
  %v716 = vsel %vm714, %v696, 0.0
  %v717 = vsel %vm715, %v711, 0.0
  %v718 = vperm.slane %v126, 3
  %v719 = vmul.f32 %v156, %v718
  %v721 = vsel %vm316, %v716, 0
  %v724 = vsel %vm316, %v717, 0
  %726 = vmatpush.msra.mxu0 0.0
  %727 = vmatpush.msra.mxu0 0.0
  %728 = vmatpush.msra.mxu0 0.0
  %729 = vmatpush.msra.mxu0 0.0
  %730 = vmatpush.msra.mxu0 0.0
  %731 = vmatpush.msra.mxu0 0.0
  %732 = vmatpush.msra.mxu0 0.0
  %733 = vmatpush.msra.mxu0 0.0
  %734 = vmatpush.msra.mxu0 0.0
  %735 = vmatpush.msra.mxu0 0.0
  %736 = vmatpush.msra.mxu0 0.0
  %737 = vmatpush.msra.mxu0 0.0
  %738 = vmatpush.msra.mxu0 0.0
  %739 = vmatpush.msra.mxu0 0.0
  %740 = vmatpush.msra.mxu0 0.0
  %741 = vmatpush.msra.mxu0 %v719
  %742 = vmatmul.f32.gmra.mxu0 %v721
  %v743 = vpop.f32.mrf.mxu0
  %v744 = vadd.f32 0.0, %v743
  %745 = vmatmul.f32.gmra.mxu0 %v724
  %v746 = vpop.f32.mrf.mxu0
  %v747 = vadd.f32 0.0, %v746
  %748 = vdwg.mxu0
  %v749 = vadd.f32 %v635, %v744
  %v750 = vadd.f32 %v636, %v747
  %751 = vset.pattern.permute.xlu0 4
  %752 = vperm.xlu0 %751, %v288
  %v753 = vpop.permute.xlu0 %752
  %755 = vset.pattern.permute.xlu0 4
  %756 = vperm.xlu0 %755, %v291
  %v757 = vpop.permute.xlu0 %756
  %v759 = vperm.slane %v262, 4
  %v760 = vadd.f32 %v753, %v759
  %v761 = vadd.f32 %v757, %v759
  %vm762 = vcmp.gt.f32.partialorder %v760, 0.0
  %vm763 = vcmp.gt.f32.partialorder %v761, 0.0
  %v764 = vmul.f32 %v760, 0.2
  %v765 = vmul.f32 %v761, 0.2
  %v766 = vsel %vm762, %v760, %v764
  %v767 = vsel %vm763, %v761, %v765
  %v768 = vsel %vm293, %v766, -1e+30
  %v769 = vsel %vm294, %v767, -1e+30
  %v770 = vsel %vm316, %v768, -inf
  %771 = vmax.xlane.f32.xlu0 %v770
  %v772 = vpop.xlane.xlu0 %771
  %v773 = vsel %vm320, %v769, -inf
  %774 = vmax.xlane.f32.xlu0 %v773
  %v775 = vpop.xlane.xlu0 %774
  %v776 = vsub.f32 %v766, %v772
  %v777 = vsub.f32 %v767, %v775
  %v778 = vsel %vm293, %v776, 0.0
  %v779 = vsel %vm294, %v777, 0.0
  %v780 = vmul.f32 %v778, 1.442695
  %v781 = vpow.pop %v780
  %v782 = vmul.f32 %v779, 1.442695
  %v783 = vpow.pop %v782
  %v784 = vmul.f32 %v203, %v781
  %v785 = vmul.f32 %v204, %v783
  %v786 = vsel %vm316, %v784, 0.0
  %787 = vadd.xlane.f32.xlu0 %v786
  %v788 = vpop.xlane.xlu0 %787
  %v789 = vsel %vm320, %v785, 0.0
  %790 = vadd.xlane.f32.xlu0 %v789
  %v791 = vpop.xlane.xlu0 %790
  %vm792 = vcmp.gt.f32.partialorder %v788, 0.0
  %vm793 = vcmp.gt.f32.partialorder %v791, 0.0
  %v794 = vmax.f32 %v788, 1e-30
  %v795 = vmax.f32 %v791, 1e-30
  %v796 = vrcp.pop %v794
  %v797 = vmul.f32 %v794, %v796
  %v798 = vsub.f32 1.0, %v797
  %v799 = vmul.f32 %v796, %v798
  %v800 = vadd.f32 %v796, %v799
  %vm801 = vweird.f32 %v794
  %vm802 = vweird.f32 %v796
  %vm803 = vmor %vm801, %vm802
  %v804 = vsel %vm803, %v796, %v800
  %v805 = vand.u32 2147483647, %v794
  %vm806 = vcmp.eq.f32.partialorder %v805, 8.507059e+37
  %v807 = vand.u32 %v794, 2147483648
  %v808 = vor.u32 1.1754944e-38, %v807
  %v809 = vsel %vm806, %v808, %v804
  %v810 = vmul.f32 %v784, %v809
  %v811 = vrcp.pop %v795
  %v812 = vmul.f32 %v795, %v811
  %v813 = vsub.f32 1.0, %v812
  %v814 = vmul.f32 %v811, %v813
  %v815 = vadd.f32 %v811, %v814
  %vm816 = vweird.f32 %v795
  %vm817 = vweird.f32 %v811
  %vm818 = vmor %vm816, %vm817
  %v819 = vsel %vm818, %v811, %v815
  %v820 = vand.u32 2147483647, %v795
  %vm821 = vcmp.eq.f32.partialorder %v820, 8.507059e+37
  %v822 = vand.u32 %v795, 2147483648
  %v823 = vor.u32 1.1754944e-38, %v822
  %v824 = vsel %vm821, %v823, %v819
  %v825 = vmul.f32 %v785, %v824
  %v826 = vsel %vm792, 1, 0
  %v827 = vsel %vm793, 1, 0
  %vm828 = vcmp.eq.s32.totalorder %v826, 1
  %vm829 = vcmp.eq.s32.totalorder %v827, 1
  %v830 = vsel %vm828, %v810, 0.0
  %v831 = vsel %vm829, %v825, 0.0
  %v832 = vperm.slane %v126, 4
  %v833 = vmul.f32 %v156, %v832
  %v835 = vsel %vm316, %v830, 0
  %v838 = vsel %vm316, %v831, 0
  %840 = vmatpush.msra.mxu0 0.0
  %841 = vmatpush.msra.mxu0 0.0
  %842 = vmatpush.msra.mxu0 0.0
  %843 = vmatpush.msra.mxu0 0.0
  %844 = vmatpush.msra.mxu0 0.0
  %845 = vmatpush.msra.mxu0 0.0
  %846 = vmatpush.msra.mxu0 0.0
  %847 = vmatpush.msra.mxu0 0.0
  %848 = vmatpush.msra.mxu0 0.0
  %849 = vmatpush.msra.mxu0 0.0
  %850 = vmatpush.msra.mxu0 0.0
  %851 = vmatpush.msra.mxu0 0.0
  %852 = vmatpush.msra.mxu0 0.0
  %853 = vmatpush.msra.mxu0 0.0
  %854 = vmatpush.msra.mxu0 0.0
  %855 = vmatpush.msra.mxu0 %v833
  %856 = vmatmul.f32.gmra.mxu0 %v835
  %v857 = vpop.f32.mrf.mxu0
  %v858 = vadd.f32 0.0, %v857
  %859 = vmatmul.f32.gmra.mxu0 %v838
  %v860 = vpop.f32.mrf.mxu0
  %v861 = vadd.f32 0.0, %v860
  %862 = vdwg.mxu0
  %v863 = vadd.f32 %v749, %v858
  %v864 = vadd.f32 %v750, %v861
  %865 = vset.pattern.permute.xlu0 5
  %866 = vperm.xlu0 %865, %v288
  %v867 = vpop.permute.xlu0 %866
  %869 = vset.pattern.permute.xlu0 5
  %870 = vperm.xlu0 %869, %v291
  %v871 = vpop.permute.xlu0 %870
  %v873 = vperm.slane %v262, 5
  %v874 = vadd.f32 %v867, %v873
  %v875 = vadd.f32 %v871, %v873
  %vm876 = vcmp.gt.f32.partialorder %v874, 0.0
  %vm877 = vcmp.gt.f32.partialorder %v875, 0.0
  %v878 = vmul.f32 %v874, 0.2
  %v879 = vmul.f32 %v875, 0.2
  %v880 = vsel %vm876, %v874, %v878
  %v881 = vsel %vm877, %v875, %v879
  %v882 = vsel %vm293, %v880, -1e+30
  %v883 = vsel %vm294, %v881, -1e+30
  %v884 = vsel %vm316, %v882, -inf
  %885 = vmax.xlane.f32.xlu0 %v884
  %v886 = vpop.xlane.xlu0 %885
  %v887 = vsel %vm320, %v883, -inf
  %888 = vmax.xlane.f32.xlu0 %v887
  %v889 = vpop.xlane.xlu0 %888
  %v890 = vsub.f32 %v880, %v886
  %v891 = vsub.f32 %v881, %v889
  %v892 = vsel %vm293, %v890, 0.0
  %v893 = vsel %vm294, %v891, 0.0
  %v894 = vmul.f32 %v892, 1.442695
  %v895 = vpow.pop %v894
  %v896 = vmul.f32 %v893, 1.442695
  %v897 = vpow.pop %v896
  %v898 = vmul.f32 %v203, %v895
  %v899 = vmul.f32 %v204, %v897
  %v900 = vsel %vm316, %v898, 0.0
  %901 = vadd.xlane.f32.xlu0 %v900
  %v902 = vpop.xlane.xlu0 %901
  %v903 = vsel %vm320, %v899, 0.0
  %904 = vadd.xlane.f32.xlu0 %v903
  %v905 = vpop.xlane.xlu0 %904
  %vm906 = vcmp.gt.f32.partialorder %v902, 0.0
  %vm907 = vcmp.gt.f32.partialorder %v905, 0.0
  %v908 = vmax.f32 %v902, 1e-30
  %v909 = vmax.f32 %v905, 1e-30
  %v910 = vrcp.pop %v908
  %v911 = vmul.f32 %v908, %v910
  %v912 = vsub.f32 1.0, %v911
  %v913 = vmul.f32 %v910, %v912
  %v914 = vadd.f32 %v910, %v913
  %vm915 = vweird.f32 %v908
  %vm916 = vweird.f32 %v910
  %vm917 = vmor %vm915, %vm916
  %v918 = vsel %vm917, %v910, %v914
  %v919 = vand.u32 2147483647, %v908
  %vm920 = vcmp.eq.f32.partialorder %v919, 8.507059e+37
  %v921 = vand.u32 %v908, 2147483648
  %v922 = vor.u32 1.1754944e-38, %v921
  %v923 = vsel %vm920, %v922, %v918
  %v924 = vmul.f32 %v898, %v923
  %v925 = vrcp.pop %v909
  %v926 = vmul.f32 %v909, %v925
  %v927 = vsub.f32 1.0, %v926
  %v928 = vmul.f32 %v925, %v927
  %v929 = vadd.f32 %v925, %v928
  %vm930 = vweird.f32 %v909
  %vm931 = vweird.f32 %v925
  %vm932 = vmor %vm930, %vm931
  %v933 = vsel %vm932, %v925, %v929
  %v934 = vand.u32 2147483647, %v909
  %vm935 = vcmp.eq.f32.partialorder %v934, 8.507059e+37
  %v936 = vand.u32 %v909, 2147483648
  %v937 = vor.u32 1.1754944e-38, %v936
  %v938 = vsel %vm935, %v937, %v933
  %v939 = vmul.f32 %v899, %v938
  %v940 = vsel %vm906, 1, 0
  %v941 = vsel %vm907, 1, 0
  %vm942 = vcmp.eq.s32.totalorder %v940, 1
  %vm943 = vcmp.eq.s32.totalorder %v941, 1
  %v944 = vsel %vm942, %v924, 0.0
  %v945 = vsel %vm943, %v939, 0.0
  %v946 = vperm.slane %v126, 5
  %v947 = vmul.f32 %v156, %v946
  %v949 = vsel %vm316, %v944, 0
  %v952 = vsel %vm316, %v945, 0
  %954 = vmatpush.msra.mxu0 0.0
  %955 = vmatpush.msra.mxu0 0.0
  %956 = vmatpush.msra.mxu0 0.0
  %957 = vmatpush.msra.mxu0 0.0
  %958 = vmatpush.msra.mxu0 0.0
  %959 = vmatpush.msra.mxu0 0.0
  %960 = vmatpush.msra.mxu0 0.0
  %961 = vmatpush.msra.mxu0 0.0
  %962 = vmatpush.msra.mxu0 0.0
  %963 = vmatpush.msra.mxu0 0.0
  %964 = vmatpush.msra.mxu0 0.0
  %965 = vmatpush.msra.mxu0 0.0
  %966 = vmatpush.msra.mxu0 0.0
  %967 = vmatpush.msra.mxu0 0.0
  %968 = vmatpush.msra.mxu0 0.0
  %969 = vmatpush.msra.mxu0 %v947
  %970 = vmatmul.f32.gmra.mxu0 %v949
  %v971 = vpop.f32.mrf.mxu0
  %v972 = vadd.f32 0.0, %v971
  %973 = vmatmul.f32.gmra.mxu0 %v952
  %v974 = vpop.f32.mrf.mxu0
  %v975 = vadd.f32 0.0, %v974
  %976 = vdwg.mxu0
  %v977 = vadd.f32 %v863, %v972
  %v978 = vadd.f32 %v864, %v975
  %979 = vset.pattern.permute.xlu0 6
  %980 = vperm.xlu0 %979, %v288
  %v981 = vpop.permute.xlu0 %980
  %983 = vset.pattern.permute.xlu0 6
  %984 = vperm.xlu0 %983, %v291
  %v985 = vpop.permute.xlu0 %984
  %v987 = vperm.slane %v262, 6
  %v988 = vadd.f32 %v981, %v987
  %v989 = vadd.f32 %v985, %v987
  %vm990 = vcmp.gt.f32.partialorder %v988, 0.0
  %vm991 = vcmp.gt.f32.partialorder %v989, 0.0
  %v992 = vmul.f32 %v988, 0.2
  %v993 = vmul.f32 %v989, 0.2
  %v994 = vsel %vm990, %v988, %v992
  %v995 = vsel %vm991, %v989, %v993
  %v996 = vsel %vm293, %v994, -1e+30
  %v997 = vsel %vm294, %v995, -1e+30
  %v998 = vsel %vm316, %v996, -inf
  %999 = vmax.xlane.f32.xlu0 %v998
  %v1000 = vpop.xlane.xlu0 %999
  %v1001 = vsel %vm320, %v997, -inf
  %1002 = vmax.xlane.f32.xlu0 %v1001
  %v1003 = vpop.xlane.xlu0 %1002
  %v1004 = vsub.f32 %v994, %v1000
  %v1005 = vsub.f32 %v995, %v1003
  %v1006 = vsel %vm293, %v1004, 0.0
  %v1007 = vsel %vm294, %v1005, 0.0
  %v1008 = vmul.f32 %v1006, 1.442695
  %v1009 = vpow.pop %v1008
  %v1010 = vmul.f32 %v1007, 1.442695
  %v1011 = vpow.pop %v1010
  %v1012 = vmul.f32 %v203, %v1009
  %v1013 = vmul.f32 %v204, %v1011
  %v1014 = vsel %vm316, %v1012, 0.0
  %1015 = vadd.xlane.f32.xlu0 %v1014
  %v1016 = vpop.xlane.xlu0 %1015
  %v1017 = vsel %vm320, %v1013, 0.0
  %1018 = vadd.xlane.f32.xlu0 %v1017
  %v1019 = vpop.xlane.xlu0 %1018
  %vm1020 = vcmp.gt.f32.partialorder %v1016, 0.0
  %vm1021 = vcmp.gt.f32.partialorder %v1019, 0.0
  %v1022 = vmax.f32 %v1016, 1e-30
  %v1023 = vmax.f32 %v1019, 1e-30
  %v1024 = vrcp.pop %v1022
  %v1025 = vmul.f32 %v1022, %v1024
  %v1026 = vsub.f32 1.0, %v1025
  %v1027 = vmul.f32 %v1024, %v1026
  %v1028 = vadd.f32 %v1024, %v1027
  %vm1029 = vweird.f32 %v1022
  %vm1030 = vweird.f32 %v1024
  %vm1031 = vmor %vm1029, %vm1030
  %v1032 = vsel %vm1031, %v1024, %v1028
  %v1033 = vand.u32 2147483647, %v1022
  %vm1034 = vcmp.eq.f32.partialorder %v1033, 8.507059e+37
  %v1035 = vand.u32 %v1022, 2147483648
  %v1036 = vor.u32 1.1754944e-38, %v1035
  %v1037 = vsel %vm1034, %v1036, %v1032
  %v1038 = vmul.f32 %v1012, %v1037
  %v1039 = vrcp.pop %v1023
  %v1040 = vmul.f32 %v1023, %v1039
  %v1041 = vsub.f32 1.0, %v1040
  %v1042 = vmul.f32 %v1039, %v1041
  %v1043 = vadd.f32 %v1039, %v1042
  %vm1044 = vweird.f32 %v1023
  %vm1045 = vweird.f32 %v1039
  %vm1046 = vmor %vm1044, %vm1045
  %v1047 = vsel %vm1046, %v1039, %v1043
  %v1048 = vand.u32 2147483647, %v1023
  %vm1049 = vcmp.eq.f32.partialorder %v1048, 8.507059e+37
  %v1050 = vand.u32 %v1023, 2147483648
  %v1051 = vor.u32 1.1754944e-38, %v1050
  %v1052 = vsel %vm1049, %v1051, %v1047
  %v1053 = vmul.f32 %v1013, %v1052
  %v1054 = vsel %vm1020, 1, 0
  %v1055 = vsel %vm1021, 1, 0
  %vm1056 = vcmp.eq.s32.totalorder %v1054, 1
  %vm1057 = vcmp.eq.s32.totalorder %v1055, 1
  %v1058 = vsel %vm1056, %v1038, 0.0
  %v1059 = vsel %vm1057, %v1053, 0.0
  %v1060 = vperm.slane %v126, 6
  %v1061 = vmul.f32 %v156, %v1060
  %v1063 = vsel %vm316, %v1058, 0
  %v1066 = vsel %vm316, %v1059, 0
  %1068 = vmatpush.msra.mxu0 0.0
  %1069 = vmatpush.msra.mxu0 0.0
  %1070 = vmatpush.msra.mxu0 0.0
  %1071 = vmatpush.msra.mxu0 0.0
  %1072 = vmatpush.msra.mxu0 0.0
  %1073 = vmatpush.msra.mxu0 0.0
  %1074 = vmatpush.msra.mxu0 0.0
  %1075 = vmatpush.msra.mxu0 0.0
  %1076 = vmatpush.msra.mxu0 0.0
  %1077 = vmatpush.msra.mxu0 0.0
  %1078 = vmatpush.msra.mxu0 0.0
  %1079 = vmatpush.msra.mxu0 0.0
  %1080 = vmatpush.msra.mxu0 0.0
  %1081 = vmatpush.msra.mxu0 0.0
  %1082 = vmatpush.msra.mxu0 0.0
  %1083 = vmatpush.msra.mxu0 %v1061
  %1084 = vmatmul.f32.gmra.mxu0 %v1063
  %v1085 = vpop.f32.mrf.mxu0
  %v1086 = vadd.f32 0.0, %v1085
  %1087 = vmatmul.f32.gmra.mxu0 %v1066
  %v1088 = vpop.f32.mrf.mxu0
  %v1089 = vadd.f32 0.0, %v1088
  %1090 = vdwg.mxu0
  %v1091 = vadd.f32 %v977, %v1086
  %v1092 = vadd.f32 %v978, %v1089
  %1093 = vset.pattern.permute.xlu0 7
  %1094 = vperm.xlu0 %1093, %v288
  %v1095 = vpop.permute.xlu0 %1094
  %1097 = vset.pattern.permute.xlu0 7
  %1098 = vperm.xlu0 %1097, %v291
  %v1099 = vpop.permute.xlu0 %1098
  %v1101 = vperm.slane %v262, 7
  %v1102 = vadd.f32 %v1095, %v1101
  %v1103 = vadd.f32 %v1099, %v1101
  %vm1104 = vcmp.gt.f32.partialorder %v1102, 0.0
  %vm1105 = vcmp.gt.f32.partialorder %v1103, 0.0
  %v1106 = vmul.f32 %v1102, 0.2
  %v1107 = vmul.f32 %v1103, 0.2
  %v1108 = vsel %vm1104, %v1102, %v1106
  %v1109 = vsel %vm1105, %v1103, %v1107
  %v1110 = vsel %vm293, %v1108, -1e+30
  %v1111 = vsel %vm294, %v1109, -1e+30
  %v1112 = vsel %vm316, %v1110, -inf
  %1113 = vmax.xlane.f32.xlu0 %v1112
  %v1114 = vpop.xlane.xlu0 %1113
  %v1115 = vsel %vm320, %v1111, -inf
  %1116 = vmax.xlane.f32.xlu0 %v1115
  %v1117 = vpop.xlane.xlu0 %1116
  %v1118 = vsub.f32 %v1108, %v1114
  %v1119 = vsub.f32 %v1109, %v1117
  %v1120 = vsel %vm293, %v1118, 0.0
  %v1121 = vsel %vm294, %v1119, 0.0
  %v1122 = vmul.f32 %v1120, 1.442695
  %v1123 = vpow.pop %v1122
  %v1124 = vmul.f32 %v1121, 1.442695
  %v1125 = vpow.pop %v1124
  %v1126 = vmul.f32 %v203, %v1123
  %v1127 = vmul.f32 %v204, %v1125
  %v1128 = vsel %vm316, %v1126, 0.0
  %1129 = vadd.xlane.f32.xlu0 %v1128
  %v1130 = vpop.xlane.xlu0 %1129
  %v1131 = vsel %vm320, %v1127, 0.0
  %1132 = vadd.xlane.f32.xlu0 %v1131
  %v1133 = vpop.xlane.xlu0 %1132
  %vm1134 = vcmp.gt.f32.partialorder %v1130, 0.0
  %vm1135 = vcmp.gt.f32.partialorder %v1133, 0.0
  %v1136 = vmax.f32 %v1130, 1e-30
  %v1137 = vmax.f32 %v1133, 1e-30
  %v1138 = vrcp.pop %v1136
  %v1139 = vmul.f32 %v1136, %v1138
  %v1140 = vsub.f32 1.0, %v1139
  %v1141 = vmul.f32 %v1138, %v1140
  %v1142 = vadd.f32 %v1138, %v1141
  %vm1143 = vweird.f32 %v1136
  %vm1144 = vweird.f32 %v1138
  %vm1145 = vmor %vm1143, %vm1144
  %v1146 = vsel %vm1145, %v1138, %v1142
  %v1147 = vand.u32 2147483647, %v1136
  %vm1148 = vcmp.eq.f32.partialorder %v1147, 8.507059e+37
  %v1149 = vand.u32 %v1136, 2147483648
  %v1150 = vor.u32 1.1754944e-38, %v1149
  %v1151 = vsel %vm1148, %v1150, %v1146
  %v1152 = vmul.f32 %v1126, %v1151
  %v1153 = vrcp.pop %v1137
  %v1154 = vmul.f32 %v1137, %v1153
  %v1155 = vsub.f32 1.0, %v1154
  %v1156 = vmul.f32 %v1153, %v1155
  %v1157 = vadd.f32 %v1153, %v1156
  %vm1158 = vweird.f32 %v1137
  %vm1159 = vweird.f32 %v1153
  %vm1160 = vmor %vm1158, %vm1159
  %v1161 = vsel %vm1160, %v1153, %v1157
  %v1162 = vand.u32 2147483647, %v1137
  %vm1163 = vcmp.eq.f32.partialorder %v1162, 8.507059e+37
  %v1164 = vand.u32 %v1137, 2147483648
  %v1165 = vor.u32 1.1754944e-38, %v1164
  %v1166 = vsel %vm1163, %v1165, %v1161
  %v1167 = vmul.f32 %v1127, %v1166
  %v1168 = vsel %vm1134, 1, 0
  %v1169 = vsel %vm1135, 1, 0
  %vm1170 = vcmp.eq.s32.totalorder %v1168, 1
  %vm1171 = vcmp.eq.s32.totalorder %v1169, 1
  %v1172 = vsel %vm1170, %v1152, 0.0
  %v1173 = vsel %vm1171, %v1167, 0.0
  %v1174 = vperm.slane %v126, 7
  %v1175 = vmul.f32 %v156, %v1174
  %v1177 = vsel %vm316, %v1172, 0
  %v1180 = vsel %vm316, %v1173, 0
  %1182 = vmatpush.msra.mxu0 0.0
  %1183 = vmatpush.msra.mxu0 0.0
  %1184 = vmatpush.msra.mxu0 0.0
  %1185 = vmatpush.msra.mxu0 0.0
  %1186 = vmatpush.msra.mxu0 0.0
  %1187 = vmatpush.msra.mxu0 0.0
  %1188 = vmatpush.msra.mxu0 0.0
  %1189 = vmatpush.msra.mxu0 0.0
  %1190 = vmatpush.msra.mxu0 0.0
  %1191 = vmatpush.msra.mxu0 0.0
  %1192 = vmatpush.msra.mxu0 0.0
  %1193 = vmatpush.msra.mxu0 0.0
  %1194 = vmatpush.msra.mxu0 0.0
  %1195 = vmatpush.msra.mxu0 0.0
  %1196 = vmatpush.msra.mxu0 0.0
  %1197 = vmatpush.msra.mxu0 %v1175
  %1198 = vmatmul.f32.gmra.mxu0 %v1177
  %v1199 = vpop.f32.mrf.mxu0
  %v1200 = vadd.f32 0.0, %v1199
  %1201 = vmatmul.f32.gmra.mxu0 %v1180
  %v1202 = vpop.f32.mrf.mxu0
  %v1203 = vadd.f32 0.0, %v1202
  %1204 = vdwg.mxu0
  %v1205 = vadd.f32 %v1091, %v1200
  %v1206 = vadd.f32 %v1092, %v1203
  %v1207 = vmax.f32 %v1205, 0.0
  %v1208 = vmax.f32 %v1206, 0.0
  %v1209 = vld [vmem:[%s17] sm:$0xff]
  %v1210 = vld [vmem:[%s17 + $0x8] sm:$0xff]
  %v1211 = vld [vmem:[%s17 + $0x10] sm:$0xff]
  %v1212 = vld [vmem:[%s17 + $0x18] sm:$0xff]
  %v1213 = vld [vmem:[%s19] sm:$0xff]
  %v1214 = vld [vmem:[%s19 + $0x8] sm:$0xff]
  %v1215 = vld [vmem:[%s19 + $0x10] sm:$0xff]
  %v1216 = vld [vmem:[%s19 + $0x18] sm:$0xff]
  %v1217 = vld [vmem:[%s23] sm:$0xff]
  %1218 = vxpose.xlu0.b32.start [1/16] %v1209, 128
  %1219 = vxpose.xlu0.b32.cont [2/16] %v1210, 128
  %1220 = vxpose.xlu0.b32.cont [3/16] %v1211, 128
  %1221 = vxpose.xlu0.b32.cont [4/16] %v1212, 128
  %1222 = vxpose.xlu0.b32.cont [5/16] 0.0, 128
  %1223 = vxpose.xlu0.b32.cont [6/16] 0.0, 128
  %1224 = vxpose.xlu0.b32.cont [7/16] 0.0, 128
  %1225 = vxpose.xlu0.b32.cont [8/16] 0.0, 128
  %1226 = vxpose.xlu0.b32.cont [9/16] 0.0, 128
  %1227 = vxpose.xlu0.b32.cont [10/16] 0.0, 128
  %1228 = vxpose.xlu0.b32.cont [11/16] 0.0, 128
  %1229 = vxpose.xlu0.b32.cont [12/16] 0.0, 128
  %1230 = vxpose.xlu0.b32.cont [13/16] 0.0, 128
  %1231 = vxpose.xlu0.b32.cont [14/16] 0.0, 128
  %1232 = vxpose.xlu0.b32.cont [15/16] 0.0, 128
  %1233 = vxpose.xlu0.b32.end [16/16] 0.0, 128
  %v1234 = vpop.trf.xlu0
  %v1235 = vpop.trf.xlu0
  %v1236 = vpop.trf.xlu0
  %v1237 = vpop.trf.xlu0
  %v1238 = vpop.trf.xlu0
  %v1239 = vpop.trf.xlu0
  %v1240 = vpop.trf.xlu0
  %v1241 = vpop.trf.xlu0
  %v1242 = vpop.trf.xlu0
  %v1243 = vpop.trf.xlu0
  %v1244 = vpop.trf.xlu0
  %v1245 = vpop.trf.xlu0
  %v1246 = vpop.trf.xlu0
  %v1247 = vpop.trf.xlu0
  %v1248 = vpop.trf.xlu0
  %v1249 = vpop.trf.xlu0
  %v1251 = vsel %vm237, %v1234, 0
  %1253 = vmatpush.xpose.msra.mxu0 0.0
  %1254 = vmatpush.xpose.msra.mxu0 0.0
  %1255 = vmatpush.xpose.msra.mxu0 0.0
  %1256 = vmatpush.xpose.msra.mxu0 0.0
  %1257 = vmatpush.xpose.msra.mxu0 0.0
  %1258 = vmatpush.xpose.msra.mxu0 0.0
  %1259 = vmatpush.xpose.msra.mxu0 0.0
  %1260 = vmatpush.xpose.msra.mxu0 0.0
  %1261 = vmatpush.xpose.msra.mxu0 0.0
  %1262 = vmatpush.xpose.msra.mxu0 0.0
  %1263 = vmatpush.xpose.msra.mxu0 0.0
  %1264 = vmatpush.xpose.msra.mxu0 0.0
  %1265 = vmatpush.xpose.msra.mxu0 0.0
  %1266 = vmatpush.xpose.msra.mxu0 0.0
  %1267 = vmatpush.xpose.msra.mxu0 %v268
  %1268 = vmatpush.xpose.msra.mxu0 %v265
  %1269 = vmatmul.f32.gmra.mxu0 %v1251
  %v1270 = vpop.f32.mrf.mxu0
  %v1271 = vadd.f32 0.0, %v1270
  %1272 = vdwg.mxu0
  %1273 = vmatpush.msra.mxu0 0.0
  %1274 = vmatpush.msra.mxu0 0.0
  %1275 = vmatpush.msra.mxu0 0.0
  %1276 = vmatpush.msra.mxu0 0.0
  %1277 = vmatpush.msra.mxu0 0.0
  %1278 = vmatpush.msra.mxu0 0.0
  %1279 = vmatpush.msra.mxu0 0.0
  %1280 = vmatpush.msra.mxu0 0.0
  %1281 = vmatpush.msra.mxu0 0.0
  %1282 = vmatpush.msra.mxu0 0.0
  %1283 = vmatpush.msra.mxu0 0.0
  %1284 = vmatpush.msra.mxu0 0.0
  %1285 = vmatpush.msra.mxu0 %v1216
  %1286 = vmatpush.msra.mxu0 %v1215
  %1287 = vmatpush.msra.mxu0 %v1214
  %1288 = vmatpush.msra.mxu0 %v1213
  %1289 = vmatmul.f32.gmra.mxu0 %v242
  %v1290 = vpop.f32.mrf.mxu0
  %v1291 = vadd.f32 0.0, %v1290
  %1292 = vdwg.mxu0
  %vm1293 = vcmp.gt.f32.partialorder %v1217, 0.0
  %1295 = vset.pattern.permute.xlu0 0
  %1296 = vperm.xlu0 %1295, %v1291
  %v1297 = vpop.permute.xlu0 %1296
  %v1299 = vperm.slane %v1271, 0
  %v1300 = vadd.f32 %v1297, %v1299
  %vm1301 = vcmp.gt.f32.partialorder %v1300, 0.0
  %v1302 = vmul.f32 %v1300, 0.2
  %v1303 = vsel %vm1301, %v1300, %v1302
  %v1304 = vsel %vm1293, %v1303, -1e+30
  %vm1305 = vcmask 97280
  %v1306 = vsel %vm1305, %v1304, -inf
  %1307 = vmax.xlane.f32.xlu0 %v1306
  %v1308 = vpop.xlane.xlu0 %1307
  %v1309 = vsub.f32 %v1303, %v1308
  %v1310 = vsel %vm1293, %v1309, 0.0
  %v1311 = vmul.f32 %v1310, 1.442695
  %v1312 = vpow.pop %v1311
  %v1313 = vmul.f32 %v1217, %v1312
  %v1314 = vsel %vm1305, %v1313, 0.0
  %1315 = vadd.xlane.f32.xlu0 %v1314
  %v1316 = vpop.xlane.xlu0 %1315
  %vm1317 = vcmp.gt.f32.partialorder %v1316, 0.0
  %v1318 = vmax.f32 %v1316, 1e-30
  %v1319 = vrcp.pop %v1318
  %v1320 = vmul.f32 %v1318, %v1319
  %v1321 = vsub.f32 1.0, %v1320
  %v1322 = vmul.f32 %v1319, %v1321
  %v1323 = vadd.f32 %v1319, %v1322
  %vm1324 = vweird.f32 %v1318
  %vm1325 = vweird.f32 %v1319
  %vm1326 = vmor %vm1324, %vm1325
  %v1327 = vsel %vm1326, %v1319, %v1323
  %v1328 = vand.u32 2147483647, %v1318
  %vm1329 = vcmp.eq.f32.partialorder %v1328, 8.507059e+37
  %v1330 = vand.u32 %v1318, 2147483648
  %v1331 = vor.u32 1.1754944e-38, %v1330
  %v1332 = vsel %vm1329, %v1331, %v1327
  %v1333 = vmul.f32 %v1313, %v1332
  %v1334 = vsel %vm1317, 1, 0
  %vm1335 = vcmp.eq.s32.totalorder %v1334, 1
  %v1336 = vsel %vm1335, %v1333, 0.0
  %v1337 = vmul.f32 %v190, %v380
  %v1338 = vmul.f32 %v193, %v380
  %1339 = vset.pattern.permute.xlu0 1
  %1340 = vperm.xlu0 %1339, %v1291
  %v1341 = vpop.permute.xlu0 %1340
  %v1343 = vperm.slane %v1271, 1
  %v1344 = vadd.f32 %v1341, %v1343
  %vm1345 = vcmp.gt.f32.partialorder %v1344, 0.0
  %v1346 = vmul.f32 %v1344, 0.2
  %v1347 = vsel %vm1345, %v1344, %v1346
  %v1348 = vsel %vm1293, %v1347, -1e+30
  %v1349 = vsel %vm1305, %v1348, -inf
  %1350 = vmax.xlane.f32.xlu0 %v1349
  %v1351 = vpop.xlane.xlu0 %1350
  %v1352 = vsub.f32 %v1347, %v1351
  %v1353 = vsel %vm1293, %v1352, 0.0
  %v1354 = vmul.f32 %v1353, 1.442695
  %v1355 = vpow.pop %v1354
  %v1356 = vmul.f32 %v1217, %v1355
  %v1357 = vsel %vm1305, %v1356, 0.0
  %1358 = vadd.xlane.f32.xlu0 %v1357
  %v1359 = vpop.xlane.xlu0 %1358
  %vm1360 = vcmp.gt.f32.partialorder %v1359, 0.0
  %v1361 = vmax.f32 %v1359, 1e-30
  %v1362 = vrcp.pop %v1361
  %v1363 = vmul.f32 %v1361, %v1362
  %v1364 = vsub.f32 1.0, %v1363
  %v1365 = vmul.f32 %v1362, %v1364
  %v1366 = vadd.f32 %v1362, %v1365
  %vm1367 = vweird.f32 %v1361
  %vm1368 = vweird.f32 %v1362
  %vm1369 = vmor %vm1367, %vm1368
  %v1370 = vsel %vm1369, %v1362, %v1366
  %v1371 = vand.u32 2147483647, %v1361
  %vm1372 = vcmp.eq.f32.partialorder %v1371, 8.507059e+37
  %v1373 = vand.u32 %v1361, 2147483648
  %v1374 = vor.u32 1.1754944e-38, %v1373
  %v1375 = vsel %vm1372, %v1374, %v1370
  %v1376 = vmul.f32 %v1356, %v1375
  %v1377 = vsel %vm1360, 1, 0
  %vm1378 = vcmp.eq.s32.totalorder %v1377, 1
  %v1379 = vsel %vm1378, %v1376, 0.0
  %v1380 = vmul.f32 %v190, %v463
  %v1381 = vmul.f32 %v193, %v463
  %v1383 = vsel %vm1305, %v1379, 0
  %vm1385 = vcmask 1043456
  %v1387 = vsel %vm1385, %v1381, 0
  %1389 = vmatpush.msra.mxu0 0.0
  %1390 = vmatpush.msra.mxu0 0.0
  %1391 = vmatpush.msra.mxu0 0.0
  %1392 = vmatpush.msra.mxu0 0.0
  %1393 = vmatpush.msra.mxu0 0.0
  %1394 = vmatpush.msra.mxu0 0.0
  %1395 = vmatpush.msra.mxu0 0.0
  %1396 = vmatpush.msra.mxu0 0.0
  %1397 = vmatpush.msra.mxu0 0.0
  %1398 = vmatpush.msra.mxu0 0.0
  %1399 = vmatpush.msra.mxu0 0.0
  %1400 = vmatpush.msra.mxu0 0.0
  %1401 = vmatpush.msra.mxu0 0.0
  %1402 = vmatpush.msra.mxu0 0.0
  %1403 = vmatpush.msra.mxu0 %v1387
  %1404 = vmatpush.msra.mxu0 %v1380
  %1405 = vmatmul.f32.gmra.mxu0 %v1383
  %v1406 = vpop.f32.mrf.mxu0
  %v1407 = vadd.f32 0.0, %v1406
  %1408 = vdwg.mxu0
  %v1410 = vsel %vm1305, %v1336, 0
  %v1413 = vsel %vm1385, %v1338, 0
  %1415 = vmatpush.msra.mxu0 0.0
  %1416 = vmatpush.msra.mxu0 0.0
  %1417 = vmatpush.msra.mxu0 0.0
  %1418 = vmatpush.msra.mxu0 0.0
  %1419 = vmatpush.msra.mxu0 0.0
  %1420 = vmatpush.msra.mxu0 0.0
  %1421 = vmatpush.msra.mxu0 0.0
  %1422 = vmatpush.msra.mxu0 0.0
  %1423 = vmatpush.msra.mxu0 0.0
  %1424 = vmatpush.msra.mxu0 0.0
  %1425 = vmatpush.msra.mxu0 0.0
  %1426 = vmatpush.msra.mxu0 0.0
  %1427 = vmatpush.msra.mxu0 0.0
  %1428 = vmatpush.msra.mxu0 0.0
  %1429 = vmatpush.msra.mxu0 %v1413
  %1430 = vmatpush.msra.mxu0 %v1337
  %1431 = vmatmul.f32.gmra.mxu0 %v1410
  %v1432 = vpop.f32.mrf.mxu0
  %v1433 = vadd.f32 %v1407, %v1432
  %1434 = vdwg.mxu0
  %1435 = vset.pattern.permute.xlu0 2
  %1436 = vperm.xlu0 %1435, %v1291
  %v1437 = vpop.permute.xlu0 %1436
  %v1439 = vperm.slane %v1271, 2
  %v1440 = vadd.f32 %v1437, %v1439
  %vm1441 = vcmp.gt.f32.partialorder %v1440, 0.0
  %v1442 = vmul.f32 %v1440, 0.2
  %v1443 = vsel %vm1441, %v1440, %v1442
  %v1444 = vsel %vm1293, %v1443, -1e+30
  %v1445 = vsel %vm1305, %v1444, -inf
  %1446 = vmax.xlane.f32.xlu0 %v1445
  %v1447 = vpop.xlane.xlu0 %1446
  %v1448 = vsub.f32 %v1443, %v1447
  %v1449 = vsel %vm1293, %v1448, 0.0
  %v1450 = vmul.f32 %v1449, 1.442695
  %v1451 = vpow.pop %v1450
  %v1452 = vmul.f32 %v1217, %v1451
  %v1453 = vsel %vm1305, %v1452, 0.0
  %1454 = vadd.xlane.f32.xlu0 %v1453
  %v1455 = vpop.xlane.xlu0 %1454
  %vm1456 = vcmp.gt.f32.partialorder %v1455, 0.0
  %v1457 = vmax.f32 %v1455, 1e-30
  %v1458 = vrcp.pop %v1457
  %v1459 = vmul.f32 %v1457, %v1458
  %v1460 = vsub.f32 1.0, %v1459
  %v1461 = vmul.f32 %v1458, %v1460
  %v1462 = vadd.f32 %v1458, %v1461
  %vm1463 = vweird.f32 %v1457
  %vm1464 = vweird.f32 %v1458
  %vm1465 = vmor %vm1463, %vm1464
  %v1466 = vsel %vm1465, %v1458, %v1462
  %v1467 = vand.u32 2147483647, %v1457
  %vm1468 = vcmp.eq.f32.partialorder %v1467, 8.507059e+37
  %v1469 = vand.u32 %v1457, 2147483648
  %v1470 = vor.u32 1.1754944e-38, %v1469
  %v1471 = vsel %vm1468, %v1470, %v1466
  %v1472 = vmul.f32 %v1452, %v1471
  %v1473 = vsel %vm1456, 1, 0
  %vm1474 = vcmp.eq.s32.totalorder %v1473, 1
  %v1475 = vsel %vm1474, %v1472, 0.0
  %v1476 = vmul.f32 %v190, %v604
  %v1477 = vmul.f32 %v193, %v604
  %v1479 = vsel %vm1305, %v1475, 0
  %v1482 = vsel %vm1385, %v1477, 0
  %1484 = vmatpush.msra.mxu0 0.0
  %1485 = vmatpush.msra.mxu0 0.0
  %1486 = vmatpush.msra.mxu0 0.0
  %1487 = vmatpush.msra.mxu0 0.0
  %1488 = vmatpush.msra.mxu0 0.0
  %1489 = vmatpush.msra.mxu0 0.0
  %1490 = vmatpush.msra.mxu0 0.0
  %1491 = vmatpush.msra.mxu0 0.0
  %1492 = vmatpush.msra.mxu0 0.0
  %1493 = vmatpush.msra.mxu0 0.0
  %1494 = vmatpush.msra.mxu0 0.0
  %1495 = vmatpush.msra.mxu0 0.0
  %1496 = vmatpush.msra.mxu0 0.0
  %1497 = vmatpush.msra.mxu0 0.0
  %1498 = vmatpush.msra.mxu0 %v1482
  %1499 = vmatpush.msra.mxu0 %v1476
  %1500 = vmatmul.f32.gmra.mxu0 %v1479
  %v1501 = vpop.f32.mrf.mxu0
  %v1502 = vadd.f32 0.0, %v1501
  %1503 = vdwg.mxu0
  %v1504 = vadd.f32 %v1433, %v1502
  %1505 = vset.pattern.permute.xlu0 3
  %1506 = vperm.xlu0 %1505, %v1291
  %v1507 = vpop.permute.xlu0 %1506
  %v1509 = vperm.slane %v1271, 3
  %v1510 = vadd.f32 %v1507, %v1509
  %vm1511 = vcmp.gt.f32.partialorder %v1510, 0.0
  %v1512 = vmul.f32 %v1510, 0.2
  %v1513 = vsel %vm1511, %v1510, %v1512
  %v1514 = vsel %vm1293, %v1513, -1e+30
  %v1515 = vsel %vm1305, %v1514, -inf
  %1516 = vmax.xlane.f32.xlu0 %v1515
  %v1517 = vpop.xlane.xlu0 %1516
  %v1518 = vsub.f32 %v1513, %v1517
  %v1519 = vsel %vm1293, %v1518, 0.0
  %v1520 = vmul.f32 %v1519, 1.442695
  %v1521 = vpow.pop %v1520
  %v1522 = vmul.f32 %v1217, %v1521
  %v1523 = vsel %vm1305, %v1522, 0.0
  %1524 = vadd.xlane.f32.xlu0 %v1523
  %v1525 = vpop.xlane.xlu0 %1524
  %vm1526 = vcmp.gt.f32.partialorder %v1525, 0.0
  %v1527 = vmax.f32 %v1525, 1e-30
  %v1528 = vrcp.pop %v1527
  %v1529 = vmul.f32 %v1527, %v1528
  %v1530 = vsub.f32 1.0, %v1529
  %v1531 = vmul.f32 %v1528, %v1530
  %v1532 = vadd.f32 %v1528, %v1531
  %vm1533 = vweird.f32 %v1527
  %vm1534 = vweird.f32 %v1528
  %vm1535 = vmor %vm1533, %vm1534
  %v1536 = vsel %vm1535, %v1528, %v1532
  %v1537 = vand.u32 2147483647, %v1527
  %vm1538 = vcmp.eq.f32.partialorder %v1537, 8.507059e+37
  %v1539 = vand.u32 %v1527, 2147483648
  %v1540 = vor.u32 1.1754944e-38, %v1539
  %v1541 = vsel %vm1538, %v1540, %v1536
  %v1542 = vmul.f32 %v1522, %v1541
  %v1543 = vsel %vm1526, 1, 0
  %vm1544 = vcmp.eq.s32.totalorder %v1543, 1
  %v1545 = vsel %vm1544, %v1542, 0.0
  %v1546 = vmul.f32 %v190, %v718
  %v1547 = vmul.f32 %v193, %v718
  %v1549 = vsel %vm1305, %v1545, 0
  %v1552 = vsel %vm1385, %v1547, 0
  %1554 = vmatpush.msra.mxu0 0.0
  %1555 = vmatpush.msra.mxu0 0.0
  %1556 = vmatpush.msra.mxu0 0.0
  %1557 = vmatpush.msra.mxu0 0.0
  %1558 = vmatpush.msra.mxu0 0.0
  %1559 = vmatpush.msra.mxu0 0.0
  %1560 = vmatpush.msra.mxu0 0.0
  %1561 = vmatpush.msra.mxu0 0.0
  %1562 = vmatpush.msra.mxu0 0.0
  %1563 = vmatpush.msra.mxu0 0.0
  %1564 = vmatpush.msra.mxu0 0.0
  %1565 = vmatpush.msra.mxu0 0.0
  %1566 = vmatpush.msra.mxu0 0.0
  %1567 = vmatpush.msra.mxu0 0.0
  %1568 = vmatpush.msra.mxu0 %v1552
  %1569 = vmatpush.msra.mxu0 %v1546
  %1570 = vmatmul.f32.gmra.mxu0 %v1549
  %v1571 = vpop.f32.mrf.mxu0
  %v1572 = vadd.f32 0.0, %v1571
  %1573 = vdwg.mxu0
  %v1574 = vadd.f32 %v1504, %v1572
  %1575 = vset.pattern.permute.xlu0 4
  %1576 = vperm.xlu0 %1575, %v1291
  %v1577 = vpop.permute.xlu0 %1576
  %v1579 = vperm.slane %v1271, 4
  %v1580 = vadd.f32 %v1577, %v1579
  %vm1581 = vcmp.gt.f32.partialorder %v1580, 0.0
  %v1582 = vmul.f32 %v1580, 0.2
  %v1583 = vsel %vm1581, %v1580, %v1582
  %v1584 = vsel %vm1293, %v1583, -1e+30
  %v1585 = vsel %vm1305, %v1584, -inf
  %1586 = vmax.xlane.f32.xlu0 %v1585
  %v1587 = vpop.xlane.xlu0 %1586
  %v1588 = vsub.f32 %v1583, %v1587
  %v1589 = vsel %vm1293, %v1588, 0.0
  %v1590 = vmul.f32 %v1589, 1.442695
  %v1591 = vpow.pop %v1590
  %v1592 = vmul.f32 %v1217, %v1591
  %v1593 = vsel %vm1305, %v1592, 0.0
  %1594 = vadd.xlane.f32.xlu0 %v1593
  %v1595 = vpop.xlane.xlu0 %1594
  %vm1596 = vcmp.gt.f32.partialorder %v1595, 0.0
  %v1597 = vmax.f32 %v1595, 1e-30
  %v1598 = vrcp.pop %v1597
  %v1599 = vmul.f32 %v1597, %v1598
  %v1600 = vsub.f32 1.0, %v1599
  %v1601 = vmul.f32 %v1598, %v1600
  %v1602 = vadd.f32 %v1598, %v1601
  %vm1603 = vweird.f32 %v1597
  %vm1604 = vweird.f32 %v1598
  %vm1605 = vmor %vm1603, %vm1604
  %v1606 = vsel %vm1605, %v1598, %v1602
  %v1607 = vand.u32 2147483647, %v1597
  %vm1608 = vcmp.eq.f32.partialorder %v1607, 8.507059e+37
  %v1609 = vand.u32 %v1597, 2147483648
  %v1610 = vor.u32 1.1754944e-38, %v1609
  %v1611 = vsel %vm1608, %v1610, %v1606
  %v1612 = vmul.f32 %v1592, %v1611
  %v1613 = vsel %vm1596, 1, 0
  %vm1614 = vcmp.eq.s32.totalorder %v1613, 1
  %v1615 = vsel %vm1614, %v1612, 0.0
  %v1616 = vmul.f32 %v190, %v832
  %v1617 = vmul.f32 %v193, %v832
  %v1619 = vsel %vm1305, %v1615, 0
  %v1622 = vsel %vm1385, %v1617, 0
  %1624 = vmatpush.msra.mxu0 0.0
  %1625 = vmatpush.msra.mxu0 0.0
  %1626 = vmatpush.msra.mxu0 0.0
  %1627 = vmatpush.msra.mxu0 0.0
  %1628 = vmatpush.msra.mxu0 0.0
  %1629 = vmatpush.msra.mxu0 0.0
  %1630 = vmatpush.msra.mxu0 0.0
  %1631 = vmatpush.msra.mxu0 0.0
  %1632 = vmatpush.msra.mxu0 0.0
  %1633 = vmatpush.msra.mxu0 0.0
  %1634 = vmatpush.msra.mxu0 0.0
  %1635 = vmatpush.msra.mxu0 0.0
  %1636 = vmatpush.msra.mxu0 0.0
  %1637 = vmatpush.msra.mxu0 0.0
  %1638 = vmatpush.msra.mxu0 %v1622
  %1639 = vmatpush.msra.mxu0 %v1616
  %1640 = vmatmul.f32.gmra.mxu0 %v1619
  %v1641 = vpop.f32.mrf.mxu0
  %v1642 = vadd.f32 0.0, %v1641
  %1643 = vdwg.mxu0
  %v1644 = vadd.f32 %v1574, %v1642
  %1645 = vset.pattern.permute.xlu0 5
  %1646 = vperm.xlu0 %1645, %v1291
  %v1647 = vpop.permute.xlu0 %1646
  %v1649 = vperm.slane %v1271, 5
  %v1650 = vadd.f32 %v1647, %v1649
  %vm1651 = vcmp.gt.f32.partialorder %v1650, 0.0
  %v1652 = vmul.f32 %v1650, 0.2
  %v1653 = vsel %vm1651, %v1650, %v1652
  %v1654 = vsel %vm1293, %v1653, -1e+30
  %v1655 = vsel %vm1305, %v1654, -inf
  %1656 = vmax.xlane.f32.xlu0 %v1655
  %v1657 = vpop.xlane.xlu0 %1656
  %v1658 = vsub.f32 %v1653, %v1657
  %v1659 = vsel %vm1293, %v1658, 0.0
  %v1660 = vmul.f32 %v1659, 1.442695
  %v1661 = vpow.pop %v1660
  %v1662 = vmul.f32 %v1217, %v1661
  %v1663 = vsel %vm1305, %v1662, 0.0
  %1664 = vadd.xlane.f32.xlu0 %v1663
  %v1665 = vpop.xlane.xlu0 %1664
  %vm1666 = vcmp.gt.f32.partialorder %v1665, 0.0
  %v1667 = vmax.f32 %v1665, 1e-30
  %v1668 = vrcp.pop %v1667
  %v1669 = vmul.f32 %v1667, %v1668
  %v1670 = vsub.f32 1.0, %v1669
  %v1671 = vmul.f32 %v1668, %v1670
  %v1672 = vadd.f32 %v1668, %v1671
  %vm1673 = vweird.f32 %v1667
  %vm1674 = vweird.f32 %v1668
  %vm1675 = vmor %vm1673, %vm1674
  %v1676 = vsel %vm1675, %v1668, %v1672
  %v1677 = vand.u32 2147483647, %v1667
  %vm1678 = vcmp.eq.f32.partialorder %v1677, 8.507059e+37
  %v1679 = vand.u32 %v1667, 2147483648
  %v1680 = vor.u32 1.1754944e-38, %v1679
  %v1681 = vsel %vm1678, %v1680, %v1676
  %v1682 = vmul.f32 %v1662, %v1681
  %v1683 = vsel %vm1666, 1, 0
  %vm1684 = vcmp.eq.s32.totalorder %v1683, 1
  %v1685 = vsel %vm1684, %v1682, 0.0
  %v1686 = vmul.f32 %v190, %v946
  %v1687 = vmul.f32 %v193, %v946
  %v1689 = vsel %vm1305, %v1685, 0
  %v1692 = vsel %vm1385, %v1687, 0
  %1694 = vmatpush.msra.mxu0 0.0
  %1695 = vmatpush.msra.mxu0 0.0
  %1696 = vmatpush.msra.mxu0 0.0
  %1697 = vmatpush.msra.mxu0 0.0
  %1698 = vmatpush.msra.mxu0 0.0
  %1699 = vmatpush.msra.mxu0 0.0
  %1700 = vmatpush.msra.mxu0 0.0
  %1701 = vmatpush.msra.mxu0 0.0
  %1702 = vmatpush.msra.mxu0 0.0
  %1703 = vmatpush.msra.mxu0 0.0
  %1704 = vmatpush.msra.mxu0 0.0
  %1705 = vmatpush.msra.mxu0 0.0
  %1706 = vmatpush.msra.mxu0 0.0
  %1707 = vmatpush.msra.mxu0 0.0
  %1708 = vmatpush.msra.mxu0 %v1692
  %1709 = vmatpush.msra.mxu0 %v1686
  %1710 = vmatmul.f32.gmra.mxu0 %v1689
  %v1711 = vpop.f32.mrf.mxu0
  %v1712 = vadd.f32 0.0, %v1711
  %1713 = vdwg.mxu0
  %v1714 = vadd.f32 %v1644, %v1712
  %1715 = vset.pattern.permute.xlu0 6
  %1716 = vperm.xlu0 %1715, %v1291
  %v1717 = vpop.permute.xlu0 %1716
  %v1719 = vperm.slane %v1271, 6
  %v1720 = vadd.f32 %v1717, %v1719
  %vm1721 = vcmp.gt.f32.partialorder %v1720, 0.0
  %v1722 = vmul.f32 %v1720, 0.2
  %v1723 = vsel %vm1721, %v1720, %v1722
  %v1724 = vsel %vm1293, %v1723, -1e+30
  %v1725 = vsel %vm1305, %v1724, -inf
  %1726 = vmax.xlane.f32.xlu0 %v1725
  %v1727 = vpop.xlane.xlu0 %1726
  %v1728 = vsub.f32 %v1723, %v1727
  %v1729 = vsel %vm1293, %v1728, 0.0
  %v1730 = vmul.f32 %v1729, 1.442695
  %v1731 = vpow.pop %v1730
  %v1732 = vmul.f32 %v1217, %v1731
  %v1733 = vsel %vm1305, %v1732, 0.0
  %1734 = vadd.xlane.f32.xlu0 %v1733
  %v1735 = vpop.xlane.xlu0 %1734
  %vm1736 = vcmp.gt.f32.partialorder %v1735, 0.0
  %v1737 = vmax.f32 %v1735, 1e-30
  %v1738 = vrcp.pop %v1737
  %v1739 = vmul.f32 %v1737, %v1738
  %v1740 = vsub.f32 1.0, %v1739
  %v1741 = vmul.f32 %v1738, %v1740
  %v1742 = vadd.f32 %v1738, %v1741
  %vm1743 = vweird.f32 %v1737
  %vm1744 = vweird.f32 %v1738
  %vm1745 = vmor %vm1743, %vm1744
  %v1746 = vsel %vm1745, %v1738, %v1742
  %v1747 = vand.u32 2147483647, %v1737
  %vm1748 = vcmp.eq.f32.partialorder %v1747, 8.507059e+37
  %v1749 = vand.u32 %v1737, 2147483648
  %v1750 = vor.u32 1.1754944e-38, %v1749
  %v1751 = vsel %vm1748, %v1750, %v1746
  %v1752 = vmul.f32 %v1732, %v1751
  %v1753 = vsel %vm1736, 1, 0
  %vm1754 = vcmp.eq.s32.totalorder %v1753, 1
  %v1755 = vsel %vm1754, %v1752, 0.0
  %v1756 = vmul.f32 %v190, %v1060
  %v1757 = vmul.f32 %v193, %v1060
  %v1759 = vsel %vm1305, %v1755, 0
  %v1762 = vsel %vm1385, %v1757, 0
  %1764 = vmatpush.msra.mxu0 0.0
  %1765 = vmatpush.msra.mxu0 0.0
  %1766 = vmatpush.msra.mxu0 0.0
  %1767 = vmatpush.msra.mxu0 0.0
  %1768 = vmatpush.msra.mxu0 0.0
  %1769 = vmatpush.msra.mxu0 0.0
  %1770 = vmatpush.msra.mxu0 0.0
  %1771 = vmatpush.msra.mxu0 0.0
  %1772 = vmatpush.msra.mxu0 0.0
  %1773 = vmatpush.msra.mxu0 0.0
  %1774 = vmatpush.msra.mxu0 0.0
  %1775 = vmatpush.msra.mxu0 0.0
  %1776 = vmatpush.msra.mxu0 0.0
  %1777 = vmatpush.msra.mxu0 0.0
  %1778 = vmatpush.msra.mxu0 %v1762
  %1779 = vmatpush.msra.mxu0 %v1756
  %1780 = vmatmul.f32.gmra.mxu0 %v1759
  %v1781 = vpop.f32.mrf.mxu0
  %v1782 = vadd.f32 0.0, %v1781
  %1783 = vdwg.mxu0
  %v1784 = vadd.f32 %v1714, %v1782
  %1785 = vset.pattern.permute.xlu0 7
  %1786 = vperm.xlu0 %1785, %v1291
  %v1787 = vpop.permute.xlu0 %1786
  %v1789 = vperm.slane %v1271, 7
  %v1790 = vadd.f32 %v1787, %v1789
  %vm1791 = vcmp.gt.f32.partialorder %v1790, 0.0
  %v1792 = vmul.f32 %v1790, 0.2
  %v1793 = vsel %vm1791, %v1790, %v1792
  %v1794 = vsel %vm1293, %v1793, -1e+30
  %v1795 = vsel %vm1305, %v1794, -inf
  %1796 = vmax.xlane.f32.xlu0 %v1795
  %v1797 = vpop.xlane.xlu0 %1796
  %v1798 = vsub.f32 %v1793, %v1797
  %v1799 = vsel %vm1293, %v1798, 0.0
  %v1800 = vmul.f32 %v1799, 1.442695
  %v1801 = vpow.pop %v1800
  %v1802 = vmul.f32 %v1217, %v1801
  %v1803 = vsel %vm1305, %v1802, 0.0
  %1804 = vadd.xlane.f32.xlu0 %v1803
  %v1805 = vpop.xlane.xlu0 %1804
  %vm1806 = vcmp.gt.f32.partialorder %v1805, 0.0
  %v1807 = vmax.f32 %v1805, 1e-30
  %v1808 = vrcp.pop %v1807
  %v1809 = vmul.f32 %v1807, %v1808
  %v1810 = vsub.f32 1.0, %v1809
  %v1811 = vmul.f32 %v1808, %v1810
  %v1812 = vadd.f32 %v1808, %v1811
  %vm1813 = vweird.f32 %v1807
  %vm1814 = vweird.f32 %v1808
  %vm1815 = vmor %vm1813, %vm1814
  %v1816 = vsel %vm1815, %v1808, %v1812
  %v1817 = vand.u32 2147483647, %v1807
  %vm1818 = vcmp.eq.f32.partialorder %v1817, 8.507059e+37
  %v1819 = vand.u32 %v1807, 2147483648
  %v1820 = vor.u32 1.1754944e-38, %v1819
  %v1821 = vsel %vm1818, %v1820, %v1816
  %v1822 = vmul.f32 %v1802, %v1821
  %v1823 = vsel %vm1806, 1, 0
  %vm1824 = vcmp.eq.s32.totalorder %v1823, 1
  %v1825 = vsel %vm1824, %v1822, 0.0
  %v1826 = vmul.f32 %v190, %v1174
  %v1827 = vmul.f32 %v193, %v1174
  %v1829 = vsel %vm1305, %v1825, 0
  %v1832 = vsel %vm1385, %v1827, 0
  %1834 = vmatpush.msra.mxu0 0.0
  %1835 = vmatpush.msra.mxu0 0.0
  %1836 = vmatpush.msra.mxu0 0.0
  %1837 = vmatpush.msra.mxu0 0.0
  %1838 = vmatpush.msra.mxu0 0.0
  %1839 = vmatpush.msra.mxu0 0.0
  %1840 = vmatpush.msra.mxu0 0.0
  %1841 = vmatpush.msra.mxu0 0.0
  %1842 = vmatpush.msra.mxu0 0.0
  %1843 = vmatpush.msra.mxu0 0.0
  %1844 = vmatpush.msra.mxu0 0.0
  %1845 = vmatpush.msra.mxu0 0.0
  %1846 = vmatpush.msra.mxu0 0.0
  %1847 = vmatpush.msra.mxu0 0.0
  %1848 = vmatpush.msra.mxu0 %v1832
  %1849 = vmatpush.msra.mxu0 %v1826
  %1850 = vmatmul.f32.gmra.mxu0 %v1829
  %v1851 = vpop.f32.mrf.mxu0
  %v1852 = vadd.f32 0.0, %v1851
  %1853 = vdwg.mxu0
  %v1854 = vadd.f32 %v1784, %v1852
  %v1855 = vmax.f32 %v1854, 0.0
  %v1856 = vld [vmem:[%s27] sm:$0x1]
  %v1857 = vld [vmem:[%s29] sm:$0x1]
  %v1858 = vsel %vm237, %v1855, 0.0
  %v1859 = vrot.slane %v1858, 4
  %v1860 = vadd.f32 %v1858, %v1859
  %v1861 = vrot.slane %v1860, 2
  %v1862 = vadd.f32 %v1860, %v1861
  %v1863 = vrot.slane %v1862, 1
  %v1864 = vadd.f32 %v1862, %v1863
  %v1865 = vrcp.pop 8.0
  %v1866 = vmul.f32 8.0, %v1865
  %v1867 = vsub.f32 1.0, %v1866
  %v1868 = vmul.f32 %v1865, %v1867
  %v1869 = vadd.f32 %v1865, %v1868
  %vm1870 = vweird.f32 %v1865
  %v1871 = vsel %vm1870, %v1865, %v1869
  %v1872 = vmul.f32 %v1864, %v1871
  %v1873 = vsub.f32 %v1855, %v1872
  %v1874 = vmul.f32 %v1873, %v1873
  %v1875 = vsel %vm237, %v1874, 0.0
  %v1876 = vrot.slane %v1875, 4
  %v1877 = vadd.f32 %v1875, %v1876
  %v1878 = vrot.slane %v1877, 2
  %v1879 = vadd.f32 %v1877, %v1878
  %v1880 = vrot.slane %v1879, 1
  %v1881 = vadd.f32 %v1879, %v1880
  %v1882 = vmul.f32 %v1881, %v1871
  %v1883 = vadd.f32 %v1882, 1e-05
  %v1884 = vrsqrt.pop %v1883
  %v1885 = vmul.f32 %v1884, %v1883
  %v1886 = vmul.f32 %v1885, %v1884
  %v1887 = vmul.f32 0.5, %v1886
  %v1888 = vsub.f32 1.5, %v1887
  %v1889 = vmul.f32 %v1884, %v1888
  %vm1890 = vweird.f32 %v1883
  %vm1891 = vweird.f32 %v1884
  %vm1892 = vmor %vm1890, %vm1891
  %v1893 = vsel %vm1892, %v1884, %v1889
  %v1894 = vmul.f32 %v1873, %v1893
  %v1896 = vperm.slane %v1856, 0
  %v1898 = vmul.f32 %v1894, %v1896
  %v1900 = vperm.slane %v1857, 0
  %v1902 = vadd.f32 %v1898, %v1900
  %v1903 = vmax.f32 %v1902, 0.0
  %v1904 = vld [vmem:[%s31] sm:$0xff]
  %v1905 = vld [vmem:[%s31 + $0x8] sm:$0xff]
  %v1906 = vld [vmem:[%s31 + $0x10] sm:$0xff]
  %v1907 = vld [vmem:[%s31 + $0x18] sm:$0xff]
  %v1909 = vsel %vm237, %v1903, 0
  %1911 = vmatpush.msra.mxu0 0.0
  %1912 = vmatpush.msra.mxu0 0.0
  %1913 = vmatpush.msra.mxu0 0.0
  %1914 = vmatpush.msra.mxu0 0.0
  %1915 = vmatpush.msra.mxu0 0.0
  %1916 = vmatpush.msra.mxu0 0.0
  %1917 = vmatpush.msra.mxu0 0.0
  %1918 = vmatpush.msra.mxu0 0.0
  %1919 = vmatpush.msra.mxu0 0.0
  %1920 = vmatpush.msra.mxu0 0.0
  %1921 = vmatpush.msra.mxu0 0.0
  %1922 = vmatpush.msra.mxu0 0.0
  %1923 = vmatpush.msra.mxu0 %v1907
  %1924 = vmatpush.msra.mxu0 %v1906
  %1925 = vmatpush.msra.mxu0 %v1905
  %1926 = vmatpush.msra.mxu0 %v1904
  %1927 = vmatmul.f32.gmra.mxu0 %v1909
  %v1928 = vpop.f32.mrf.mxu0
  %v1929 = vadd.f32 0.0, %v1928
  %1930 = vdwg.mxu0
  %v1931 = vld [vmem:[%s33] sm:$0x1]
  %v1932 = vld [vmem:[%s35] sm:$0x1]
  %v1933 = vsel %vm134, %v1929, 0.0
  %v1934 = vrot.slane %v1933, 4
  %v1935 = vadd.f32 %v1933, %v1934
  %v1936 = vrot.slane %v1935, 2
  %v1937 = vadd.f32 %v1935, %v1936
  %v1938 = vrot.slane %v1937, 1
  %v1939 = vadd.f32 %v1937, %v1938
  %v1940 = vmul.f32 %v1939, %v1871
  %v1941 = vsub.f32 %v1929, %v1940
  %v1942 = vmul.f32 %v1941, %v1941
  %v1943 = vsel %vm134, %v1942, 0.0
  %v1944 = vrot.slane %v1943, 4
  %v1945 = vadd.f32 %v1943, %v1944
  %v1946 = vrot.slane %v1945, 2
  %v1947 = vadd.f32 %v1945, %v1946
  %v1948 = vrot.slane %v1947, 1
  %v1949 = vadd.f32 %v1947, %v1948
  %v1950 = vmul.f32 %v1949, %v1871
  %v1951 = vadd.f32 %v1950, 1e-05
  %v1952 = vrsqrt.pop %v1951
  %v1953 = vmul.f32 %v1952, %v1951
  %v1954 = vmul.f32 %v1953, %v1952
  %v1955 = vmul.f32 0.5, %v1954
  %v1956 = vsub.f32 1.5, %v1955
  %v1957 = vmul.f32 %v1952, %v1956
  %vm1958 = vweird.f32 %v1951
  %vm1959 = vweird.f32 %v1952
  %vm1960 = vmor %vm1958, %vm1959
  %v1961 = vsel %vm1960, %v1952, %v1957
  %v1962 = vmul.f32 %v1941, %v1961
  %v1964 = vperm.slane %v1931, 0
  %v1966 = vmul.f32 %v1962, %v1964
  %v1968 = vperm.slane %v1932, 0
  %v1970 = vadd.f32 %v1966, %v1968
  %v1971 = vmax.f32 %v1970, 0.0
  %v1972 = vld [vmem:[%s37] sm:$0xff]
  %v1973 = vld [vmem:[%s37 + $0x8] sm:$0xff]
  %v1974 = vld [vmem:[%s37 + $0x10] sm:$0xff]
  %v1975 = vld [vmem:[%s37 + $0x18] sm:$0xff]
  %v1976 = vld [vmem:[%s39] sm:$0x3]
  %v1978 = vperm.slane %v1976, 0
  %v1979 = vperm.slane %v1976, 1
  %v1983 = vsel %vm134, %v1971, 0
  %1985 = vmatpush.msra.mxu0 0.0
  %1986 = vmatpush.msra.mxu0 0.0
  %1987 = vmatpush.msra.mxu0 0.0
  %1988 = vmatpush.msra.mxu0 0.0
  %1989 = vmatpush.msra.mxu0 0.0
  %1990 = vmatpush.msra.mxu0 0.0
  %1991 = vmatpush.msra.mxu0 0.0
  %1992 = vmatpush.msra.mxu0 0.0
  %1993 = vmatpush.msra.mxu0 0.0
  %1994 = vmatpush.msra.mxu0 0.0
  %1995 = vmatpush.msra.mxu0 0.0
  %1996 = vmatpush.msra.mxu0 0.0
  %1997 = vmatpush.msra.mxu0 0.0
  %1998 = vmatpush.msra.mxu0 0.0
  %1999 = vmatpush.msra.mxu0 %v1974
  %2000 = vmatpush.msra.mxu0 %v1972
  %2001 = vmatmul.f32.gmra.mxu0 %v1983
  %v2002 = vpop.f32.mrf.mxu0
  %v2003 = vadd.f32 %v1978, %v2002
  %2004 = vdwg.mxu0
  %2005 = vmatpush.msra.mxu0 0.0
  %2006 = vmatpush.msra.mxu0 0.0
  %2007 = vmatpush.msra.mxu0 0.0
  %2008 = vmatpush.msra.mxu0 0.0
  %2009 = vmatpush.msra.mxu0 0.0
  %2010 = vmatpush.msra.mxu0 0.0
  %2011 = vmatpush.msra.mxu0 0.0
  %2012 = vmatpush.msra.mxu0 0.0
  %2013 = vmatpush.msra.mxu0 0.0
  %2014 = vmatpush.msra.mxu0 0.0
  %2015 = vmatpush.msra.mxu0 0.0
  %2016 = vmatpush.msra.mxu0 0.0
  %2017 = vmatpush.msra.mxu0 0.0
  %2018 = vmatpush.msra.mxu0 0.0
  %2019 = vmatpush.msra.mxu0 %v1975
  %2020 = vmatpush.msra.mxu0 %v1973
  %2021 = vmatmul.f32.gmra.mxu0 %v1983
  %v2022 = vpop.f32.mrf.mxu0
  %v2023 = vadd.f32 %v1979, %v2022
  %2024 = vdwg.mxu0
  %v2025 = vld [vmem:[%s41] sm:$0x3]
  %v2026 = vld [vmem:[%s43] sm:$0x3]
  %v2027 = vrot.slane %v2003, 4
  %v2028 = vadd.f32 %v2003, %v2027
  %v2029 = vrot.slane %v2028, 2
  %v2030 = vadd.f32 %v2028, %v2029
  %v2031 = vrot.slane %v2030, 1
  %v2032 = vadd.f32 %v2030, %v2031
  %v2033 = vrot.slane %v2023, 4
  %v2034 = vadd.f32 %v2023, %v2033
  %v2035 = vrot.slane %v2034, 2
  %v2036 = vadd.f32 %v2034, %v2035
  %v2037 = vrot.slane %v2036, 1
  %v2038 = vadd.f32 %v2036, %v2037
  %v2039 = vmul.f32 %v2032, %v1871
  %v2040 = vmul.f32 %v2038, %v1871
  %v2041 = vsub.f32 %v2003, %v2039
  %v2042 = vsub.f32 %v2023, %v2040
  %v2043 = vmul.f32 %v2041, %v2041
  %v2044 = vmul.f32 %v2042, %v2042
  %v2045 = vrot.slane %v2043, 4
  %v2046 = vadd.f32 %v2043, %v2045
  %v2047 = vrot.slane %v2046, 2
  %v2048 = vadd.f32 %v2046, %v2047
  %v2049 = vrot.slane %v2048, 1
  %v2050 = vadd.f32 %v2048, %v2049
  %v2051 = vrot.slane %v2044, 4
  %v2052 = vadd.f32 %v2044, %v2051
  %v2053 = vrot.slane %v2052, 2
  %v2054 = vadd.f32 %v2052, %v2053
  %v2055 = vrot.slane %v2054, 1
  %v2056 = vadd.f32 %v2054, %v2055
  %v2057 = vmul.f32 %v2050, %v1871
  %v2058 = vmul.f32 %v2056, %v1871
  %v2059 = vadd.f32 %v2057, 1e-05
  %v2060 = vadd.f32 %v2058, 1e-05
  %v2061 = vrsqrt.pop %v2059
  %v2062 = vmul.f32 %v2061, %v2059
  %v2063 = vmul.f32 %v2062, %v2061
  %v2064 = vmul.f32 0.5, %v2063
  %v2065 = vsub.f32 1.5, %v2064
  %v2066 = vmul.f32 %v2061, %v2065
  %vm2067 = vweird.f32 %v2059
  %vm2068 = vweird.f32 %v2061
  %vm2069 = vmor %vm2067, %vm2068
  %v2070 = vsel %vm2069, %v2061, %v2066
  %v2071 = vrsqrt.pop %v2060
  %v2072 = vmul.f32 %v2071, %v2060
  %v2073 = vmul.f32 %v2072, %v2071
  %v2074 = vmul.f32 0.5, %v2073
  %v2075 = vsub.f32 1.5, %v2074
  %v2076 = vmul.f32 %v2071, %v2075
  %vm2077 = vweird.f32 %v2060
  %vm2078 = vweird.f32 %v2071
  %vm2079 = vmor %vm2077, %vm2078
  %v2080 = vsel %vm2079, %v2071, %v2076
  %v2081 = vmul.f32 %v2041, %v2070
  %v2082 = vmul.f32 %v2042, %v2080
  %v2084 = vperm.slane %v2025, 0
  %v2085 = vperm.slane %v2025, 1
  %v2088 = vmul.f32 %v2081, %v2084
  %v2089 = vmul.f32 %v2082, %v2085
  %v2091 = vperm.slane %v2026, 0
  %v2092 = vperm.slane %v2026, 1
  %v2095 = vadd.f32 %v2088, %v2091
  %v2096 = vadd.f32 %v2089, %v2092
  %v2097 = vmax.f32 %v2095, 0.0
  %v2098 = vmax.f32 %v2096, 0.0
  %v2099 = vld [vmem:[%s45] sm:$0xff]
  %v2100 = vld [vmem:[%s45 + $0x8] sm:$0xff]
  %v2101 = vld [vmem:[%s45 + $0x10] sm:$0xff]
  %v2102 = vld [vmem:[%s45 + $0x18] sm:$0xff]
  %v2103 = vld [vmem:[%s45 + $0x20] sm:$0xff]
  %v2104 = vld [vmem:[%s45 + $0x28] sm:$0xff]
  %v2105 = vld [vmem:[%s45 + $0x30] sm:$0xff]
  %v2106 = vld [vmem:[%s45 + $0x38] sm:$0xff]
  %v2107 = vld [vmem:[%s45 + $0x40] sm:$0xff]
  %v2108 = vld [vmem:[%s45 + $0x48] sm:$0xff]
  %v2109 = vld [vmem:[%s45 + $0x50] sm:$0xff]
  %v2110 = vld [vmem:[%s45 + $0x58] sm:$0xff]
  %v2111 = vld [vmem:[%s45 + $0x60] sm:$0xff]
  %v2112 = vld [vmem:[%s45 + $0x68] sm:$0xff]
  %v2113 = vld [vmem:[%s45 + $0x70] sm:$0xff]
  %v2114 = vld [vmem:[%s45 + $0x78] sm:$0xff]
  %v2115 = vld [vmem:[%s45 + $0x80] sm:$0xff]
  %v2116 = vld [vmem:[%s45 + $0x88] sm:$0xff]
  %v2117 = vld [vmem:[%s45 + $0x90] sm:$0xff]
  %v2118 = vld [vmem:[%s45 + $0x98] sm:$0xff]
  %v2119 = vld [vmem:[%s45 + $0xa0] sm:$0xff]
  %v2120 = vld [vmem:[%s45 + $0xa8] sm:$0xff]
  %v2121 = vld [vmem:[%s45 + $0xb0] sm:$0xff]
  %v2122 = vld [vmem:[%s45 + $0xb8] sm:$0xff]
  %v2123 = vld [vmem:[%s45 + $0xc0] sm:$0xff]
  %v2124 = vld [vmem:[%s45 + $0xc8] sm:$0xff]
  %v2125 = vld [vmem:[%s45 + $0xd0] sm:$0xff]
  %v2126 = vld [vmem:[%s45 + $0xd8] sm:$0xff]
  %v2127 = vld [vmem:[%s45 + $0xe0] sm:$0xff]
  %v2128 = vld [vmem:[%s45 + $0xe8] sm:$0xff]
  %v2129 = vld [vmem:[%s45 + $0xf0] sm:$0xff]
  %v2130 = vld [vmem:[%s45 + $0xf8] sm:$0xff]
  %v2131 = vld [vmem:[%s45 + $0x100] sm:$0xff]
  %v2132 = vld [vmem:[%s45 + $0x108] sm:$0xff]
  %v2133 = vld [vmem:[%s45 + $0x110] sm:$0xff]
  %v2134 = vld [vmem:[%s45 + $0x118] sm:$0xff]
  %v2135 = vld [vmem:[%s45 + $0x120] sm:$0xff]
  %v2136 = vld [vmem:[%s45 + $0x128] sm:$0xff]
  %v2137 = vld [vmem:[%s45 + $0x130] sm:$0xff]
  %v2138 = vld [vmem:[%s45 + $0x138] sm:$0xff]
  %v2139 = vld [vmem:[%s45 + $0x140] sm:$0xff]
  %v2140 = vld [vmem:[%s45 + $0x148] sm:$0xff]
  %v2141 = vld [vmem:[%s45 + $0x150] sm:$0xff]
  %v2142 = vld [vmem:[%s45 + $0x158] sm:$0xff]
  %v2143 = vld [vmem:[%s45 + $0x160] sm:$0xff]
  %v2144 = vld [vmem:[%s45 + $0x168] sm:$0xff]
  %v2145 = vld [vmem:[%s45 + $0x170] sm:$0xff]
  %v2146 = vld [vmem:[%s45 + $0x178] sm:$0xff]
  %v2147 = vld [vmem:[%s45 + $0x180] sm:$0xff]
  %v2148 = vld [vmem:[%s45 + $0x188] sm:$0xff]
  %v2149 = vld [vmem:[%s45 + $0x190] sm:$0xff]
  %v2150 = vld [vmem:[%s45 + $0x198] sm:$0xff]
  %v2151 = vld [vmem:[%s45 + $0x1a0] sm:$0xff]
  %v2152 = vld [vmem:[%s45 + $0x1a8] sm:$0xff]
  %v2153 = vld [vmem:[%s45 + $0x1b0] sm:$0xff]
  %v2154 = vld [vmem:[%s45 + $0x1b8] sm:$0xff]
  %v2155 = vld [vmem:[%s45 + $0x1c0] sm:$0xff]
  %v2156 = vld [vmem:[%s45 + $0x1c8] sm:$0xff]
  %v2157 = vld [vmem:[%s45 + $0x1d0] sm:$0xff]
  %v2158 = vld [vmem:[%s45 + $0x1d8] sm:$0xff]
  %v2159 = vld [vmem:[%s45 + $0x1e0] sm:$0xff]
  %v2160 = vld [vmem:[%s45 + $0x1e8] sm:$0xff]
  %v2161 = vld [vmem:[%s45 + $0x1f0] sm:$0xff]
  %v2162 = vld [vmem:[%s45 + $0x1f8] sm:$0xff]
  %v2163 = vld [vmem:[%s47] sm:$0x3]
  %v2165 = vperm.slane %v2163, 0
  %v2166 = vperm.slane %v2163, 1
  %2169 = vmatpush.msra.mxu0 %v2129
  %2170 = vmatpush.msra.mxu0 %v2127
  %2171 = vmatpush.msra.mxu0 %v2125
  %2172 = vmatpush.msra.mxu0 %v2123
  %2173 = vmatpush.msra.mxu0 %v2121
  %2174 = vmatpush.msra.mxu0 %v2119
  %2175 = vmatpush.msra.mxu0 %v2117
  %2176 = vmatpush.msra.mxu0 %v2115
  %2177 = vmatpush.msra.mxu0 %v2113
  %2178 = vmatpush.msra.mxu0 %v2111
  %2179 = vmatpush.msra.mxu0 %v2109
  %2180 = vmatpush.msra.mxu0 %v2107
  %2181 = vmatpush.msra.mxu0 %v2105
  %2182 = vmatpush.msra.mxu0 %v2103
  %2183 = vmatpush.msra.mxu0 %v2101
  %2184 = vmatpush.msra.mxu0 %v2099
  %2185 = vmatmul.f32.gmra.mxu0 %v2097
  %v2186 = vpop.f32.mrf.mxu0
  %v2187 = vadd.f32 %v2165, %v2186
  %2188 = vdwg.mxu0
  %2189 = vmatpush.msra.mxu0 %v2161
  %2190 = vmatpush.msra.mxu0 %v2159
  %2191 = vmatpush.msra.mxu0 %v2157
  %2192 = vmatpush.msra.mxu0 %v2155
  %2193 = vmatpush.msra.mxu0 %v2153
  %2194 = vmatpush.msra.mxu0 %v2151
  %2195 = vmatpush.msra.mxu0 %v2149
  %2196 = vmatpush.msra.mxu0 %v2147
  %2197 = vmatpush.msra.mxu0 %v2145
  %2198 = vmatpush.msra.mxu0 %v2143
  %2199 = vmatpush.msra.mxu0 %v2141
  %2200 = vmatpush.msra.mxu0 %v2139
  %2201 = vmatpush.msra.mxu0 %v2137
  %2202 = vmatpush.msra.mxu0 %v2135
  %2203 = vmatpush.msra.mxu0 %v2133
  %2204 = vmatpush.msra.mxu0 %v2131
  %2205 = vmatmul.f32.gmra.mxu0 %v2098
  %v2206 = vpop.f32.mrf.mxu0
  %v2207 = vadd.f32 %v2187, %v2206
  %2208 = vdwg.mxu0
  %2209 = vmatpush.msra.mxu0 %v2130
  %2210 = vmatpush.msra.mxu0 %v2128
  %2211 = vmatpush.msra.mxu0 %v2126
  %2212 = vmatpush.msra.mxu0 %v2124
  %2213 = vmatpush.msra.mxu0 %v2122
  %2214 = vmatpush.msra.mxu0 %v2120
  %2215 = vmatpush.msra.mxu0 %v2118
  %2216 = vmatpush.msra.mxu0 %v2116
  %2217 = vmatpush.msra.mxu0 %v2114
  %2218 = vmatpush.msra.mxu0 %v2112
  %2219 = vmatpush.msra.mxu0 %v2110
  %2220 = vmatpush.msra.mxu0 %v2108
  %2221 = vmatpush.msra.mxu0 %v2106
  %2222 = vmatpush.msra.mxu0 %v2104
  %2223 = vmatpush.msra.mxu0 %v2102
  %2224 = vmatpush.msra.mxu0 %v2100
  %2225 = vmatmul.f32.gmra.mxu0 %v2097
  %v2226 = vpop.f32.mrf.mxu0
  %v2227 = vadd.f32 %v2166, %v2226
  %2228 = vdwg.mxu0
  %2229 = vmatpush.msra.mxu0 %v2162
  %2230 = vmatpush.msra.mxu0 %v2160
  %2231 = vmatpush.msra.mxu0 %v2158
  %2232 = vmatpush.msra.mxu0 %v2156
  %2233 = vmatpush.msra.mxu0 %v2154
  %2234 = vmatpush.msra.mxu0 %v2152
  %2235 = vmatpush.msra.mxu0 %v2150
  %2236 = vmatpush.msra.mxu0 %v2148
  %2237 = vmatpush.msra.mxu0 %v2146
  %2238 = vmatpush.msra.mxu0 %v2144
  %2239 = vmatpush.msra.mxu0 %v2142
  %2240 = vmatpush.msra.mxu0 %v2140
  %2241 = vmatpush.msra.mxu0 %v2138
  %2242 = vmatpush.msra.mxu0 %v2136
  %2243 = vmatpush.msra.mxu0 %v2134
  %2244 = vmatpush.msra.mxu0 %v2132
  %2245 = vmatmul.f32.gmra.mxu0 %v2098
  %v2246 = vpop.f32.mrf.mxu0
  %v2247 = vadd.f32 %v2227, %v2246
  %2248 = vdwg.mxu0
  %v2249 = vrot.slane %v2207, 4
  %v2250 = vadd.f32 %v2207, %v2249
  %v2251 = vrot.slane %v2250, 2
  %v2252 = vadd.f32 %v2250, %v2251
  %v2253 = vrot.slane %v2252, 1
  %v2254 = vadd.f32 %v2252, %v2253
  %v2255 = vrot.slane %v2247, 4
  %v2256 = vadd.f32 %v2247, %v2255
  %v2257 = vrot.slane %v2256, 2
  %v2258 = vadd.f32 %v2256, %v2257
  %v2259 = vrot.slane %v2258, 1
  %v2260 = vadd.f32 %v2258, %v2259
  %v2261 = vmul.f32 %v2254, %v1871
  %v2262 = vmul.f32 %v2260, %v1871
  %v2263 = vsub.f32 %v2207, %v2261
  %v2264 = vsub.f32 %v2247, %v2262
  %v2265 = vmul.f32 %v2263, %v2263
  %v2266 = vmul.f32 %v2264, %v2264
  %v2267 = vrot.slane %v2265, 4
  %v2268 = vadd.f32 %v2265, %v2267
  %v2269 = vrot.slane %v2268, 2
  %v2270 = vadd.f32 %v2268, %v2269
  %v2271 = vrot.slane %v2270, 1
  %v2272 = vadd.f32 %v2270, %v2271
  %v2273 = vrot.slane %v2266, 4
  %v2274 = vadd.f32 %v2266, %v2273
  %v2275 = vrot.slane %v2274, 2
  %v2276 = vadd.f32 %v2274, %v2275
  %v2277 = vrot.slane %v2276, 1
  %v2278 = vadd.f32 %v2276, %v2277
  %v2279 = vmul.f32 %v2272, %v1871
  %v2280 = vmul.f32 %v2278, %v1871
  %v2281 = vadd.f32 %v2279, 1e-05
  %v2282 = vadd.f32 %v2280, 1e-05
  %v2283 = vrsqrt.pop %v2281
  %v2284 = vmul.f32 %v2283, %v2281
  %v2285 = vmul.f32 %v2284, %v2283
  %v2286 = vmul.f32 0.5, %v2285
  %v2287 = vsub.f32 1.5, %v2286
  %v2288 = vmul.f32 %v2283, %v2287
  %vm2289 = vweird.f32 %v2281
  %vm2290 = vweird.f32 %v2283
  %vm2291 = vmor %vm2289, %vm2290
  %v2292 = vsel %vm2291, %v2283, %v2288
  %v2293 = vrsqrt.pop %v2282
  %v2294 = vmul.f32 %v2293, %v2282
  %v2295 = vmul.f32 %v2294, %v2293
  %v2296 = vmul.f32 0.5, %v2295
  %v2297 = vsub.f32 1.5, %v2296
  %v2298 = vmul.f32 %v2293, %v2297
  %vm2299 = vweird.f32 %v2282
  %vm2300 = vweird.f32 %v2293
  %vm2301 = vmor %vm2299, %vm2300
  %v2302 = vsel %vm2301, %v2293, %v2298
  %v2303 = vmul.f32 %v2263, %v2292
  %v2304 = vmul.f32 %v2264, %v2302
  %v2305 = vmul.f32 %v2303, %v2084
  %v2306 = vmul.f32 %v2304, %v2085
  %v2307 = vadd.f32 %v2305, %v2091
  %v2308 = vadd.f32 %v2306, %v2092
  %v2309 = vmax.f32 %v2307, 0.0
  %v2310 = vmax.f32 %v2308, 0.0
  %v2311 = vld [vmem:[%s49] sm:$0xff]
  %v2312 = vld [vmem:[%s49 + $0x8] sm:$0xff]
  %v2313 = vld [vmem:[%s49 + $0x10] sm:$0xff]
  %v2314 = vld [vmem:[%s49 + $0x18] sm:$0xff]
  %v2315 = vld [vmem:[%s49 + $0x20] sm:$0xff]
  %v2316 = vld [vmem:[%s49 + $0x28] sm:$0xff]
  %v2317 = vld [vmem:[%s49 + $0x30] sm:$0xff]
  %v2318 = vld [vmem:[%s49 + $0x38] sm:$0xff]
  %v2319 = vld [vmem:[%s49 + $0x40] sm:$0xff]
  %v2320 = vld [vmem:[%s49 + $0x48] sm:$0xff]
  %v2321 = vld [vmem:[%s49 + $0x50] sm:$0xff]
  %v2322 = vld [vmem:[%s49 + $0x58] sm:$0xff]
  %v2323 = vld [vmem:[%s49 + $0x60] sm:$0xff]
  %v2324 = vld [vmem:[%s49 + $0x68] sm:$0xff]
  %v2325 = vld [vmem:[%s49 + $0x70] sm:$0xff]
  %v2326 = vld [vmem:[%s49 + $0x78] sm:$0xff]
  %v2327 = vld [vmem:[%s49 + $0x80] sm:$0xff]
  %v2328 = vld [vmem:[%s49 + $0x88] sm:$0xff]
  %v2329 = vld [vmem:[%s49 + $0x90] sm:$0xff]
  %v2330 = vld [vmem:[%s49 + $0x98] sm:$0xff]
  %v2331 = vld [vmem:[%s49 + $0xa0] sm:$0xff]
  %v2332 = vld [vmem:[%s49 + $0xa8] sm:$0xff]
  %v2333 = vld [vmem:[%s49 + $0xb0] sm:$0xff]
  %v2334 = vld [vmem:[%s49 + $0xb8] sm:$0xff]
  %v2335 = vld [vmem:[%s49 + $0xc0] sm:$0xff]
  %v2336 = vld [vmem:[%s49 + $0xc8] sm:$0xff]
  %v2337 = vld [vmem:[%s49 + $0xd0] sm:$0xff]
  %v2338 = vld [vmem:[%s49 + $0xd8] sm:$0xff]
  %v2339 = vld [vmem:[%s49 + $0xe0] sm:$0xff]
  %v2340 = vld [vmem:[%s49 + $0xe8] sm:$0xff]
  %v2341 = vld [vmem:[%s49 + $0xf0] sm:$0xff]
  %v2342 = vld [vmem:[%s49 + $0xf8] sm:$0xff]
  %v2343 = vld [vmem:[%s51] sm:$0x1]
  %v2345 = vperm.slane %v2343, 0
  %2347 = vmatpush.msra.mxu0 %v2326
  %2348 = vmatpush.msra.mxu0 %v2325
  %2349 = vmatpush.msra.mxu0 %v2324
  %2350 = vmatpush.msra.mxu0 %v2323
  %2351 = vmatpush.msra.mxu0 %v2322
  %2352 = vmatpush.msra.mxu0 %v2321
  %2353 = vmatpush.msra.mxu0 %v2320
  %2354 = vmatpush.msra.mxu0 %v2319
  %2355 = vmatpush.msra.mxu0 %v2318
  %2356 = vmatpush.msra.mxu0 %v2317
  %2357 = vmatpush.msra.mxu0 %v2316
  %2358 = vmatpush.msra.mxu0 %v2315
  %2359 = vmatpush.msra.mxu0 %v2314
  %2360 = vmatpush.msra.mxu0 %v2313
  %2361 = vmatpush.msra.mxu0 %v2312
  %2362 = vmatpush.msra.mxu0 %v2311
  %2363 = vmatmul.f32.gmra.mxu0 %v2309
  %v2364 = vpop.f32.mrf.mxu0
  %v2365 = vadd.f32 %v2345, %v2364
  %2366 = vdwg.mxu0
  %2367 = vmatpush.msra.mxu0 %v2342
  %2368 = vmatpush.msra.mxu0 %v2341
  %2369 = vmatpush.msra.mxu0 %v2340
  %2370 = vmatpush.msra.mxu0 %v2339
  %2371 = vmatpush.msra.mxu0 %v2338
  %2372 = vmatpush.msra.mxu0 %v2337
  %2373 = vmatpush.msra.mxu0 %v2336
  %2374 = vmatpush.msra.mxu0 %v2335
  %2375 = vmatpush.msra.mxu0 %v2334
  %2376 = vmatpush.msra.mxu0 %v2333
  %2377 = vmatpush.msra.mxu0 %v2332
  %2378 = vmatpush.msra.mxu0 %v2331
  %2379 = vmatpush.msra.mxu0 %v2330
  %2380 = vmatpush.msra.mxu0 %v2329
  %2381 = vmatpush.msra.mxu0 %v2328
  %2382 = vmatpush.msra.mxu0 %v2327
  %2383 = vmatmul.f32.gmra.mxu0 %v2310
  %v2384 = vpop.f32.mrf.mxu0
  %v2385 = vadd.f32 %v2365, %v2384
  %2386 = vdwg.mxu0
  %v2387 = vld [vmem:[%s53] sm:$0x1]
  %v2388 = vld [vmem:[%s55] sm:$0x1]
  %vm2389 = vcmask 523264
  %v2390 = vsel %vm2389, %v2385, 0.0
  %v2391 = vrot.slane %v2390, 4
  %v2392 = vadd.f32 %v2390, %v2391
  %v2393 = vrot.slane %v2392, 2
  %v2394 = vadd.f32 %v2392, %v2393
  %v2395 = vrot.slane %v2394, 1
  %v2396 = vadd.f32 %v2394, %v2395
  %v2397 = vmul.f32 %v2396, %v1871
  %v2398 = vsub.f32 %v2385, %v2397
  %v2399 = vmul.f32 %v2398, %v2398
  %v2400 = vsel %vm2389, %v2399, 0.0
  %v2401 = vrot.slane %v2400, 4
  %v2402 = vadd.f32 %v2400, %v2401
  %v2403 = vrot.slane %v2402, 2
  %v2404 = vadd.f32 %v2402, %v2403
  %v2405 = vrot.slane %v2404, 1
  %v2406 = vadd.f32 %v2404, %v2405
  %v2407 = vmul.f32 %v2406, %v1871
  %v2408 = vadd.f32 %v2407, 1e-05
  %v2409 = vrsqrt.pop %v2408
  %v2410 = vmul.f32 %v2409, %v2408
  %v2411 = vmul.f32 %v2410, %v2409
  %v2412 = vmul.f32 0.5, %v2411
  %v2413 = vsub.f32 1.5, %v2412
  %v2414 = vmul.f32 %v2409, %v2413
  %vm2415 = vweird.f32 %v2408
  %vm2416 = vweird.f32 %v2409
  %vm2417 = vmor %vm2415, %vm2416
  %v2418 = vsel %vm2417, %v2409, %v2414
  %v2419 = vmul.f32 %v2398, %v2418
  %v2421 = vperm.slane %v2387, 0
  %v2423 = vmul.f32 %v2419, %v2421
  %v2425 = vperm.slane %v2388, 0
  %v2427 = vadd.f32 %v2423, %v2425
  %v2428 = vmax.f32 %v2427, 0.0
  %v2429 = vsel %vm237, %v1207, 0.0
  %vm2430 = vcmask 257024
  %v2431 = vsel %vm2430, %v1208, 0.0
  %v2432 = vadd.f32 %v2429, %v2431
  %v2433 = vrot.slane %v2432, 4
  %v2434 = vadd.f32 %v2432, %v2433
  %v2435 = vrot.slane %v2434, 2
  %v2436 = vadd.f32 %v2434, %v2435
  %v2437 = vrot.slane %v2436, 1
  %v2438 = vadd.f32 %v2436, %v2437
  %v2439 = vrcp.pop 12.0
  %v2440 = vmul.f32 12.0, %v2439
  %v2441 = vsub.f32 1.0, %v2440
  %v2442 = vmul.f32 %v2439, %v2441
  %v2443 = vadd.f32 %v2439, %v2442
  %vm2444 = vweird.f32 %v2439
  %v2445 = vsel %vm2444, %v2439, %v2443
  %v2446 = vmul.f32 %v2438, %v2445
  %v2447 = vsub.f32 %v1207, %v2446
  %v2448 = vsub.f32 %v1208, %v2446
  %v2449 = vmul.f32 %v2447, %v2447
  %v2450 = vmul.f32 %v2448, %v2448
  %v2451 = vsel %vm237, %v2449, 0.0
  %v2452 = vsel %vm2430, %v2450, 0.0
  %v2453 = vadd.f32 %v2451, %v2452
  %v2454 = vrot.slane %v2453, 4
  %v2455 = vadd.f32 %v2453, %v2454
  %v2456 = vrot.slane %v2455, 2
  %v2457 = vadd.f32 %v2455, %v2456
  %v2458 = vrot.slane %v2457, 1
  %v2459 = vadd.f32 %v2457, %v2458
  %v2460 = vmul.f32 %v2459, %v2445
  %v2461 = vadd.f32 %v2460, 1e-05
  %v2462 = vrsqrt.pop %v2461
  %v2463 = vmul.f32 %v2462, %v2461
  %v2464 = vmul.f32 %v2463, %v2462
  %v2465 = vmul.f32 0.5, %v2464
  %v2466 = vsub.f32 1.5, %v2465
  %v2467 = vmul.f32 %v2462, %v2466
  %vm2468 = vweird.f32 %v2461
  %vm2469 = vweird.f32 %v2462
  %vm2470 = vmor %vm2468, %vm2469
  %v2471 = vsel %vm2470, %v2462, %v2467
  %v2472 = vmul.f32 %v2447, %v2471
  %v2473 = vmul.f32 %v2448, %v2471
  %v2474 = vmul.f32 %v2472, %v1896
  %v2475 = vmul.f32 %v2473, %v1896
  %v2476 = vadd.f32 %v2474, %v1900
  %v2477 = vadd.f32 %v2475, %v1900
  %v2478 = vmax.f32 %v2476, 0.0
  %v2479 = vmax.f32 %v2477, 0.0
  %v2481 = vsel %vm237, %v2478, 0
  %v2484 = vsel %vm237, %v2479, 0
  %2486 = vmatpush.msra.mxu0 0.0
  %2487 = vmatpush.msra.mxu0 0.0
  %2488 = vmatpush.msra.mxu0 0.0
  %2489 = vmatpush.msra.mxu0 0.0
  %2490 = vmatpush.msra.mxu0 0.0
  %2491 = vmatpush.msra.mxu0 0.0
  %2492 = vmatpush.msra.mxu0 0.0
  %2493 = vmatpush.msra.mxu0 0.0
  %2494 = vmatpush.msra.mxu0 0.0
  %2495 = vmatpush.msra.mxu0 0.0
  %2496 = vmatpush.msra.mxu0 0.0
  %2497 = vmatpush.msra.mxu0 0.0
  %2498 = vmatpush.msra.mxu0 %v1907
  %2499 = vmatpush.msra.mxu0 %v1906
  %2500 = vmatpush.msra.mxu0 %v1905
  %2501 = vmatpush.msra.mxu0 %v1904
  %2502 = vmatmul.f32.gmra.mxu0 %v2481
  %v2503 = vpop.f32.mrf.mxu0
  %v2504 = vadd.f32 0.0, %v2503
  %2505 = vmatmul.f32.gmra.mxu0 %v2484
  %v2506 = vpop.f32.mrf.mxu0
  %v2507 = vadd.f32 0.0, %v2506
  %2508 = vdwg.mxu0
  %v2509 = vsel %vm134, %v2504, 0.0
  %vm2510 = vcmask 125952
  %v2511 = vsel %vm2510, %v2507, 0.0
  %v2512 = vadd.f32 %v2509, %v2511
  %v2513 = vrot.slane %v2512, 4
  %v2514 = vadd.f32 %v2512, %v2513
  %v2515 = vrot.slane %v2514, 2
  %v2516 = vadd.f32 %v2514, %v2515
  %v2517 = vrot.slane %v2516, 1
  %v2518 = vadd.f32 %v2516, %v2517
  %v2519 = vmul.f32 %v2518, %v2445
  %v2520 = vsub.f32 %v2504, %v2519
  %v2521 = vsub.f32 %v2507, %v2519
  %v2522 = vmul.f32 %v2520, %v2520
  %v2523 = vmul.f32 %v2521, %v2521
  %v2524 = vsel %vm134, %v2522, 0.0
  %v2525 = vsel %vm2510, %v2523, 0.0
  %v2526 = vadd.f32 %v2524, %v2525
  %v2527 = vrot.slane %v2526, 4
  %v2528 = vadd.f32 %v2526, %v2527
  %v2529 = vrot.slane %v2528, 2
  %v2530 = vadd.f32 %v2528, %v2529
  %v2531 = vrot.slane %v2530, 1
  %v2532 = vadd.f32 %v2530, %v2531
  %v2533 = vmul.f32 %v2532, %v2445
  %v2534 = vadd.f32 %v2533, 1e-05
  %v2535 = vrsqrt.pop %v2534
  %v2536 = vmul.f32 %v2535, %v2534
  %v2537 = vmul.f32 %v2536, %v2535
  %v2538 = vmul.f32 0.5, %v2537
  %v2539 = vsub.f32 1.5, %v2538
  %v2540 = vmul.f32 %v2535, %v2539
  %vm2541 = vweird.f32 %v2534
  %vm2542 = vweird.f32 %v2535
  %vm2543 = vmor %vm2541, %vm2542
  %v2544 = vsel %vm2543, %v2535, %v2540
  %v2545 = vmul.f32 %v2520, %v2544
  %v2546 = vmul.f32 %v2521, %v2544
  %v2547 = vmul.f32 %v2545, %v1964
  %v2548 = vmul.f32 %v2546, %v1964
  %v2549 = vadd.f32 %v2547, %v1968
  %v2550 = vadd.f32 %v2548, %v1968
  %v2551 = vmax.f32 %v2549, 0.0
  %v2552 = vmax.f32 %v2550, 0.0
  %v2554 = vsel %vm134, %v2551, 0
  %v2557 = vsel %vm134, %v2552, 0
  %2559 = vmatpush.msra.mxu0 0.0
  %2560 = vmatpush.msra.mxu0 0.0
  %2561 = vmatpush.msra.mxu0 0.0
  %2562 = vmatpush.msra.mxu0 0.0
  %2563 = vmatpush.msra.mxu0 0.0
  %2564 = vmatpush.msra.mxu0 0.0
  %2565 = vmatpush.msra.mxu0 0.0
  %2566 = vmatpush.msra.mxu0 0.0
  %2567 = vmatpush.msra.mxu0 0.0
  %2568 = vmatpush.msra.mxu0 0.0
  %2569 = vmatpush.msra.mxu0 0.0
  %2570 = vmatpush.msra.mxu0 0.0
  %2571 = vmatpush.msra.mxu0 0.0
  %2572 = vmatpush.msra.mxu0 0.0
  %2573 = vmatpush.msra.mxu0 %v1974
  %2574 = vmatpush.msra.mxu0 %v1972
  %2575 = vmatmul.f32.gmra.mxu0 %v2554
  %v2576 = vpop.f32.mrf.mxu0
  %v2577 = vadd.f32 %v1978, %v2576
  %2578 = vmatmul.f32.gmra.mxu0 %v2557
  %v2579 = vpop.f32.mrf.mxu0
  %v2580 = vadd.f32 %v1978, %v2579
  %2581 = vdwg.mxu0
  %2582 = vmatpush.msra.mxu0 0.0
  %2583 = vmatpush.msra.mxu0 0.0
  %2584 = vmatpush.msra.mxu0 0.0
  %2585 = vmatpush.msra.mxu0 0.0
  %2586 = vmatpush.msra.mxu0 0.0
  %2587 = vmatpush.msra.mxu0 0.0
  %2588 = vmatpush.msra.mxu0 0.0
  %2589 = vmatpush.msra.mxu0 0.0
  %2590 = vmatpush.msra.mxu0 0.0
  %2591 = vmatpush.msra.mxu0 0.0
  %2592 = vmatpush.msra.mxu0 0.0
  %2593 = vmatpush.msra.mxu0 0.0
  %2594 = vmatpush.msra.mxu0 0.0
  %2595 = vmatpush.msra.mxu0 0.0
  %2596 = vmatpush.msra.mxu0 %v1975
  %2597 = vmatpush.msra.mxu0 %v1973
  %2598 = vmatmul.f32.gmra.mxu0 %v2554
  %v2599 = vpop.f32.mrf.mxu0
  %v2600 = vadd.f32 %v1979, %v2599
  %2601 = vmatmul.f32.gmra.mxu0 %v2557
  %v2602 = vpop.f32.mrf.mxu0
  %v2603 = vadd.f32 %v1979, %v2602
  %2604 = vdwg.mxu0
  %v2605 = vsel %vm1385, %v2580, 0.0
  %v2606 = vadd.f32 %v2577, %v2605
  %v2607 = vrot.slane %v2606, 4
  %v2608 = vadd.f32 %v2606, %v2607
  %v2609 = vrot.slane %v2608, 2
  %v2610 = vadd.f32 %v2608, %v2609
  %v2611 = vrot.slane %v2610, 1
  %v2612 = vadd.f32 %v2610, %v2611
  %v2613 = vsel %vm1385, %v2603, 0.0
  %v2614 = vadd.f32 %v2600, %v2613
  %v2615 = vrot.slane %v2614, 4
  %v2616 = vadd.f32 %v2614, %v2615
  %v2617 = vrot.slane %v2616, 2
  %v2618 = vadd.f32 %v2616, %v2617
  %v2619 = vrot.slane %v2618, 1
  %v2620 = vadd.f32 %v2618, %v2619
  %v2621 = vmul.f32 %v2612, %v2445
  %v2622 = vmul.f32 %v2620, %v2445
  %v2623 = vsub.f32 %v2577, %v2621
  %v2624 = vsub.f32 %v2600, %v2622
  %v2625 = vsub.f32 %v2580, %v2621
  %v2626 = vsub.f32 %v2603, %v2622
  %v2627 = vmul.f32 %v2623, %v2623
  %v2628 = vmul.f32 %v2624, %v2624
  %v2629 = vmul.f32 %v2625, %v2625
  %v2630 = vmul.f32 %v2626, %v2626
  %v2631 = vsel %vm1385, %v2629, 0.0
  %v2632 = vadd.f32 %v2627, %v2631
  %v2633 = vrot.slane %v2632, 4
  %v2634 = vadd.f32 %v2632, %v2633
  %v2635 = vrot.slane %v2634, 2
  %v2636 = vadd.f32 %v2634, %v2635
  %v2637 = vrot.slane %v2636, 1
  %v2638 = vadd.f32 %v2636, %v2637
  %v2639 = vsel %vm1385, %v2630, 0.0
  %v2640 = vadd.f32 %v2628, %v2639
  %v2641 = vrot.slane %v2640, 4
  %v2642 = vadd.f32 %v2640, %v2641
  %v2643 = vrot.slane %v2642, 2
  %v2644 = vadd.f32 %v2642, %v2643
  %v2645 = vrot.slane %v2644, 1
  %v2646 = vadd.f32 %v2644, %v2645
  %v2647 = vmul.f32 %v2638, %v2445
  %v2648 = vmul.f32 %v2646, %v2445
  %v2649 = vadd.f32 %v2647, 1e-05
  %v2650 = vadd.f32 %v2648, 1e-05
  %v2651 = vrsqrt.pop %v2649
  %v2652 = vmul.f32 %v2651, %v2649
  %v2653 = vmul.f32 %v2652, %v2651
  %v2654 = vmul.f32 0.5, %v2653
  %v2655 = vsub.f32 1.5, %v2654
  %v2656 = vmul.f32 %v2651, %v2655
  %vm2657 = vweird.f32 %v2649
  %vm2658 = vweird.f32 %v2651
  %vm2659 = vmor %vm2657, %vm2658
  %v2660 = vsel %vm2659, %v2651, %v2656
  %v2661 = vrsqrt.pop %v2650
  %v2662 = vmul.f32 %v2661, %v2650
  %v2663 = vmul.f32 %v2662, %v2661
  %v2664 = vmul.f32 0.5, %v2663
  %v2665 = vsub.f32 1.5, %v2664
  %v2666 = vmul.f32 %v2661, %v2665
  %vm2667 = vweird.f32 %v2650
  %vm2668 = vweird.f32 %v2661
  %vm2669 = vmor %vm2667, %vm2668
  %v2670 = vsel %vm2669, %v2661, %v2666
  %v2671 = vmul.f32 %v2623, %v2660
  %v2672 = vmul.f32 %v2624, %v2670
  %v2673 = vmul.f32 %v2625, %v2660
  %v2674 = vmul.f32 %v2626, %v2670
  %v2675 = vmul.f32 %v2671, %v2084
  %v2676 = vmul.f32 %v2672, %v2085
  %v2677 = vmul.f32 %v2673, %v2084
  %v2678 = vmul.f32 %v2674, %v2085
  %v2679 = vadd.f32 %v2675, %v2091
  %v2680 = vadd.f32 %v2676, %v2092
  %v2681 = vadd.f32 %v2677, %v2091
  %v2682 = vadd.f32 %v2678, %v2092
  %v2683 = vmax.f32 %v2679, 0.0
  %v2684 = vmax.f32 %v2680, 0.0
  %v2685 = vmax.f32 %v2681, 0.0
  %v2686 = vmax.f32 %v2682, 0.0
  %2687 = vmatpush.msra.mxu0 %v2129
  %2688 = vmatpush.msra.mxu0 %v2127
  %2689 = vmatpush.msra.mxu0 %v2125
  %2690 = vmatpush.msra.mxu0 %v2123
  %2691 = vmatpush.msra.mxu0 %v2121
  %2692 = vmatpush.msra.mxu0 %v2119
  %2693 = vmatpush.msra.mxu0 %v2117
  %2694 = vmatpush.msra.mxu0 %v2115
  %2695 = vmatpush.msra.mxu0 %v2113
  %2696 = vmatpush.msra.mxu0 %v2111
  %2697 = vmatpush.msra.mxu0 %v2109
  %2698 = vmatpush.msra.mxu0 %v2107
  %2699 = vmatpush.msra.mxu0 %v2105
  %2700 = vmatpush.msra.mxu0 %v2103
  %2701 = vmatpush.msra.mxu0 %v2101
  %2702 = vmatpush.msra.mxu0 %v2099
  %2703 = vmatmul.f32.gmra.mxu0 %v2683
  %v2704 = vpop.f32.mrf.mxu0
  %v2705 = vadd.f32 %v2165, %v2704
  %2706 = vmatmul.f32.gmra.mxu0 %v2685
  %v2707 = vpop.f32.mrf.mxu0
  %v2708 = vadd.f32 %v2165, %v2707
  %2709 = vdwg.mxu0
  %2710 = vmatpush.msra.mxu0 %v2161
  %2711 = vmatpush.msra.mxu0 %v2159
  %2712 = vmatpush.msra.mxu0 %v2157
  %2713 = vmatpush.msra.mxu0 %v2155
  %2714 = vmatpush.msra.mxu0 %v2153
  %2715 = vmatpush.msra.mxu0 %v2151
  %2716 = vmatpush.msra.mxu0 %v2149
  %2717 = vmatpush.msra.mxu0 %v2147
  %2718 = vmatpush.msra.mxu0 %v2145
  %2719 = vmatpush.msra.mxu0 %v2143
  %2720 = vmatpush.msra.mxu0 %v2141
  %2721 = vmatpush.msra.mxu0 %v2139
  %2722 = vmatpush.msra.mxu0 %v2137
  %2723 = vmatpush.msra.mxu0 %v2135
  %2724 = vmatpush.msra.mxu0 %v2133
  %2725 = vmatpush.msra.mxu0 %v2131
  %2726 = vmatmul.f32.gmra.mxu0 %v2684
  %v2727 = vpop.f32.mrf.mxu0
  %v2728 = vadd.f32 %v2705, %v2727
  %2729 = vmatmul.f32.gmra.mxu0 %v2686
  %v2730 = vpop.f32.mrf.mxu0
  %v2731 = vadd.f32 %v2708, %v2730
  %2732 = vdwg.mxu0
  %2733 = vmatpush.msra.mxu0 %v2130
  %2734 = vmatpush.msra.mxu0 %v2128
  %2735 = vmatpush.msra.mxu0 %v2126
  %2736 = vmatpush.msra.mxu0 %v2124
  %2737 = vmatpush.msra.mxu0 %v2122
  %2738 = vmatpush.msra.mxu0 %v2120
  %2739 = vmatpush.msra.mxu0 %v2118
  %2740 = vmatpush.msra.mxu0 %v2116
  %2741 = vmatpush.msra.mxu0 %v2114
  %2742 = vmatpush.msra.mxu0 %v2112
  %2743 = vmatpush.msra.mxu0 %v2110
  %2744 = vmatpush.msra.mxu0 %v2108
  %2745 = vmatpush.msra.mxu0 %v2106
  %2746 = vmatpush.msra.mxu0 %v2104
  %2747 = vmatpush.msra.mxu0 %v2102
  %2748 = vmatpush.msra.mxu0 %v2100
  %2749 = vmatmul.f32.gmra.mxu0 %v2683
  %v2750 = vpop.f32.mrf.mxu0
  %v2751 = vadd.f32 %v2166, %v2750
  %2752 = vmatmul.f32.gmra.mxu0 %v2685
  %v2753 = vpop.f32.mrf.mxu0
  %v2754 = vadd.f32 %v2166, %v2753
  %2755 = vdwg.mxu0
  %2756 = vmatpush.msra.mxu0 %v2162
  %2757 = vmatpush.msra.mxu0 %v2160
  %2758 = vmatpush.msra.mxu0 %v2158
  %2759 = vmatpush.msra.mxu0 %v2156
  %2760 = vmatpush.msra.mxu0 %v2154
  %2761 = vmatpush.msra.mxu0 %v2152
  %2762 = vmatpush.msra.mxu0 %v2150
  %2763 = vmatpush.msra.mxu0 %v2148
  %2764 = vmatpush.msra.mxu0 %v2146
  %2765 = vmatpush.msra.mxu0 %v2144
  %2766 = vmatpush.msra.mxu0 %v2142
  %2767 = vmatpush.msra.mxu0 %v2140
  %2768 = vmatpush.msra.mxu0 %v2138
  %2769 = vmatpush.msra.mxu0 %v2136
  %2770 = vmatpush.msra.mxu0 %v2134
  %2771 = vmatpush.msra.mxu0 %v2132
  %2772 = vmatmul.f32.gmra.mxu0 %v2684
  %v2773 = vpop.f32.mrf.mxu0
  %v2774 = vadd.f32 %v2751, %v2773
  %2775 = vmatmul.f32.gmra.mxu0 %v2686
  %v2776 = vpop.f32.mrf.mxu0
  %v2777 = vadd.f32 %v2754, %v2776
  %2778 = vdwg.mxu0
  %v2779 = vsel %vm1385, %v2731, 0.0
  %v2780 = vadd.f32 %v2728, %v2779
  %v2781 = vrot.slane %v2780, 4
  %v2782 = vadd.f32 %v2780, %v2781
  %v2783 = vrot.slane %v2782, 2
  %v2784 = vadd.f32 %v2782, %v2783
  %v2785 = vrot.slane %v2784, 1
  %v2786 = vadd.f32 %v2784, %v2785
  %v2787 = vsel %vm1385, %v2777, 0.0
  %v2788 = vadd.f32 %v2774, %v2787
  %v2789 = vrot.slane %v2788, 4
  %v2790 = vadd.f32 %v2788, %v2789
  %v2791 = vrot.slane %v2790, 2
  %v2792 = vadd.f32 %v2790, %v2791
  %v2793 = vrot.slane %v2792, 1
  %v2794 = vadd.f32 %v2792, %v2793
  %v2795 = vmul.f32 %v2786, %v2445
  %v2796 = vmul.f32 %v2794, %v2445
  %v2797 = vsub.f32 %v2728, %v2795
  %v2798 = vsub.f32 %v2774, %v2796
  %v2799 = vsub.f32 %v2731, %v2795
  %v2800 = vsub.f32 %v2777, %v2796
  %v2801 = vmul.f32 %v2797, %v2797
  %v2802 = vmul.f32 %v2798, %v2798
  %v2803 = vmul.f32 %v2799, %v2799
  %v2804 = vmul.f32 %v2800, %v2800
  %v2805 = vsel %vm1385, %v2803, 0.0
  %v2806 = vadd.f32 %v2801, %v2805
  %v2807 = vrot.slane %v2806, 4
  %v2808 = vadd.f32 %v2806, %v2807
  %v2809 = vrot.slane %v2808, 2
  %v2810 = vadd.f32 %v2808, %v2809
  %v2811 = vrot.slane %v2810, 1
  %v2812 = vadd.f32 %v2810, %v2811
  %v2813 = vsel %vm1385, %v2804, 0.0
  %v2814 = vadd.f32 %v2802, %v2813
  %v2815 = vrot.slane %v2814, 4
  %v2816 = vadd.f32 %v2814, %v2815
  %v2817 = vrot.slane %v2816, 2
  %v2818 = vadd.f32 %v2816, %v2817
  %v2819 = vrot.slane %v2818, 1
  %v2820 = vadd.f32 %v2818, %v2819
  %v2821 = vmul.f32 %v2812, %v2445
  %v2822 = vmul.f32 %v2820, %v2445
  %v2823 = vadd.f32 %v2821, 1e-05
  %v2824 = vadd.f32 %v2822, 1e-05
  %v2825 = vrsqrt.pop %v2823
  %v2826 = vmul.f32 %v2825, %v2823
  %v2827 = vmul.f32 %v2826, %v2825
  %v2828 = vmul.f32 0.5, %v2827
  %v2829 = vsub.f32 1.5, %v2828
  %v2830 = vmul.f32 %v2825, %v2829
  %vm2831 = vweird.f32 %v2823
  %vm2832 = vweird.f32 %v2825
  %vm2833 = vmor %vm2831, %vm2832
  %v2834 = vsel %vm2833, %v2825, %v2830
  %v2835 = vrsqrt.pop %v2824
  %v2836 = vmul.f32 %v2835, %v2824
  %v2837 = vmul.f32 %v2836, %v2835
  %v2838 = vmul.f32 0.5, %v2837
  %v2839 = vsub.f32 1.5, %v2838
  %v2840 = vmul.f32 %v2835, %v2839
  %vm2841 = vweird.f32 %v2824
  %vm2842 = vweird.f32 %v2835
  %vm2843 = vmor %vm2841, %vm2842
  %v2844 = vsel %vm2843, %v2835, %v2840
  %v2845 = vmul.f32 %v2797, %v2834
  %v2846 = vmul.f32 %v2798, %v2844
  %v2847 = vmul.f32 %v2799, %v2834
  %v2848 = vmul.f32 %v2800, %v2844
  %v2849 = vmul.f32 %v2845, %v2084
  %v2850 = vmul.f32 %v2846, %v2085
  %v2851 = vmul.f32 %v2847, %v2084
  %v2852 = vmul.f32 %v2848, %v2085
  %v2853 = vadd.f32 %v2849, %v2091
  %v2854 = vadd.f32 %v2850, %v2092
  %v2855 = vadd.f32 %v2851, %v2091
  %v2856 = vadd.f32 %v2852, %v2092
  %v2857 = vmax.f32 %v2853, 0.0
  %v2858 = vmax.f32 %v2854, 0.0
  %v2859 = vmax.f32 %v2855, 0.0
  %v2860 = vmax.f32 %v2856, 0.0
  %2861 = vmatpush.msra.mxu0 %v2326
  %2862 = vmatpush.msra.mxu0 %v2325
  %2863 = vmatpush.msra.mxu0 %v2324
  %2864 = vmatpush.msra.mxu0 %v2323
  %2865 = vmatpush.msra.mxu0 %v2322
  %2866 = vmatpush.msra.mxu0 %v2321
  %2867 = vmatpush.msra.mxu0 %v2320
  %2868 = vmatpush.msra.mxu0 %v2319
  %2869 = vmatpush.msra.mxu0 %v2318
  %2870 = vmatpush.msra.mxu0 %v2317
  %2871 = vmatpush.msra.mxu0 %v2316
  %2872 = vmatpush.msra.mxu0 %v2315
  %2873 = vmatpush.msra.mxu0 %v2314
  %2874 = vmatpush.msra.mxu0 %v2313
  %2875 = vmatpush.msra.mxu0 %v2312
  %2876 = vmatpush.msra.mxu0 %v2311
  %2877 = vmatmul.f32.gmra.mxu0 %v2857
  %v2878 = vpop.f32.mrf.mxu0
  %v2879 = vadd.f32 %v2345, %v2878
  %2880 = vmatmul.f32.gmra.mxu0 %v2859
  %v2881 = vpop.f32.mrf.mxu0
  %v2882 = vadd.f32 %v2345, %v2881
  %2883 = vdwg.mxu0
  %2884 = vmatpush.msra.mxu0 %v2342
  %2885 = vmatpush.msra.mxu0 %v2341
  %2886 = vmatpush.msra.mxu0 %v2340
  %2887 = vmatpush.msra.mxu0 %v2339
  %2888 = vmatpush.msra.mxu0 %v2338
  %2889 = vmatpush.msra.mxu0 %v2337
  %2890 = vmatpush.msra.mxu0 %v2336
  %2891 = vmatpush.msra.mxu0 %v2335
  %2892 = vmatpush.msra.mxu0 %v2334
  %2893 = vmatpush.msra.mxu0 %v2333
  %2894 = vmatpush.msra.mxu0 %v2332
  %2895 = vmatpush.msra.mxu0 %v2331
  %2896 = vmatpush.msra.mxu0 %v2330
  %2897 = vmatpush.msra.mxu0 %v2329
  %2898 = vmatpush.msra.mxu0 %v2328
  %2899 = vmatpush.msra.mxu0 %v2327
  %2900 = vmatmul.f32.gmra.mxu0 %v2858
  %v2901 = vpop.f32.mrf.mxu0
  %v2902 = vadd.f32 %v2879, %v2901
  %2903 = vmatmul.f32.gmra.mxu0 %v2860
  %v2904 = vpop.f32.mrf.mxu0
  %v2905 = vadd.f32 %v2882, %v2904
  %2906 = vdwg.mxu0
  %v2907 = vsel %vm2389, %v2902, 0.0
  %vm2908 = vcmask 519168
  %v2909 = vsel %vm2908, %v2905, 0.0
  %v2910 = vadd.f32 %v2907, %v2909
  %v2911 = vrot.slane %v2910, 4
  %v2912 = vadd.f32 %v2910, %v2911
  %v2913 = vrot.slane %v2912, 2
  %v2914 = vadd.f32 %v2912, %v2913
  %v2915 = vrot.slane %v2914, 1
  %v2916 = vadd.f32 %v2914, %v2915
  %v2917 = vmul.f32 %v2916, %v2445
  %v2918 = vsub.f32 %v2902, %v2917
  %v2919 = vsub.f32 %v2905, %v2917
  %v2920 = vmul.f32 %v2918, %v2918
  %v2921 = vmul.f32 %v2919, %v2919
  %v2922 = vsel %vm2389, %v2920, 0.0
  %v2923 = vsel %vm2908, %v2921, 0.0
  %v2924 = vadd.f32 %v2922, %v2923
  %v2925 = vrot.slane %v2924, 4
  %v2926 = vadd.f32 %v2924, %v2925
  %v2927 = vrot.slane %v2926, 2
  %v2928 = vadd.f32 %v2926, %v2927
  %v2929 = vrot.slane %v2928, 1
  %v2930 = vadd.f32 %v2928, %v2929
  %v2931 = vmul.f32 %v2930, %v2445
  %v2932 = vadd.f32 %v2931, 1e-05
  %v2933 = vrsqrt.pop %v2932
  %v2934 = vmul.f32 %v2933, %v2932
  %v2935 = vmul.f32 %v2934, %v2933
  %v2936 = vmul.f32 0.5, %v2935
  %v2937 = vsub.f32 1.5, %v2936
  %v2938 = vmul.f32 %v2933, %v2937
  %vm2939 = vweird.f32 %v2932
  %vm2940 = vweird.f32 %v2933
  %vm2941 = vmor %vm2939, %vm2940
  %v2942 = vsel %vm2941, %v2933, %v2938
  %v2943 = vmul.f32 %v2918, %v2942
  %v2944 = vmul.f32 %v2919, %v2942
  %v2945 = vmul.f32 %v2943, %v2421
  %v2946 = vmul.f32 %v2944, %v2421
  %v2947 = vadd.f32 %v2945, %v2425
  %v2948 = vadd.f32 %v2946, %v2425
  %v2949 = vmax.f32 %v2947, 0.0
  %v2950 = vmax.f32 %v2948, 0.0
  %v2951 = vld [vmem:[%s57] sm:$0x3f]
  %v2953 = vsel %vm316, %v2951, 0
  %2955 = vmatpush.msra.mxu0 0.0
  %2956 = vmatpush.msra.mxu0 0.0
  %2957 = vmatpush.msra.mxu0 0.0
  %2958 = vmatpush.msra.mxu0 0.0
  %2959 = vmatpush.msra.mxu0 0.0
  %2960 = vmatpush.msra.mxu0 0.0
  %2961 = vmatpush.msra.mxu0 0.0
  %2962 = vmatpush.msra.mxu0 0.0
  %2963 = vmatpush.msra.mxu0 0.0
  %2964 = vmatpush.msra.mxu0 0.0
  %2965 = vmatpush.msra.mxu0 0.0
  %2966 = vmatpush.msra.mxu0 0.0
  %2967 = vmatpush.msra.mxu0 0.0
  %2968 = vmatpush.msra.mxu0 0.0
  %2969 = vmatpush.msra.mxu0 0.0
  %2970 = vmatpush.msra.mxu0 %v2428
  %2971 = vmatmul.f32.gmra.mxu0 %v2953
  %v2972 = vpop.f32.mrf.mxu0
  %v2973 = vadd.f32 0.0, %v2972
  %2974 = vdwg.mxu0
  %v2975 = vld [vmem:[%s59] sm:$0x3f]
  %v2977 = vsel %vm1305, %v2975, 0
  %v2980 = vsel %vm1385, %v2950, 0
  %2982 = vmatpush.msra.mxu0 0.0
  %2983 = vmatpush.msra.mxu0 0.0
  %2984 = vmatpush.msra.mxu0 0.0
  %2985 = vmatpush.msra.mxu0 0.0
  %2986 = vmatpush.msra.mxu0 0.0
  %2987 = vmatpush.msra.mxu0 0.0
  %2988 = vmatpush.msra.mxu0 0.0
  %2989 = vmatpush.msra.mxu0 0.0
  %2990 = vmatpush.msra.mxu0 0.0
  %2991 = vmatpush.msra.mxu0 0.0
  %2992 = vmatpush.msra.mxu0 0.0
  %2993 = vmatpush.msra.mxu0 0.0
  %2994 = vmatpush.msra.mxu0 0.0
  %2995 = vmatpush.msra.mxu0 0.0
  %2996 = vmatpush.msra.mxu0 %v2980
  %2997 = vmatpush.msra.mxu0 %v2949
  %2998 = vmatmul.f32.gmra.mxu0 %v2977
  %v2999 = vpop.f32.mrf.mxu0
  %v3000 = vadd.f32 0.0, %v2999
  %3001 = vdwg.mxu0
  %v3002 = vmul.f32 %v2973, %v3000
  %vm3003 = vcmask 521216
  %v3004 = vsel %vm3003, %v3002, 0.0
  %3005 = vadd.xlane.f32.xlu0 %v3004
  %v3006 = vpop.xlane.xlu0 %3005
  %v3007 = vsub.f32 0.0, %v3006
  %v3008 = vmul.f32 %v3007, 1.442695
  %v3009 = vpow.pop %v3008
  %v3010 = vadd.f32 %v3009, 1.0
  %v3011 = vrcp.pop %v3010
  %v3012 = vmul.f32 %v3010, %v3011
  %v3013 = vsub.f32 1.0, %v3012
  %v3014 = vmul.f32 %v3011, %v3013
  %v3015 = vadd.f32 %v3011, %v3014
  %vm3016 = vweird.f32 %v3010
  %vm3017 = vweird.f32 %v3011
  %vm3018 = vmor %vm3016, %vm3017
  %v3019 = vsel %vm3018, %v3011, %v3015
  %v3020 = vand.u32 2147483647, %v3010
  %vm3021 = vcmp.eq.f32.partialorder %v3020, 8.507059e+37
  %v3022 = vand.u32 %v3010, 2147483648
  %v3023 = vor.u32 1.1754944e-38, %v3022
  %v3024 = vsel %vm3021, %v3023, %v3019
  %v3025 = vmul.f32 1.0, %v3024
  %vm3026 = vcmask 5120
  %3027 = vst.msk [vmem:[%s61] sm:$0x3f] %vm3026, %v3025
  // Predicated region
  $region122: #{model_forward.1} parent=0 // pred_check
    _
  $region123: #{model_forward.1} parent=0 // pred_check_branch
    %3029 = sbr.rel (0) target = $region125
  $region124: #{model_forward.1} parent=0 // pred_region
    _
  $region125: #{model_forward.1} parent=0 // pred_fallthru
    _
  // Predicated region
  $region126: #{model_forward.1} parent=0 // pred_check
    _
  $region127: #{model_forward.1} parent=0 // pred_check_branch
    %3031 = sbr.rel (0) target = $region129
  $region128: #{model_forward.1} parent=0 // pred_region
    _
  $region129: #{model_forward.1} parent=0 // pred_fallthru
    _

</llo_original>
